<compile_context>
chip_gen: v7x
topology: tpu7x:2x2x1
jax: 0.10.0
libtpu: 0.0.40
codegen_flags: <defaults>
</compile_context>

<pallas_src>
import numpy as np
import jax
import jax.numpy as jnp
from jax.experimental import pallas as pl
from jax.experimental.pallas import tpu as pltpu

BAG = 100     # fixed by the module's .view(-1, 100, n_classes)
N_PAD = 128   # pad n_classes to a full 128-lane slab -> unmasked stores


def baseline_kernel(x_ref, sel_ref, w_enc_ref, b_enc_ref, w_proj_ref,
                    b_proj_ref, o_ref):
    # x_ref:      (tm, d_in)        tm = k*BAG rows of flattened tile-images
    # sel_ref:    (k, tm)  f32      per-bag segment-sum selector (constant)
    # w_enc_ref:  (d_in, d_embed)   feature-extractor weight, stored (in, out)
    # b_enc_ref:  (1, d_embed) f32
    # w_proj_ref: (d_embed, N_PAD)  image_proj weight, zero-padded to 128 lanes
    # b_proj_ref: (1, N_PAD)  f32   already scaled by BAG in the wrapper
    # o_ref:      (1, k, N_PAD)     per-bag summed logits (lane-dense)

    # FeatureExtractor: Linear + ReLU (one big MXU matmul, f32 accumulation;
    # inputs may be bf16, bias/ReLU stay f32).
    feats = jnp.dot(x_ref[...], w_enc_ref[...],
                    preferred_element_type=jnp.float32)
    feats = jnp.maximum(feats + b_enc_ref[...], 0.0)            # (tm, d_embed)

    # Bag-sum hoisted ahead of the (linear) projection: segment-sum of the
    # 100-row groups as a small selector matmul on the MXU.
    feats_sum = jnp.dot(sel_ref[...], feats,
                        preferred_element_type=jnp.float32)     # (k, d_embed)

    # sum_i (f_i @ W + b) == (sum_i f_i) @ W + BAG*b   (BAG*b folded into bias)
    o_ref[0] = (jnp.dot(feats_sum, w_proj_ref[...],
                        preferred_element_type=jnp.float32)
                + b_proj_ref[...])                              # (k, N_PAD)


def _pick_bags_per_step(B, bags_per_step, itemsize):
    """Largest k <= bags_per_step dividing B with k*BAG sublane-aligned."""
    sublane = {4: 8, 2: 16, 1: 32}.get(itemsize, 8)
    for k in range(min(bags_per_step, B), 0, -1):
        if B % k == 0 and (k * BAG) % sublane == 0:
            return k
    return B   # block == full x array -> always a legal block shape


def _build_call(B, k, d_in, d_embed, x_itemsize, single_buffer_weights):
    grid_n = B // k
    tm = k * BAG
    # Constant-index parameters: single-buffer them (their block never changes).
    wkw = {"pipeline_mode": pl.Buffered(1)} if single_buffer_weights else {}

    grid_spec = pltpu.PrefetchScalarGridSpec(
        num_scalar_prefetch=0,
        grid=(grid_n,),
        in_specs=[
            pl.BlockSpec((tm, d_in), lambda i: (i, 0)),
            pl.BlockSpec((k, tm), lambda i: (0, 0), **wkw),
            pl.BlockSpec((d_in, d_embed), lambda i: (0, 0), **wkw),
            pl.BlockSpec((1, d_embed), lambda i: (0, 0), **wkw),
            pl.BlockSpec((d_embed, N_PAD), lambda i: (0, 0), **wkw),
            pl.BlockSpec((1, N_PAD), lambda i: (0, 0), **wkw),
        ],
        # 3-D output: last two block dims equal the full array dims -> any k
        # is legal and stores are full, unmasked lane-dense slabs.
        out_specs=pl.BlockSpec((1, k, N_PAD), lambda i: (i, 0, 0)),
    )

    n_rows = B * BAG
    flops = (2 * n_rows * d_in * d_embed          # encoder matmul
             + 2 * n_rows * k * d_embed           # selector bag-sum
             + 2 * B * d_embed * N_PAD)           # projection
    bytes_accessed = (n_rows * d_in * x_itemsize          # x (dominant)
                      + k * tm * 4                         # selector
                      + d_in * d_embed * x_itemsize        # w_enc
                      + d_embed * 4 + d_embed * N_PAD * 4 + N_PAD * 4
                      + B * N_PAD * 4)                     # output

    return pl.pallas_call(
        baseline_kernel,
        out_shape=jax.ShapeDtypeStruct((grid_n, k, N_PAD), jnp.float32),
        grid_spec=grid_spec,
        compiler_params=pltpu.CompilerParams(
            dimension_semantics=("parallel",),
            # Safe floor for v5e/v6e/v7x at these shapes; on v6e this can be
            # raised toward ~64-100 MiB if tm/d_in grow, keep v7x <= ~48 MiB.
            vmem_limit_bytes=32 * 1024 * 1024,
        ),
        cost_estimate=pl.CostEstimate(
            flops=flops, transcendentals=0, bytes_accessed=bytes_accessed),
    )


def baseline_model(x_flat, w_enc, b_enc, w_proj, b_proj, *, bags_per_step=4):
    """x_flat: (B*BAG, d_in), any float dtype (runs the encoder matmul in that
    dtype — hand in bf16 only if x is already bf16 in HBM).
    Returns (B, n_classes) f32 bag-summed logits."""
    n_rows, d_in = x_flat.shape
    assert n_rows % BAG == 0
    B = n_rows // BAG
    d_embed = w_enc.shape[1]
    n_classes = w_proj.shape[1]
    assert n_classes <= N_PAD

    itemsize = np.dtype(x_flat.dtype).itemsize
    k = _pick_bags_per_step(B, bags_per_step, itemsize)
    tm = k * BAG

    # Tiny parameter preps (weights match x's dtype for the MXU; biases f32).
    w_enc_mm = w_enc.astype(x_flat.dtype)
    b_enc2d = b_enc.reshape(1, d_embed).astype(jnp.float32)

    # Zero-pad projection to 128 lanes; fold the BAG * b_proj term in here.
    w_proj_pad = jnp.zeros((d_embed, N_PAD), jnp.float32).at[:, :n_classes].set(
        w_proj.astype(jnp.float32))
    b_proj_pad = jnp.zeros((1, N_PAD), jnp.float32).at[:, :n_classes].set(
        jnp.float32(BAG) * b_proj.reshape(1, n_classes).astype(jnp.float32))

    # Constant per-bag segment-sum selector (built once, not per grid step).
    sel_np = (np.arange(k)[:, None] == (np.arange(tm) // BAG)[None, :])
    sel = jnp.asarray(sel_np.astype(np.float32))

    args = (x_flat, sel, w_enc_mm, b_enc2d, w_proj_pad, b_proj_pad)
    try:
        out3 = _build_call(B, k, d_in, d_embed, itemsize, True)(*args)
        out3 = jax.block_until_ready(out3)
    except Exception:
        # Fallback if single-buffered (pl.Buffered(1)) specs are unsupported
        # by the installed jax version — correctness is unaffected.
        out3 = _build_call(B, k, d_in, d_embed, itemsize, False)(*args)

    return out3.reshape(B, N_PAD)[:, :n_classes]


if __name__ == "__main__":
    # B=16 bags, each bag = 100 tile-images of shape (C=4, H=16, W=16).
    # bags_per_step=4 -> tm=400 rows/step, grid=(4,): 2 steps per v7x TC.
    B, C, H, W = 16, 4, 16, 16
    d_embed, n_classes = 32, 5
    d_in = C * H * W

    key = jax.random.PRNGKey(0)
    k_img, k_we, k_be, k_wp, k_bp = jax.random.split(key, 5)

    # NCHW tile-image batch, as the PyTorch module would receive.
    image = jax.random.normal(k_img, (B * BAG, C, H, W), dtype=jnp.float32)

    # Deterministic synthetic parameters, stored (in, out) — transposed vs.
    # torch.nn.Linear's (out, in); forward uses x @ W + b.
    w_enc = jax.random.normal(k_we, (d_in, d_embed), dtype=jnp.float32) * 0.02
    b_enc = jax.random.normal(k_be, (1, d_embed), dtype=jnp.float32) * 0.02
    w_proj = jax.random.normal(k_wp, (d_embed, n_classes), dtype=jnp.float32) * 0.02
    b_proj = jax.random.normal(k_bp, (1, n_classes), dtype=jnp.float32) * 0.02

    # Glue: flatten NCHW -> per-tile feature vectors (B*BAG, C*H*W).
    x_flat = image.reshape(B * BAG, d_in)

    # ---- f32 run (exact module semantics), tight check ----
    out = baseline_model(x_flat, w_enc, b_enc, w_proj, b_proj, bags_per_step=4)
    out = jax.block_until_ready(out)
    assert out.shape == (B, n_classes)

    feats_ref = jnp.maximum(x_flat @ w_enc + b_enc, 0.0)
    logits_ref = (feats_ref @ w_proj + b_proj).reshape(B, BAG, n_classes)
    ref = jnp.sum(logits_ref, axis=1)
    np.testing.assert_allclose(np.asarray(out), np.asarray(ref),
                               rtol=1e-4, atol=5e-4)

    # ---- bf16 path: the PRODUCER emits bf16 x (no wrapper-side convert);
    #      checked against a reference that applies the same bf16 quantization
    #      with f32 accumulation. Valid on v5e/v6e/v7x alike. ----
    x_bf16 = x_flat.astype(jnp.bfloat16)   # stands in for an upstream bf16 producer
    out_bf16 = baseline_model(x_bf16, w_enc, b_enc, w_proj, b_proj,
                              bags_per_step=4)
    out_bf16 = jax.block_until_ready(out_bf16)
    feats_bf = jnp.maximum(
        jnp.dot(x_bf16, w_enc.astype(jnp.bfloat16),
                preferred_element_type=jnp.float32) + b_enc, 0.0)
    logits_bf = (feats_bf @ w_proj + b_proj).reshape(B, BAG, n_classes)
    ref_bf = jnp.sum(logits_bf, axis=1)
    np.testing.assert_allclose(np.asarray(out_bf16), np.asarray(ref_bf),
                               rtol=1e-3, atol=1e-3)

    print("KERNEL_OK")
</pallas_src>

<mosaic_0001>
module attributes {stable_mosaic.version = 11 : i64} {
  func.func @baseline_kernel(%arg0: i32, %arg1: memref<400x1024xf32, #tpu.memory_space<vmem>>, %arg2: memref<4x400xf32, #tpu.memory_space<vmem>>, %arg3: memref<1024x32xf32, #tpu.memory_space<vmem>>, %arg4: memref<1x32xf32, #tpu.memory_space<vmem>>, %arg5: memref<32x128xf32, #tpu.memory_space<vmem>>, %arg6: memref<1x128xf32, #tpu.memory_space<vmem>>, %arg7: memref<1x4x128xf32, #tpu.memory_space<vmem>>) attributes {dimension_semantics = [#tpu.dimension_semantics<parallel>], iteration_bounds = array<i64: 4>, scalar_prefetch = 0 : i64, scratch_operands = 0 : i64, tpu.core_type = #tpu.core_type<tc>, window_params = [{transform_indices = @transform_0, window_bounds = array<i64: 400, 1024>}, {pipeline_mode = #tpu.pipeline_mode<synchronous>, transform_indices = @transform_1, window_bounds = array<i64: 4, 400>}, {pipeline_mode = #tpu.pipeline_mode<synchronous>, transform_indices = @transform_2, window_bounds = array<i64: 1024, 32>}, {pipeline_mode = #tpu.pipeline_mode<synchronous>, transform_indices = @transform_3, window_bounds = array<i64: 1, 32>}, {pipeline_mode = #tpu.pipeline_mode<synchronous>, transform_indices = @transform_4, window_bounds = array<i64: 32, 128>}, {pipeline_mode = #tpu.pipeline_mode<synchronous>, transform_indices = @transform_5, window_bounds = array<i64: 1, 128>}, {transform_indices = @transform_6, window_bounds = array<i64: 1, 4, 128>}]} {
    %c0 = arith.constant 0 : index
    %c0_0 = arith.constant 0 : index
    %0 = vector.load %arg1[%c0, %c0_0] : memref<400x1024xf32, #tpu.memory_space<vmem>>, vector<400x1024xf32>
    %c0_1 = arith.constant 0 : index
    %c0_2 = arith.constant 0 : index
    %1 = vector.load %arg3[%c0_1, %c0_2] : memref<1024x32xf32, #tpu.memory_space<vmem>>, vector<1024x32xf32>
    %cst = arith.constant dense<0.000000e+00> : vector<400x32xf32>
    %2 = tpu.matmul %0, %1, %cst {dimension_numbers = #tpu.dot_dimension_numbers<[1], [0], [0], [1], [0, 0, 1, 1], [], []>} : vector<400x1024xf32>, vector<1024x32xf32>, vector<400x32xf32> -> vector<400x32xf32>
    %c0_3 = arith.constant 0 : index
    %c0_4 = arith.constant 0 : index
    %3 = vector.load %arg4[%c0_3, %c0_4] : memref<1x32xf32, #tpu.memory_space<vmem>>, vector<1x32xf32>
    %4 = vector.broadcast %3 : vector<1x32xf32> to vector<400x32xf32>
    %5 = arith.addf %2, %4 : vector<400x32xf32>
    %cst_5 = arith.constant 0.000000e+00 : f32
    %6 = vector.broadcast %cst_5 : f32 to vector<400x32xf32>
    %7 = arith.maximumf %5, %6 : vector<400x32xf32>
    %c0_6 = arith.constant 0 : index
    %c0_7 = arith.constant 0 : index
    %8 = vector.load %arg2[%c0_6, %c0_7] : memref<4x400xf32, #tpu.memory_space<vmem>>, vector<4x400xf32>
    %cst_8 = arith.constant dense<0.000000e+00> : vector<4x32xf32>
    %9 = tpu.matmul %8, %7, %cst_8 {dimension_numbers = #tpu.dot_dimension_numbers<[1], [0], [0], [1], [0, 0, 1, 1], [], []>} : vector<4x400xf32>, vector<400x32xf32>, vector<4x32xf32> -> vector<4x32xf32>
    %c0_9 = arith.constant 0 : index
    %c0_10 = arith.constant 0 : index
    %10 = vector.load %arg5[%c0_9, %c0_10] : memref<32x128xf32, #tpu.memory_space<vmem>>, vector<32x128xf32>
    %cst_11 = arith.constant dense<0.000000e+00> : vector<4x128xf32>
    %11 = tpu.matmul %9, %10, %cst_11 {dimension_numbers = #tpu.dot_dimension_numbers<[1], [0], [0], [1], [0, 0, 1, 1], [], []>} : vector<4x32xf32>, vector<32x128xf32>, vector<4x128xf32> -> vector<4x128xf32>
    %c0_12 = arith.constant 0 : index
    %c0_13 = arith.constant 0 : index
    %12 = vector.load %arg6[%c0_12, %c0_13] : memref<1x128xf32, #tpu.memory_space<vmem>>, vector<1x128xf32>
    %13 = vector.broadcast %12 : vector<1x128xf32> to vector<4x128xf32>
    %14 = arith.addf %11, %13 : vector<4x128xf32>
    %c0_14 = arith.constant 0 : index
    %c0_15 = arith.constant 0 : index
    %c0_16 = arith.constant 0 : index
    %15 = vector.load %arg7[%c0_14, %c0_15, %c0_16] : memref<1x4x128xf32, #tpu.memory_space<vmem>>, vector<1x4x128xf32>
    %16 = vector.shape_cast %15 : vector<1x4x128xf32> to vector<4x128xf32>
    %17 = vector.shape_cast %14 : vector<4x128xf32> to vector<1x4x128xf32>
    tpu.vector_store %arg7[%c0_14, %c0_15, %c0_16], %17 {strides = array<i32>} : memref<1x4x128xf32, #tpu.memory_space<vmem>>, vector<1x4x128xf32>,
    return
  }
  func.func @transform_0(%arg0: i32) -> (i32, i32) {
    %c0_i32 = arith.constant 0 : i32
    %c0_i32_0 = arith.constant 0 : i32
    return %arg0, %c0_i32 : i32, i32
  }
  func.func @transform_1(%arg0: i32) -> (i32, i32) {
    %c0_i32 = arith.constant 0 : i32
    %c0_i32_0 = arith.constant 0 : i32
    %c0_i32_1 = arith.constant 0 : i32
    return %c0_i32, %c0_i32_0 : i32, i32
  }
  func.func @transform_2(%arg0: i32) -> (i32, i32) {
    %c0_i32 = arith.constant 0 : i32
    %c0_i32_0 = arith.constant 0 : i32
    %c0_i32_1 = arith.constant 0 : i32
    return %c0_i32, %c0_i32_0 : i32, i32
  }
  func.func @transform_3(%arg0: i32) -> (i32, i32) {
    %c0_i32 = arith.constant 0 : i32
    %c0_i32_0 = arith.constant 0 : i32
    %c0_i32_1 = arith.constant 0 : i32
    return %c0_i32, %c0_i32_0 : i32, i32
  }
  func.func @transform_4(%arg0: i32) -> (i32, i32) {
    %c0_i32 = arith.constant 0 : i32
    %c0_i32_0 = arith.constant 0 : i32
    %c0_i32_1 = arith.constant 0 : i32
    return %c0_i32, %c0_i32_0 : i32, i32
  }
  func.func @transform_5(%arg0: i32) -> (i32, i32) {
    %c0_i32 = arith.constant 0 : i32
    %c0_i32_0 = arith.constant 0 : i32
    %c0_i32_1 = arith.constant 0 : i32
    return %c0_i32, %c0_i32_0 : i32, i32
  }
  func.func @transform_6(%arg0: i32) -> (i32, i32, i32) {
    %c0_i32 = arith.constant 0 : i32
    %c0_i32_0 = arith.constant 0 : i32
    %c0_i32_1 = arith.constant 0 : i32
    return %arg0, %c0_i32, %c0_i32_0 : i32, i32, i32
  }
}

module attributes {stable_mosaic.version = 11 : i64} {
  func.func @baseline_kernel(%arg0: i32, %arg1: memref<400x1024xf32, #tpu.memory_space<vmem>>, %arg2: memref<4x400xf32, #tpu.memory_space<vmem>>, %arg3: memref<1024x32xf32, #tpu.memory_space<vmem>>, %arg4: memref<1x32xf32, #tpu.memory_space<vmem>>, %arg5: memref<32x128xf32, #tpu.memory_space<vmem>>, %arg6: memref<1x128xf32, #tpu.memory_space<vmem>>, %arg7: memref<1x4x128xf32, #tpu.memory_space<vmem>>) attributes {dimension_semantics = [#tpu.dimension_semantics<parallel>], iteration_bounds = array<i64: 4>, scalar_prefetch = 0 : i64, scratch_operands = 0 : i64, tpu.core_type = #tpu.core_type<tc>, window_params = [{transform_indices = @transform_0, window_bounds = array<i64: 400, 1024>}, {pipeline_mode = #tpu.pipeline_mode<synchronous>, transform_indices = @transform_1, window_bounds = array<i64: 4, 400>}, {pipeline_mode = #tpu.pipeline_mode<synchronous>, transform_indices = @transform_2, window_bounds = array<i64: 1024, 32>}, {pipeline_mode = #tpu.pipeline_mode<synchronous>, transform_indices = @transform_3, window_bounds = array<i64: 1, 32>}, {pipeline_mode = #tpu.pipeline_mode<synchronous>, transform_indices = @transform_4, window_bounds = array<i64: 32, 128>}, {pipeline_mode = #tpu.pipeline_mode<synchronous>, transform_indices = @transform_5, window_bounds = array<i64: 1, 128>}, {transform_indices = @transform_6, window_bounds = array<i64: 1, 4, 128>}]} {
    %c0 = arith.constant 0 : index
    %c0_0 = arith.constant 0 : index
    %0 = vector.load %arg1[%c0, %c0_0] : memref<400x1024xf32, #tpu.memory_space<vmem>>, vector<400x1024xf32>
    %c0_1 = arith.constant 0 : index
    %c0_2 = arith.constant 0 : index
    %1 = vector.load %arg3[%c0_1, %c0_2] : memref<1024x32xf32, #tpu.memory_space<vmem>>, vector<1024x32xf32>
    %cst = arith.constant dense<0.000000e+00> : vector<400x32xf32>
    %2 = tpu.matmul %0, %1, %cst {dimension_numbers = #tpu.dot_dimension_numbers<[1], [0], [0], [1], [0, 0, 1, 1], [], []>} : vector<400x1024xf32>, vector<1024x32xf32>, vector<400x32xf32> -> vector<400x32xf32>
    %c0_3 = arith.constant 0 : index
    %c0_4 = arith.constant 0 : index
    %3 = vector.load %arg4[%c0_3, %c0_4] : memref<1x32xf32, #tpu.memory_space<vmem>>, vector<1x32xf32>
    %4 = vector.broadcast %3 : vector<1x32xf32> to vector<400x32xf32>
    %5 = arith.addf %2, %4 : vector<400x32xf32>
    %cst_5 = arith.constant 0.000000e+00 : f32
    %6 = vector.broadcast %cst_5 : f32 to vector<400x32xf32>
    %7 = arith.maximumf %5, %6 : vector<400x32xf32>
    %c0_6 = arith.constant 0 : index
    %c0_7 = arith.constant 0 : index
    %8 = vector.load %arg2[%c0_6, %c0_7] : memref<4x400xf32, #tpu.memory_space<vmem>>, vector<4x400xf32>
    %cst_8 = arith.constant dense<0.000000e+00> : vector<4x32xf32>
    %9 = tpu.matmul %8, %7, %cst_8 {dimension_numbers = #tpu.dot_dimension_numbers<[1], [0], [0], [1], [0, 0, 1, 1], [], []>} : vector<4x400xf32>, vector<400x32xf32>, vector<4x32xf32> -> vector<4x32xf32>
    %c0_9 = arith.constant 0 : index
    %c0_10 = arith.constant 0 : index
    %10 = vector.load %arg5[%c0_9, %c0_10] : memref<32x128xf32, #tpu.memory_space<vmem>>, vector<32x128xf32>
    %cst_11 = arith.constant dense<0.000000e+00> : vector<4x128xf32>
    %11 = tpu.matmul %9, %10, %cst_11 {dimension_numbers = #tpu.dot_dimension_numbers<[1], [0], [0], [1], [0, 0, 1, 1], [], []>} : vector<4x32xf32>, vector<32x128xf32>, vector<4x128xf32> -> vector<4x128xf32>
    %c0_12 = arith.constant 0 : index
    %c0_13 = arith.constant 0 : index
    %12 = vector.load %arg6[%c0_12, %c0_13] : memref<1x128xf32, #tpu.memory_space<vmem>>, vector<1x128xf32>
    %13 = vector.broadcast %12 : vector<1x128xf32> to vector<4x128xf32>
    %14 = arith.addf %11, %13 : vector<4x128xf32>
    %c0_14 = arith.constant 0 : index
    %c0_15 = arith.constant 0 : index
    %c0_16 = arith.constant 0 : index
    %15 = vector.load %arg7[%c0_14, %c0_15, %c0_16] : memref<1x4x128xf32, #tpu.memory_space<vmem>>, vector<1x4x128xf32>
    %16 = vector.shape_cast %15 : vector<1x4x128xf32> to vector<4x128xf32>
    %17 = vector.shape_cast %14 : vector<4x128xf32> to vector<1x4x128xf32>
    tpu.vector_store %arg7[%c0_14, %c0_15, %c0_16], %17 {strides = array<i32>} : memref<1x4x128xf32, #tpu.memory_space<vmem>>, vector<1x4x128xf32>,
    return
  }
  func.func @transform_0(%arg0: i32) -> (i32, i32) {
    %c0_i32 = arith.constant 0 : i32
    %c0_i32_0 = arith.constant 0 : i32
    return %arg0, %c0_i32 : i32, i32
  }
  func.func @transform_1(%arg0: i32) -> (i32, i32) {
    %c0_i32 = arith.constant 0 : i32
    %c0_i32_0 = arith.constant 0 : i32
    %c0_i32_1 = arith.constant 0 : i32
    return %c0_i32, %c0_i32_0 : i32, i32
  }
  func.func @transform_2(%arg0: i32) -> (i32, i32) {
    %c0_i32 = arith.constant 0 : i32
    %c0_i32_0 = arith.constant 0 : i32
    %c0_i32_1 = arith.constant 0 : i32
    return %c0_i32, %c0_i32_0 : i32, i32
  }
  func.func @transform_3(%arg0: i32) -> (i32, i32) {
    %c0_i32 = arith.constant 0 : i32
    %c0_i32_0 = arith.constant 0 : i32
    %c0_i32_1 = arith.constant 0 : i32
    return %c0_i32, %c0_i32_0 : i32, i32
  }
  func.func @transform_4(%arg0: i32) -> (i32, i32) {
    %c0_i32 = arith.constant 0 : i32
    %c0_i32_0 = arith.constant 0 : i32
    %c0_i32_1 = arith.constant 0 : i32
    return %c0_i32, %c0_i32_0 : i32, i32
  }
  func.func @transform_5(%arg0: i32) -> (i32, i32) {
    %c0_i32 = arith.constant 0 : i32
    %c0_i32_0 = arith.constant 0 : i32
    %c0_i32_1 = arith.constant 0 : i32
    return %c0_i32, %c0_i32_0 : i32, i32
  }
  func.func @transform_6(%arg0: i32) -> (i32, i32, i32) {
    %c0_i32 = arith.constant 0 : i32
    %c0_i32_0 = arith.constant 0 : i32
    %c0_i32_1 = arith.constant 0 : i32
    return %arg0, %c0_i32, %c0_i32_0 : i32, i32, i32
  }
}

</mosaic_0001>

<llo_original>
// kernel: tpu_custom_call.1
$region0: #{tpu_custom_call.1}
  #allocation0 [shape = 'u32[]', space=smem, size = 0x4, offset = 0x4, fixed_abs, tag = 'smem constant byte address 0x4 - core index']
  #allocation1 [shape = 'u32[144,128]{1,0:T(1,128)}', space=vmem, size = 0x12000, scoped, tag = 'internal scratch']
  %s0 = inlined_call_operand.hbm [shape: f32[1600,1024], index: 0, kind: input, shape index: {}]
  %s1 = inlined_call_operand.hbm [shape: f32[4,400], index: 1, kind: input, shape index: {}]
  %s2 = inlined_call_operand.vmem [shape: f32[1024,32], index: 2, kind: input, shape index: {}]
  %s3 = inlined_call_operand.hbm [shape: f32[1,32], index: 3, kind: input, shape index: {}]
  %s4 = inlined_call_operand.hbm [shape: f32[32,128], index: 4, kind: input, shape index: {}]
  %s5 = inlined_call_operand.hbm [shape: f32[1,128], index: 5, kind: input, shape index: {}]
  %s6 = inlined_call_operand.hbm [shape: f32[4,4,128], index: 6, kind: output, shape index: {}]
  %s7 = sld [smem:[#allocation0]]
  $region77: #{tpu_custom_call.1} parent=0
    _
  %s9 = ssub.s32 1, %s7
  %s10 = scalar_select 0, %s9, %s7
  $region1: #{tpu_custom_call.1} parent=0
    #allocation2 [shape = 'u8[3276800]{0}', space=vmem, size = 0x320000, scoped, tag = 'input window, operand 0']
    #allocation3 [shape = 's32[2]{0}', space=sflag, size = 0x8, scoped, tag = 'scoped memory for tpu_custom_call.1']
    #allocation4 [shape = 's32[2]{0}', space=sflag, size = 0x8, scoped, tag = 'scoped memory for tpu_custom_call.1']
    #allocation5 [shape = 'u8[8192]{0}', space=vmem, size = 0x2000, scoped, tag = 'input window, operand 1, single buffered']
    #allocation6 [shape = 's32[1]{0}', space=sflag, size = 0x4, scoped, tag = 'scoped memory for tpu_custom_call.1']
    #allocation7 [shape = 'u8[512]{0}', space=vmem, size = 0x400, scoped, tag = 'input window, operand 3, single buffered']
    #allocation8 [shape = 'u8[16384]{0}', space=vmem, size = 0x4000, scoped, tag = 'input window, operand 4, single buffered']
    #allocation9 [shape = 's32[1]{0}', space=sflag, size = 0x4, scoped, tag = 'scoped memory for tpu_custom_call.1']
    #allocation10 [shape = 'u8[512]{0}', space=vmem, size = 0x400, scoped, tag = 'input window, operand 5, single buffered']
    #allocation11 [shape = 'u8[4096]{0}', space=vmem, size = 0x1000, scoped, tag = 'output window, operand 0']
    %11 = vsyncpa [#allocation3], 0
    %s12 = scalar_lea.sflag [#allocation3], 1
    %13 = vsyncpa %s12, 0
    %14 = vsyncpa [#allocation6], 0
    %15 = vsyncpa [#allocation9], 0
    %16 = vsyncpa [#allocation4], 0
    %s17 = scalar_lea.sflag [#allocation4], 1
    %18 = vsyncpa %s17, 0
    loop: start=0, step=1, limit=6
    $region2: #{tpu_custom_call.1} parent=1 // loop_pre_header
      _
    $region3: #{tpu_custom_call.1} parent=1 // loop_header
      %s20 = sphi 0, %s24
      %p21 = scmp.ge.s32.totalorder %s20, 6
      %s30 = sphi 0, %s32
      %s33 = sphi 0, %s30
      %s34 = sphi 0, %s33
      %s50 = sphi 0, %s34
      %s54 = sphi 0, %s54
      %s56 = sphi 0, %s54
      %s57 = sphi 0, %s56
      %s71 = sphi 0, %s57
      %s75 = sphi 0, %s75
      %s77 = sphi 0, %s75
      %s78 = sphi 0, %s77
      %s92 = sphi 0, %s78
      %s96 = sphi 0, %s96
      %s98 = sphi 0, %s96
      %s99 = sphi 0, %s98
      %s113 = sphi 0, %s99
      %s117 = sphi 0, %s117
      %s119 = sphi 0, %s117
      %s120 = sphi 0, %s119
      %s134 = sphi 0, %s120
      %s138 = sphi 0, %s138
      %s140 = sphi 0, %s138
      %s141 = sphi 0, %s140
      %s155 = sphi 0, %s141
      %s161 = sphi 0, %s163
      %s164 = sphi 0, %s161
      %s165 = sphi 0, %s164
      %s181 = sphi 0, %s165
    $region4: #{tpu_custom_call.1} parent=1 // loop_header_branch
      %23 = sbr.rel (%p21) target = $region8
    $region5: #{tpu_custom_call.1} parent=1 // loop_body
      %s25 = ssub.s32 %s20, 1
      %s26 = ssub.s32 %s20, 2
      %s27 = sadd.s32 %s20, 1
      %s28 = ssub.s32 %s20, %s27
      %p29 = scmp.eq.s32.totalorder %s28, 0
      %s31 = sadd.s32 %s30, 1
      %s32 = scalar_select %p29, %s30, %s31
      %p35 = pneg %p29
      %p36 = scmp.eq.s32.totalorder %s20, 3
      %p37 = por %p35, %p36
      %p38 = scmp.ne.s32.totalorder %s30, %s33
      %p39 = scmp.eq.s32.totalorder %s20, 0
      %p40 = por %p38, %p39
      %p41 = scmp.ne.s32.totalorder %s30, %s33
      %p42 = scmp.eq.s32.totalorder %s25, 3
      %p43 = por %p41, %p42
      %p44 = scmp.ne.s32.totalorder %s33, %s34
      %p45 = scmp.eq.s32.totalorder %s25, 0
      %p46 = por %p44, %p45
      %p47 = scmp.ne.s32.totalorder %s33, %s34
      %p48 = scmp.eq.s32.totalorder %s26, 3
      %p49 = por %p47, %p48
      %p51 = scmp.ne.s32.totalorder %s34, %s50
      %p52 = scmp.eq.s32.totalorder %s26, 0
      %p53 = por %p51, %p52
      %s55 = sadd.s32 %s54, 1
      %p58 = scmp.eq.s32.totalorder %s20, 3
      %p59 = scmp.ne.s32.totalorder %s54, %s56
      %p60 = scmp.eq.s32.totalorder %s20, 0
      %p61 = por %p59, %p60
      %p62 = scmp.ne.s32.totalorder %s54, %s56
      %p63 = scmp.eq.s32.totalorder %s25, 3
      %p64 = por %p62, %p63
      %p65 = scmp.ne.s32.totalorder %s56, %s57
      %p66 = scmp.eq.s32.totalorder %s25, 0
      %p67 = por %p65, %p66
      %p68 = scmp.ne.s32.totalorder %s56, %s57
      %p69 = scmp.eq.s32.totalorder %s26, 3
      %p70 = por %p68, %p69
      %p72 = scmp.ne.s32.totalorder %s57, %s71
      %p73 = scmp.eq.s32.totalorder %s26, 0
      %p74 = por %p72, %p73
      %s76 = sadd.s32 %s75, 1
      %p79 = scmp.eq.s32.totalorder %s20, 3
      %p80 = scmp.ne.s32.totalorder %s75, %s77
      %p81 = scmp.eq.s32.totalorder %s20, 0
      %p82 = por %p80, %p81
      %p83 = scmp.ne.s32.totalorder %s75, %s77
      %p84 = scmp.eq.s32.totalorder %s25, 3
      %p85 = por %p83, %p84
      %p86 = scmp.ne.s32.totalorder %s77, %s78
      %p87 = scmp.eq.s32.totalorder %s25, 0
      %p88 = por %p86, %p87
      %p89 = scmp.ne.s32.totalorder %s77, %s78
      %p90 = scmp.eq.s32.totalorder %s26, 3
      %p91 = por %p89, %p90
      %p93 = scmp.ne.s32.totalorder %s78, %s92
      %p94 = scmp.eq.s32.totalorder %s26, 0
      %p95 = por %p93, %p94
      %s97 = sadd.s32 %s96, 1
      %p100 = scmp.eq.s32.totalorder %s20, 3
      %p101 = scmp.ne.s32.totalorder %s96, %s98
      %p102 = scmp.eq.s32.totalorder %s20, 0
      %p103 = por %p101, %p102
      %p104 = scmp.ne.s32.totalorder %s96, %s98
      %p105 = scmp.eq.s32.totalorder %s25, 3
      %p106 = por %p104, %p105
      %p107 = scmp.ne.s32.totalorder %s98, %s99
      %p108 = scmp.eq.s32.totalorder %s25, 0
      %p109 = por %p107, %p108
      %p110 = scmp.ne.s32.totalorder %s98, %s99
      %p111 = scmp.eq.s32.totalorder %s26, 3
      %p112 = por %p110, %p111
      %p114 = scmp.ne.s32.totalorder %s99, %s113
      %p115 = scmp.eq.s32.totalorder %s26, 0
      %p116 = por %p114, %p115
      %s118 = sadd.s32 %s117, 1
      %p121 = scmp.eq.s32.totalorder %s20, 3
      %p122 = scmp.ne.s32.totalorder %s117, %s119
      %p123 = scmp.eq.s32.totalorder %s20, 0
      %p124 = por %p122, %p123
      %p125 = scmp.ne.s32.totalorder %s117, %s119
      %p126 = scmp.eq.s32.totalorder %s25, 3
      %p127 = por %p125, %p126
      %p128 = scmp.ne.s32.totalorder %s119, %s120
      %p129 = scmp.eq.s32.totalorder %s25, 0
      %p130 = por %p128, %p129
      %p131 = scmp.ne.s32.totalorder %s119, %s120
      %p132 = scmp.eq.s32.totalorder %s26, 3
      %p133 = por %p131, %p132
      %p135 = scmp.ne.s32.totalorder %s120, %s134
      %p136 = scmp.eq.s32.totalorder %s26, 0
      %p137 = por %p135, %p136
      %s139 = sadd.s32 %s138, 1
      %p142 = scmp.eq.s32.totalorder %s20, 3
      %p143 = scmp.ne.s32.totalorder %s138, %s140
      %p144 = scmp.eq.s32.totalorder %s20, 0
      %p145 = por %p143, %p144
      %p146 = scmp.ne.s32.totalorder %s138, %s140
      %p147 = scmp.eq.s32.totalorder %s25, 3
      %p148 = por %p146, %p147
      %p149 = scmp.ne.s32.totalorder %s140, %s141
      %p150 = scmp.eq.s32.totalorder %s25, 0
      %p151 = por %p149, %p150
      %p152 = scmp.ne.s32.totalorder %s140, %s141
      %p153 = scmp.eq.s32.totalorder %s26, 3
      %p154 = por %p152, %p153
      %p156 = scmp.ne.s32.totalorder %s141, %s155
      %p157 = scmp.eq.s32.totalorder %s26, 0
      %p158 = por %p156, %p157
      %s159 = ssub.s32 %s20, %s27
      %p160 = scmp.eq.s32.totalorder %s159, 0
      %s162 = sadd.s32 %s161, 1
      %s163 = scalar_select %p160, %s161, %s162
      %p166 = pneg %p160
      %p167 = scmp.eq.s32.totalorder %s20, 3
      %p168 = por %p166, %p167
      %p169 = scmp.ne.s32.totalorder %s161, %s164
      %p170 = scmp.eq.s32.totalorder %s20, 0
      %p171 = por %p169, %p170
      %p172 = scmp.ne.s32.totalorder %s161, %s164
      %p173 = scmp.eq.s32.totalorder %s25, 3
      %p174 = por %p172, %p173
      %p175 = scmp.ne.s32.totalorder %s164, %s165
      %p176 = scmp.eq.s32.totalorder %s25, 0
      %p177 = por %p175, %p176
      %p178 = scmp.ne.s32.totalorder %s164, %s165
      %p179 = scmp.eq.s32.totalorder %s26, 3
      %p180 = por %p178, %p179
      %p182 = scmp.ne.s32.totalorder %s165, %s181
      %p183 = scmp.eq.s32.totalorder %s26, 0
      %p184 = por %p182, %p183
      %p185 = scmp.le.s32.totalorder 1, %s20
      %p186 = scmp.lt.s32.totalorder %s20, 5
      %p187 = pnand %p185, %p186
      %p188 = pneg %p187
      // Predicated region
      $region9: #{tpu_custom_call.1} parent=5 // pred_check
        _
      $region10: #{tpu_custom_call.1} parent=5 // pred_check_branch
        %190 = sbr.rel (%p187) target = $region12
      $region11: #{tpu_custom_call.1} parent=5 // pred_region
        %s191 = ssub.s32 %s20, 1
        // Predicated region
        $region13: #{tpu_custom_call.1} parent=11 // pred_check
          %p192 = pneg %p67
        $region14: #{tpu_custom_call.1} parent=11 // pred_check_branch
          %194 = sbr.rel (%p192) target = $region16
        $region15: #{tpu_custom_call.1} parent=11 // pred_region
          %s196 = ssub.s32 256, 256
          %197 = vsyncadd [#allocation6], %s196
          %s199 = sshll.u32 [#allocation5], 4
          %s200 = int_to_ptr.vmem [resolvable:$true] %s199
          %202 = dma.hbm_to_vmem [thread:$0]  %s1, 256, %s200, [#allocation6]
        $region16: #{tpu_custom_call.1} parent=11 // pred_fallthru
          _
        // Predicated region
        $region17: #{tpu_custom_call.1} parent=11 // pred_check
          %p203 = pneg %p88
        $region18: #{tpu_custom_call.1} parent=11 // pred_check_branch
          %205 = sbr.rel (%p203) target = $region20
        $region19: #{tpu_custom_call.1} parent=11 // pred_region
          _
        $region20: #{tpu_custom_call.1} parent=11 // pred_fallthru
          _
        // Predicated region
        $region21: #{tpu_custom_call.1} parent=11 // pred_check
          %p206 = pneg %p109
        $region22: #{tpu_custom_call.1} parent=11 // pred_check_branch
          %208 = sbr.rel (%p206) target = $region24
        $region23: #{tpu_custom_call.1} parent=11 // pred_region
          %s210 = ssub.s32 16, 16
          %211 = vsyncadd [#allocation6], %s210
          %s213 = sshll.u32 [#allocation7], 4
          %s214 = int_to_ptr.vmem [resolvable:$true] %s213
          %216 = dma.hbm_to_vmem [thread:$0]  %s3, 16, %s214, [#allocation6]
        $region24: #{tpu_custom_call.1} parent=11 // pred_fallthru
          _
        // Predicated region
        $region25: #{tpu_custom_call.1} parent=11 // pred_check
          %p217 = pneg %p130
        $region26: #{tpu_custom_call.1} parent=11 // pred_check_branch
          %219 = sbr.rel (%p217) target = $region28
        $region27: #{tpu_custom_call.1} parent=11 // pred_region
          %s221 = ssub.s32 512, 512
          %222 = vsyncadd [#allocation9], %s221
          %s223 = sshll.u32 [#allocation8], 4
          %s224 = int_to_ptr.vmem [resolvable:$true] %s223
          %229 = dma.hbm_to_vmem [thread:$0]  %s4, 512, %s224, [#allocation9], 128, 128, 8
        $region28: #{tpu_custom_call.1} parent=11 // pred_fallthru
          _
        // Predicated region
        $region29: #{tpu_custom_call.1} parent=11 // pred_check
          %p230 = pneg %p151
        $region30: #{tpu_custom_call.1} parent=11 // pred_check_branch
          %232 = sbr.rel (%p230) target = $region32
        $region31: #{tpu_custom_call.1} parent=11 // pred_region
          %s234 = ssub.s32 16, 16
          %235 = vsyncadd [#allocation9], %s234
          %s237 = sshll.u32 [#allocation10], 4
          %s238 = int_to_ptr.vmem [resolvable:$true] %s237
          %240 = dma.hbm_to_vmem [thread:$0]  %s5, 16, %s238, [#allocation9]
        $region32: #{tpu_custom_call.1} parent=11 // pred_fallthru
          _
      $region12: #{tpu_custom_call.1} parent=5 // pred_fallthru
        _
      %p241 = scmp.lt.s32.totalorder %s20, 4
      // Predicated region
      $region33: #{tpu_custom_call.1} parent=5 // pred_check
        %p242 = pneg %p241
      $region34: #{tpu_custom_call.1} parent=5 // pred_check_branch
        %244 = sbr.rel (%p242) target = $region36
      $region35: #{tpu_custom_call.1} parent=5 // pred_region
        // Predicated region
        $region37: #{tpu_custom_call.1} parent=35 // pred_check
          %p245 = pneg %p40
        $region38: #{tpu_custom_call.1} parent=35 // pred_check_branch
          %247 = sbr.rel (%p245) target = $region40
        $region39: #{tpu_custom_call.1} parent=35 // pred_region
          %s248 = sand.u32 %s30, 1
          %s249 = scalar_lea.sflag [#allocation3], %s248
          %s250 = sand.u32 %s30, 1
          %s251 = smul.addr %s250, 3200
          %s252 = scalar_lea.vmem [#allocation2], %s251
          %s253 = smul.u32 50, %s20
          %s255 = ssub.s32 51200, 51200
          %256 = vsyncadd %s249, %s255
          %s257 = smul.addr %s253, 8
          %s258 = smul.addr %s257, 128
          %s259 = scalar_lea.hbm %s0, %s258
          %s260 = sshll.u32 %s252, 4
          %s261 = int_to_ptr.vmem [resolvable:$true] %s260
          %266 = dma.hbm_to_vmem [thread:$0]  %s259, 51200, %s261, %s249, 1024, 1024, 64
        $region40: #{tpu_custom_call.1} parent=35 // pred_fallthru
          _
      $region36: #{tpu_custom_call.1} parent=5 // pred_fallthru
        _
      %p267 = scmp.le.s32.totalorder 1, %s20
      %p268 = scmp.lt.s32.totalorder %s20, 5
      %p269 = pnand %p267, %p268
      %p270 = pneg %p269
      // Predicated region
      $region41: #{tpu_custom_call.1} parent=5 // pred_check
        _
      $region42: #{tpu_custom_call.1} parent=5 // pred_check_branch
        %272 = sbr.rel (%p269) target = $region44
      $region43: #{tpu_custom_call.1} parent=5 // pred_region
        %s273 = ssub.s32 %s20, 1
        %s274 = sand.u32 %s33, 1
        %s275 = scalar_lea.sflag [#allocation3], %s274
        %s276 = sand.u32 %s33, 1
        %s277 = smul.addr %s276, 3200
        %s278 = scalar_lea.vmem [#allocation2], %s277
        // Predicated region
        $region45: #{tpu_custom_call.1} parent=43 // pred_check
          %p279 = pneg %p46
        $region46: #{tpu_custom_call.1} parent=43 // pred_check_branch
          %281 = sbr.rel (%p279) target = $region48
        $region47: #{tpu_custom_call.1} parent=43 // pred_region
          %282 = dma.done %s275, 51200
        $region48: #{tpu_custom_call.1} parent=43 // pred_fallthru
          _
        // Predicated region
        $region49: #{tpu_custom_call.1} parent=43 // pred_check
          %p283 = pneg %p67
        $region50: #{tpu_custom_call.1} parent=43 // pred_check_branch
          %285 = sbr.rel (%p283) target = $region52
        $region51: #{tpu_custom_call.1} parent=43 // pred_region
          %286 = dma.done [#allocation6], 256
        $region52: #{tpu_custom_call.1} parent=43 // pred_fallthru
          _
        // Predicated region
        $region53: #{tpu_custom_call.1} parent=43 // pred_check
          %p287 = pneg %p109
        $region54: #{tpu_custom_call.1} parent=43 // pred_check_branch
          %289 = sbr.rel (%p287) target = $region56
        $region55: #{tpu_custom_call.1} parent=43 // pred_region
          %290 = dma.done [#allocation6], 16
        $region56: #{tpu_custom_call.1} parent=43 // pred_fallthru
          _
        // Predicated region
        $region57: #{tpu_custom_call.1} parent=43 // pred_check
          %p291 = pneg %p130
        $region58: #{tpu_custom_call.1} parent=43 // pred_check_branch
          %293 = sbr.rel (%p291) target = $region60
        $region59: #{tpu_custom_call.1} parent=43 // pred_region
          %294 = dma.done [#allocation9], 512
        $region60: #{tpu_custom_call.1} parent=43 // pred_fallthru
          _
        // Predicated region
        $region61: #{tpu_custom_call.1} parent=43 // pred_check
          %p295 = pneg %p151
        $region62: #{tpu_custom_call.1} parent=43 // pred_check_branch
          %297 = sbr.rel (%p295) target = $region64
        $region63: #{tpu_custom_call.1} parent=43 // pred_region
          %298 = dma.done [#allocation9], 16
        $region64: #{tpu_custom_call.1} parent=43 // pred_fallthru
          _
        %s299 = sand.u32 %s33, 1
        %s300 = scalar_lea.sflag [#allocation3], %s299
        %s301 = sand.u32 %s33, 1
        %s302 = smul.addr %s301, 3200
        %s303 = scalar_lea.vmem [#allocation2], %s302
        %p304 = pneg %p46
        %p305 = pneg %p43
        %p306 = pneg %p67
        %p307 = pneg %p64
        %p308 = pneg %p88
        %p309 = pneg %p85
        %p310 = pneg %p109
        %p311 = pneg %p106
        %p312 = pneg %p130
        %p313 = pneg %p127
        %p314 = pneg %p151
        %p315 = pneg %p148
        %p316 = pneg %p177
        %p317 = pneg %p174
        %s318 = sand.u32 %s164, 1
        %s319 = scalar_lea.sflag [#allocation4], %s318
        %s320 = sand.u32 %s164, 1
        %s321 = smul.addr %s320, 4
        %s322 = scalar_lea.vmem [#allocation11], %s321
        %s323 = smul.u32 50, %s25
        %v324 = vld [vmem:[%s278] sm:$0xff]
        %v325 = vld [vmem:[%s278 + $0x8] sm:$0xff]
        %v326 = vld [vmem:[%s278 + $0x10] sm:$0xff]
        %v327 = vld [vmem:[%s278 + $0x18] sm:$0xff]
        %v328 = vld [vmem:[%s278 + $0x20] sm:$0xff]
        %v329 = vld [vmem:[%s278 + $0x28] sm:$0xff]
        %v330 = vld [vmem:[%s278 + $0x30] sm:$0xff]
        %v331 = vld [vmem:[%s278 + $0x38] sm:$0xff]
        %v332 = vld [vmem:[%s278 + $0x40] sm:$0xff]
        %v333 = vld [vmem:[%s278 + $0x48] sm:$0xff]
        %v334 = vld [vmem:[%s278 + $0x50] sm:$0xff]
        %v335 = vld [vmem:[%s278 + $0x58] sm:$0xff]
        %v336 = vld [vmem:[%s278 + $0x60] sm:$0xff]
        %v337 = vld [vmem:[%s278 + $0x68] sm:$0xff]
        %v338 = vld [vmem:[%s278 + $0x70] sm:$0xff]
        %v339 = vld [vmem:[%s278 + $0x78] sm:$0xff]
        %v340 = vld [vmem:[%s278 + $0x80] sm:$0xff]
        %v341 = vld [vmem:[%s278 + $0x88] sm:$0xff]
        %v342 = vld [vmem:[%s278 + $0x90] sm:$0xff]
        %v343 = vld [vmem:[%s278 + $0x98] sm:$0xff]
        %v344 = vld [vmem:[%s278 + $0xa0] sm:$0xff]
        %v345 = vld [vmem:[%s278 + $0xa8] sm:$0xff]
        %v346 = vld [vmem:[%s278 + $0xb0] sm:$0xff]
        %v347 = vld [vmem:[%s278 + $0xb8] sm:$0xff]
        %v348 = vld [vmem:[%s278 + $0xc0] sm:$0xff]
        %v349 = vld [vmem:[%s278 + $0xc8] sm:$0xff]
        %v350 = vld [vmem:[%s278 + $0xd0] sm:$0xff]
        %v351 = vld [vmem:[%s278 + $0xd8] sm:$0xff]
        %v352 = vld [vmem:[%s278 + $0xe0] sm:$0xff]
        %v353 = vld [vmem:[%s278 + $0xe8] sm:$0xff]
        %v354 = vld [vmem:[%s278 + $0xf0] sm:$0xff]
        %v355 = vld [vmem:[%s278 + $0xf8] sm:$0xff]
        %v356 = vld [vmem:[%s278 + $0x100] sm:$0xff]
        %v357 = vld [vmem:[%s278 + $0x108] sm:$0xff]
        %v358 = vld [vmem:[%s278 + $0x110] sm:$0xff]
        %v359 = vld [vmem:[%s278 + $0x118] sm:$0xff]
        %v360 = vld [vmem:[%s278 + $0x120] sm:$0xff]
        %v361 = vld [vmem:[%s278 + $0x128] sm:$0xff]
        %v362 = vld [vmem:[%s278 + $0x130] sm:$0xff]
        %v363 = vld [vmem:[%s278 + $0x138] sm:$0xff]
        %v364 = vld [vmem:[%s278 + $0x140] sm:$0xff]
        %v365 = vld [vmem:[%s278 + $0x148] sm:$0xff]
        %v366 = vld [vmem:[%s278 + $0x150] sm:$0xff]
        %v367 = vld [vmem:[%s278 + $0x158] sm:$0xff]
        %v368 = vld [vmem:[%s278 + $0x160] sm:$0xff]
        %v369 = vld [vmem:[%s278 + $0x168] sm:$0xff]
        %v370 = vld [vmem:[%s278 + $0x170] sm:$0xff]
        %v371 = vld [vmem:[%s278 + $0x178] sm:$0xff]
        %v372 = vld [vmem:[%s278 + $0x180] sm:$0xff]
        %v373 = vld [vmem:[%s278 + $0x188] sm:$0xff]
        %v374 = vld [vmem:[%s278 + $0x190] sm:$0xff]
        %v375 = vld [vmem:[%s278 + $0x198] sm:$0xff]
        %v376 = vld [vmem:[%s278 + $0x1a0] sm:$0xff]
        %v377 = vld [vmem:[%s278 + $0x1a8] sm:$0xff]
        %v378 = vld [vmem:[%s278 + $0x1b0] sm:$0xff]
        %v379 = vld [vmem:[%s278 + $0x1b8] sm:$0xff]
        %v380 = vld [vmem:[%s278 + $0x1c0] sm:$0xff]
        %v381 = vld [vmem:[%s278 + $0x1c8] sm:$0xff]
        %v382 = vld [vmem:[%s278 + $0x1d0] sm:$0xff]
        %v383 = vld [vmem:[%s278 + $0x1d8] sm:$0xff]
        %v384 = vld [vmem:[%s278 + $0x1e0] sm:$0xff]
        %v385 = vld [vmem:[%s278 + $0x1e8] sm:$0xff]
        %v386 = vld [vmem:[%s278 + $0x1f0] sm:$0xff]
        %v387 = vld [vmem:[%s278 + $0x1f8] sm:$0xff]
        %v388 = vld [vmem:[%s278 + $0x200] sm:$0xff]
        %v389 = vld [vmem:[%s278 + $0x208] sm:$0xff]
        %v390 = vld [vmem:[%s278 + $0x210] sm:$0xff]
        %v391 = vld [vmem:[%s278 + $0x218] sm:$0xff]
        %v392 = vld [vmem:[%s278 + $0x220] sm:$0xff]
        %v393 = vld [vmem:[%s278 + $0x228] sm:$0xff]
        %v394 = vld [vmem:[%s278 + $0x230] sm:$0xff]
        %v395 = vld [vmem:[%s278 + $0x238] sm:$0xff]
        %v396 = vld [vmem:[%s278 + $0x240] sm:$0xff]
        %v397 = vld [vmem:[%s278 + $0x248] sm:$0xff]
        %v398 = vld [vmem:[%s278 + $0x250] sm:$0xff]
        %v399 = vld [vmem:[%s278 + $0x258] sm:$0xff]
        %v400 = vld [vmem:[%s278 + $0x260] sm:$0xff]
        %v401 = vld [vmem:[%s278 + $0x268] sm:$0xff]
        %v402 = vld [vmem:[%s278 + $0x270] sm:$0xff]
        %v403 = vld [vmem:[%s278 + $0x278] sm:$0xff]
        %v404 = vld [vmem:[%s278 + $0x280] sm:$0xff]
        %v405 = vld [vmem:[%s278 + $0x288] sm:$0xff]
        %v406 = vld [vmem:[%s278 + $0x290] sm:$0xff]
        %v407 = vld [vmem:[%s278 + $0x298] sm:$0xff]
        %v408 = vld [vmem:[%s278 + $0x2a0] sm:$0xff]
        %v409 = vld [vmem:[%s278 + $0x2a8] sm:$0xff]
        %v410 = vld [vmem:[%s278 + $0x2b0] sm:$0xff]
        %v411 = vld [vmem:[%s278 + $0x2b8] sm:$0xff]
        %v412 = vld [vmem:[%s278 + $0x2c0] sm:$0xff]
        %v413 = vld [vmem:[%s278 + $0x2c8] sm:$0xff]
        %v414 = vld [vmem:[%s278 + $0x2d0] sm:$0xff]
        %v415 = vld [vmem:[%s278 + $0x2d8] sm:$0xff]
        %v416 = vld [vmem:[%s278 + $0x2e0] sm:$0xff]
        %v417 = vld [vmem:[%s278 + $0x2e8] sm:$0xff]
        %v418 = vld [vmem:[%s278 + $0x2f0] sm:$0xff]
        %v419 = vld [vmem:[%s278 + $0x2f8] sm:$0xff]
        %v420 = vld [vmem:[%s278 + $0x300] sm:$0xff]
        %v421 = vld [vmem:[%s278 + $0x308] sm:$0xff]
        %v422 = vld [vmem:[%s278 + $0x310] sm:$0xff]
        %v423 = vld [vmem:[%s278 + $0x318] sm:$0xff]
        %v424 = vld [vmem:[%s278 + $0x320] sm:$0xff]
        %v425 = vld [vmem:[%s278 + $0x328] sm:$0xff]
        %v426 = vld [vmem:[%s278 + $0x330] sm:$0xff]
        %v427 = vld [vmem:[%s278 + $0x338] sm:$0xff]
        %v428 = vld [vmem:[%s278 + $0x340] sm:$0xff]
        %v429 = vld [vmem:[%s278 + $0x348] sm:$0xff]
        %v430 = vld [vmem:[%s278 + $0x350] sm:$0xff]
        %v431 = vld [vmem:[%s278 + $0x358] sm:$0xff]
        %v432 = vld [vmem:[%s278 + $0x360] sm:$0xff]
        %v433 = vld [vmem:[%s278 + $0x368] sm:$0xff]
        %v434 = vld [vmem:[%s278 + $0x370] sm:$0xff]
        %v435 = vld [vmem:[%s278 + $0x378] sm:$0xff]
        %v436 = vld [vmem:[%s278 + $0x380] sm:$0xff]
        %v437 = vld [vmem:[%s278 + $0x388] sm:$0xff]
        %v438 = vld [vmem:[%s278 + $0x390] sm:$0xff]
        %v439 = vld [vmem:[%s278 + $0x398] sm:$0xff]
        %v440 = vld [vmem:[%s278 + $0x3a0] sm:$0xff]
        %v441 = vld [vmem:[%s278 + $0x3a8] sm:$0xff]
        %v442 = vld [vmem:[%s278 + $0x3b0] sm:$0xff]
        %v443 = vld [vmem:[%s278 + $0x3b8] sm:$0xff]
        %v444 = vld [vmem:[%s278 + $0x3c0] sm:$0xff]
        %v445 = vld [vmem:[%s278 + $0x3c8] sm:$0xff]
        %v446 = vld [vmem:[%s278 + $0x3d0] sm:$0xff]
        %v447 = vld [vmem:[%s278 + $0x3d8] sm:$0xff]
        %v448 = vld [vmem:[%s278 + $0x3e0] sm:$0xff]
        %v449 = vld [vmem:[%s278 + $0x3e8] sm:$0xff]
        %v450 = vld [vmem:[%s278 + $0x3f0] sm:$0xff]
        %v451 = vld [vmem:[%s278 + $0x3f8] sm:$0xff]
        %v452 = vld [vmem:[%s278 + $0x400] sm:$0xff]
        %v453 = vld [vmem:[%s278 + $0x408] sm:$0xff]
        %v454 = vld [vmem:[%s278 + $0x410] sm:$0xff]
        %v455 = vld [vmem:[%s278 + $0x418] sm:$0xff]
        %v456 = vld [vmem:[%s278 + $0x420] sm:$0xff]
        %v457 = vld [vmem:[%s278 + $0x428] sm:$0xff]
        %v458 = vld [vmem:[%s278 + $0x430] sm:$0xff]
        %v459 = vld [vmem:[%s278 + $0x438] sm:$0xff]
        %v460 = vld [vmem:[%s278 + $0x440] sm:$0xff]
        %v461 = vld [vmem:[%s278 + $0x448] sm:$0xff]
        %v462 = vld [vmem:[%s278 + $0x450] sm:$0xff]
        %v463 = vld [vmem:[%s278 + $0x458] sm:$0xff]
        %v464 = vld [vmem:[%s278 + $0x460] sm:$0xff]
        %v465 = vld [vmem:[%s278 + $0x468] sm:$0xff]
        %v466 = vld [vmem:[%s278 + $0x470] sm:$0xff]
        %v467 = vld [vmem:[%s278 + $0x478] sm:$0xff]
        %v468 = vld [vmem:[%s278 + $0x480] sm:$0xff]
        %v469 = vld [vmem:[%s278 + $0x488] sm:$0xff]
        %v470 = vld [vmem:[%s278 + $0x490] sm:$0xff]
        %v471 = vld [vmem:[%s278 + $0x498] sm:$0xff]
        %v472 = vld [vmem:[%s278 + $0x4a0] sm:$0xff]
        %v473 = vld [vmem:[%s278 + $0x4a8] sm:$0xff]
        %v474 = vld [vmem:[%s278 + $0x4b0] sm:$0xff]
        %v475 = vld [vmem:[%s278 + $0x4b8] sm:$0xff]
        %v476 = vld [vmem:[%s278 + $0x4c0] sm:$0xff]
        %v477 = vld [vmem:[%s278 + $0x4c8] sm:$0xff]
        %v478 = vld [vmem:[%s278 + $0x4d0] sm:$0xff]
        %v479 = vld [vmem:[%s278 + $0x4d8] sm:$0xff]
        %v480 = vld [vmem:[%s278 + $0x4e0] sm:$0xff]
        %v481 = vld [vmem:[%s278 + $0x4e8] sm:$0xff]
        %v482 = vld [vmem:[%s278 + $0x4f0] sm:$0xff]
        %v483 = vld [vmem:[%s278 + $0x4f8] sm:$0xff]
        %v484 = vld [vmem:[%s278 + $0x500] sm:$0xff]
        %v485 = vld [vmem:[%s278 + $0x508] sm:$0xff]
        %v486 = vld [vmem:[%s278 + $0x510] sm:$0xff]
        %v487 = vld [vmem:[%s278 + $0x518] sm:$0xff]
        %v488 = vld [vmem:[%s278 + $0x520] sm:$0xff]
        %v489 = vld [vmem:[%s278 + $0x528] sm:$0xff]
        %v490 = vld [vmem:[%s278 + $0x530] sm:$0xff]
        %v491 = vld [vmem:[%s278 + $0x538] sm:$0xff]
        %v492 = vld [vmem:[%s278 + $0x540] sm:$0xff]
        %v493 = vld [vmem:[%s278 + $0x548] sm:$0xff]
        %v494 = vld [vmem:[%s278 + $0x550] sm:$0xff]
        %v495 = vld [vmem:[%s278 + $0x558] sm:$0xff]
        %v496 = vld [vmem:[%s278 + $0x560] sm:$0xff]
        %v497 = vld [vmem:[%s278 + $0x568] sm:$0xff]
        %v498 = vld [vmem:[%s278 + $0x570] sm:$0xff]
        %v499 = vld [vmem:[%s278 + $0x578] sm:$0xff]
        %v500 = vld [vmem:[%s278 + $0x580] sm:$0xff]
        %v501 = vld [vmem:[%s278 + $0x588] sm:$0xff]
        %v502 = vld [vmem:[%s278 + $0x590] sm:$0xff]
        %v503 = vld [vmem:[%s278 + $0x598] sm:$0xff]
        %v504 = vld [vmem:[%s278 + $0x5a0] sm:$0xff]
        %v505 = vld [vmem:[%s278 + $0x5a8] sm:$0xff]
        %v506 = vld [vmem:[%s278 + $0x5b0] sm:$0xff]
        %v507 = vld [vmem:[%s278 + $0x5b8] sm:$0xff]
        %v508 = vld [vmem:[%s278 + $0x5c0] sm:$0xff]
        %v509 = vld [vmem:[%s278 + $0x5c8] sm:$0xff]
        %v510 = vld [vmem:[%s278 + $0x5d0] sm:$0xff]
        %v511 = vld [vmem:[%s278 + $0x5d8] sm:$0xff]
        %v512 = vld [vmem:[%s278 + $0x5e0] sm:$0xff]
        %v513 = vld [vmem:[%s278 + $0x5e8] sm:$0xff]
        %v514 = vld [vmem:[%s278 + $0x5f0] sm:$0xff]
        %v515 = vld [vmem:[%s278 + $0x5f8] sm:$0xff]
        %v516 = vld [vmem:[%s278 + $0x600] sm:$0xff]
        %v517 = vld [vmem:[%s278 + $0x608] sm:$0xff]
        %v518 = vld [vmem:[%s278 + $0x610] sm:$0xff]
        %v519 = vld [vmem:[%s278 + $0x618] sm:$0xff]
        %v520 = vld [vmem:[%s278 + $0x620] sm:$0xff]
        %v521 = vld [vmem:[%s278 + $0x628] sm:$0xff]
        %v522 = vld [vmem:[%s278 + $0x630] sm:$0xff]
        %v523 = vld [vmem:[%s278 + $0x638] sm:$0xff]
        %v524 = vld [vmem:[%s278 + $0x640] sm:$0xff]
        %v525 = vld [vmem:[%s278 + $0x648] sm:$0xff]
        %v526 = vld [vmem:[%s278 + $0x650] sm:$0xff]
        %v527 = vld [vmem:[%s278 + $0x658] sm:$0xff]
        %v528 = vld [vmem:[%s278 + $0x660] sm:$0xff]
        %v529 = vld [vmem:[%s278 + $0x668] sm:$0xff]
        %v530 = vld [vmem:[%s278 + $0x670] sm:$0xff]
        %v531 = vld [vmem:[%s278 + $0x678] sm:$0xff]
        %v532 = vld [vmem:[%s278 + $0x680] sm:$0xff]
        %v533 = vld [vmem:[%s278 + $0x688] sm:$0xff]
        %v534 = vld [vmem:[%s278 + $0x690] sm:$0xff]
        %v535 = vld [vmem:[%s278 + $0x698] sm:$0xff]
        %v536 = vld [vmem:[%s278 + $0x6a0] sm:$0xff]
        %v537 = vld [vmem:[%s278 + $0x6a8] sm:$0xff]
        %v538 = vld [vmem:[%s278 + $0x6b0] sm:$0xff]
        %v539 = vld [vmem:[%s278 + $0x6b8] sm:$0xff]
        %v540 = vld [vmem:[%s278 + $0x6c0] sm:$0xff]
        %v541 = vld [vmem:[%s278 + $0x6c8] sm:$0xff]
        %v542 = vld [vmem:[%s278 + $0x6d0] sm:$0xff]
        %v543 = vld [vmem:[%s278 + $0x6d8] sm:$0xff]
        %v544 = vld [vmem:[%s278 + $0x6e0] sm:$0xff]
        %v545 = vld [vmem:[%s278 + $0x6e8] sm:$0xff]
        %v546 = vld [vmem:[%s278 + $0x6f0] sm:$0xff]
        %v547 = vld [vmem:[%s278 + $0x6f8] sm:$0xff]
        %v548 = vld [vmem:[%s278 + $0x700] sm:$0xff]
        %v549 = vld [vmem:[%s278 + $0x708] sm:$0xff]
        %v550 = vld [vmem:[%s278 + $0x710] sm:$0xff]
        %v551 = vld [vmem:[%s278 + $0x718] sm:$0xff]
        %v552 = vld [vmem:[%s278 + $0x720] sm:$0xff]
        %v553 = vld [vmem:[%s278 + $0x728] sm:$0xff]
        %v554 = vld [vmem:[%s278 + $0x730] sm:$0xff]
        %v555 = vld [vmem:[%s278 + $0x738] sm:$0xff]
        %v556 = vld [vmem:[%s278 + $0x740] sm:$0xff]
        %v557 = vld [vmem:[%s278 + $0x748] sm:$0xff]
        %v558 = vld [vmem:[%s278 + $0x750] sm:$0xff]
        %v559 = vld [vmem:[%s278 + $0x758] sm:$0xff]
        %v560 = vld [vmem:[%s278 + $0x760] sm:$0xff]
        %v561 = vld [vmem:[%s278 + $0x768] sm:$0xff]
        %v562 = vld [vmem:[%s278 + $0x770] sm:$0xff]
        %v563 = vld [vmem:[%s278 + $0x778] sm:$0xff]
        %v564 = vld [vmem:[%s278 + $0x780] sm:$0xff]
        %v565 = vld [vmem:[%s278 + $0x788] sm:$0xff]
        %v566 = vld [vmem:[%s278 + $0x790] sm:$0xff]
        %v567 = vld [vmem:[%s278 + $0x798] sm:$0xff]
        %v568 = vld [vmem:[%s278 + $0x7a0] sm:$0xff]
        %v569 = vld [vmem:[%s278 + $0x7a8] sm:$0xff]
        %v570 = vld [vmem:[%s278 + $0x7b0] sm:$0xff]
        %v571 = vld [vmem:[%s278 + $0x7b8] sm:$0xff]
        %v572 = vld [vmem:[%s278 + $0x7c0] sm:$0xff]
        %v573 = vld [vmem:[%s278 + $0x7c8] sm:$0xff]
        %v574 = vld [vmem:[%s278 + $0x7d0] sm:$0xff]
        %v575 = vld [vmem:[%s278 + $0x7d8] sm:$0xff]
        %v576 = vld [vmem:[%s278 + $0x7e0] sm:$0xff]
        %v577 = vld [vmem:[%s278 + $0x7e8] sm:$0xff]
        %v578 = vld [vmem:[%s278 + $0x7f0] sm:$0xff]
        %v579 = vld [vmem:[%s278 + $0x7f8] sm:$0xff]
        %v580 = vld [vmem:[%s278 + $0x800] sm:$0xff]
        %v581 = vld [vmem:[%s278 + $0x808] sm:$0xff]
        %v582 = vld [vmem:[%s278 + $0x810] sm:$0xff]
        %v583 = vld [vmem:[%s278 + $0x818] sm:$0xff]
        %v584 = vld [vmem:[%s278 + $0x820] sm:$0xff]
        %v585 = vld [vmem:[%s278 + $0x828] sm:$0xff]
        %v586 = vld [vmem:[%s278 + $0x830] sm:$0xff]
        %v587 = vld [vmem:[%s278 + $0x838] sm:$0xff]
        %v588 = vld [vmem:[%s278 + $0x840] sm:$0xff]
        %v589 = vld [vmem:[%s278 + $0x848] sm:$0xff]
        %v590 = vld [vmem:[%s278 + $0x850] sm:$0xff]
        %v591 = vld [vmem:[%s278 + $0x858] sm:$0xff]
        %v592 = vld [vmem:[%s278 + $0x860] sm:$0xff]
        %v593 = vld [vmem:[%s278 + $0x868] sm:$0xff]
        %v594 = vld [vmem:[%s278 + $0x870] sm:$0xff]
        %v595 = vld [vmem:[%s278 + $0x878] sm:$0xff]
        %v596 = vld [vmem:[%s278 + $0x880] sm:$0xff]
        %v597 = vld [vmem:[%s278 + $0x888] sm:$0xff]
        %v598 = vld [vmem:[%s278 + $0x890] sm:$0xff]
        %v599 = vld [vmem:[%s278 + $0x898] sm:$0xff]
        %v600 = vld [vmem:[%s278 + $0x8a0] sm:$0xff]
        %v601 = vld [vmem:[%s278 + $0x8a8] sm:$0xff]
        %v602 = vld [vmem:[%s278 + $0x8b0] sm:$0xff]
        %v603 = vld [vmem:[%s278 + $0x8b8] sm:$0xff]
        %v604 = vld [vmem:[%s278 + $0x8c0] sm:$0xff]
        %v605 = vld [vmem:[%s278 + $0x8c8] sm:$0xff]
        %v606 = vld [vmem:[%s278 + $0x8d0] sm:$0xff]
        %v607 = vld [vmem:[%s278 + $0x8d8] sm:$0xff]
        %v608 = vld [vmem:[%s278 + $0x8e0] sm:$0xff]
        %v609 = vld [vmem:[%s278 + $0x8e8] sm:$0xff]
        %v610 = vld [vmem:[%s278 + $0x8f0] sm:$0xff]
        %v611 = vld [vmem:[%s278 + $0x8f8] sm:$0xff]
        %v612 = vld [vmem:[%s278 + $0x900] sm:$0xff]
        %v613 = vld [vmem:[%s278 + $0x908] sm:$0xff]
        %v614 = vld [vmem:[%s278 + $0x910] sm:$0xff]
        %v615 = vld [vmem:[%s278 + $0x918] sm:$0xff]
        %v616 = vld [vmem:[%s278 + $0x920] sm:$0xff]
        %v617 = vld [vmem:[%s278 + $0x928] sm:$0xff]
        %v618 = vld [vmem:[%s278 + $0x930] sm:$0xff]
        %v619 = vld [vmem:[%s278 + $0x938] sm:$0xff]
        %v620 = vld [vmem:[%s278 + $0x940] sm:$0xff]
        %v621 = vld [vmem:[%s278 + $0x948] sm:$0xff]
        %v622 = vld [vmem:[%s278 + $0x950] sm:$0xff]
        %v623 = vld [vmem:[%s278 + $0x958] sm:$0xff]
        %v624 = vld [vmem:[%s278 + $0x960] sm:$0xff]
        %v625 = vld [vmem:[%s278 + $0x968] sm:$0xff]
        %v626 = vld [vmem:[%s278 + $0x970] sm:$0xff]
        %v627 = vld [vmem:[%s278 + $0x978] sm:$0xff]
        %v628 = vld [vmem:[%s278 + $0x980] sm:$0xff]
        %v629 = vld [vmem:[%s278 + $0x988] sm:$0xff]
        %v630 = vld [vmem:[%s278 + $0x990] sm:$0xff]
        %v631 = vld [vmem:[%s278 + $0x998] sm:$0xff]
        %v632 = vld [vmem:[%s278 + $0x9a0] sm:$0xff]
        %v633 = vld [vmem:[%s278 + $0x9a8] sm:$0xff]
        %v634 = vld [vmem:[%s278 + $0x9b0] sm:$0xff]
        %v635 = vld [vmem:[%s278 + $0x9b8] sm:$0xff]
        %v636 = vld [vmem:[%s278 + $0x9c0] sm:$0xff]
        %v637 = vld [vmem:[%s278 + $0x9c8] sm:$0xff]
        %v638 = vld [vmem:[%s278 + $0x9d0] sm:$0xff]
        %v639 = vld [vmem:[%s278 + $0x9d8] sm:$0xff]
        %v640 = vld [vmem:[%s278 + $0x9e0] sm:$0xff]
        %v641 = vld [vmem:[%s278 + $0x9e8] sm:$0xff]
        %v642 = vld [vmem:[%s278 + $0x9f0] sm:$0xff]
        %v643 = vld [vmem:[%s278 + $0x9f8] sm:$0xff]
        %v644 = vld [vmem:[%s278 + $0xa00] sm:$0xff]
        %v645 = vld [vmem:[%s278 + $0xa08] sm:$0xff]
        %v646 = vld [vmem:[%s278 + $0xa10] sm:$0xff]
        %v647 = vld [vmem:[%s278 + $0xa18] sm:$0xff]
        %v648 = vld [vmem:[%s278 + $0xa20] sm:$0xff]
        %v649 = vld [vmem:[%s278 + $0xa28] sm:$0xff]
        %v650 = vld [vmem:[%s278 + $0xa30] sm:$0xff]
        %v651 = vld [vmem:[%s278 + $0xa38] sm:$0xff]
        %v652 = vld [vmem:[%s278 + $0xa40] sm:$0xff]
        %v653 = vld [vmem:[%s278 + $0xa48] sm:$0xff]
        %v654 = vld [vmem:[%s278 + $0xa50] sm:$0xff]
        %v655 = vld [vmem:[%s278 + $0xa58] sm:$0xff]
        %v656 = vld [vmem:[%s278 + $0xa60] sm:$0xff]
        %v657 = vld [vmem:[%s278 + $0xa68] sm:$0xff]
        %v658 = vld [vmem:[%s278 + $0xa70] sm:$0xff]
        %v659 = vld [vmem:[%s278 + $0xa78] sm:$0xff]
        %v660 = vld [vmem:[%s278 + $0xa80] sm:$0xff]
        %v661 = vld [vmem:[%s278 + $0xa88] sm:$0xff]
        %v662 = vld [vmem:[%s278 + $0xa90] sm:$0xff]
        %v663 = vld [vmem:[%s278 + $0xa98] sm:$0xff]
        %v664 = vld [vmem:[%s278 + $0xaa0] sm:$0xff]
        %v665 = vld [vmem:[%s278 + $0xaa8] sm:$0xff]
        %v666 = vld [vmem:[%s278 + $0xab0] sm:$0xff]
        %v667 = vld [vmem:[%s278 + $0xab8] sm:$0xff]
        %v668 = vld [vmem:[%s278 + $0xac0] sm:$0xff]
        %v669 = vld [vmem:[%s278 + $0xac8] sm:$0xff]
        %v670 = vld [vmem:[%s278 + $0xad0] sm:$0xff]
        %v671 = vld [vmem:[%s278 + $0xad8] sm:$0xff]
        %v672 = vld [vmem:[%s278 + $0xae0] sm:$0xff]
        %v673 = vld [vmem:[%s278 + $0xae8] sm:$0xff]
        %v674 = vld [vmem:[%s278 + $0xaf0] sm:$0xff]
        %v675 = vld [vmem:[%s278 + $0xaf8] sm:$0xff]
        %v676 = vld [vmem:[%s278 + $0xb00] sm:$0xff]
        %v677 = vld [vmem:[%s278 + $0xb08] sm:$0xff]
        %v678 = vld [vmem:[%s278 + $0xb10] sm:$0xff]
        %v679 = vld [vmem:[%s278 + $0xb18] sm:$0xff]
        %v680 = vld [vmem:[%s278 + $0xb20] sm:$0xff]
        %v681 = vld [vmem:[%s278 + $0xb28] sm:$0xff]
        %v682 = vld [vmem:[%s278 + $0xb30] sm:$0xff]
        %v683 = vld [vmem:[%s278 + $0xb38] sm:$0xff]
        %v684 = vld [vmem:[%s278 + $0xb40] sm:$0xff]
        %v685 = vld [vmem:[%s278 + $0xb48] sm:$0xff]
        %v686 = vld [vmem:[%s278 + $0xb50] sm:$0xff]
        %v687 = vld [vmem:[%s278 + $0xb58] sm:$0xff]
        %v688 = vld [vmem:[%s278 + $0xb60] sm:$0xff]
        %v689 = vld [vmem:[%s278 + $0xb68] sm:$0xff]
        %v690 = vld [vmem:[%s278 + $0xb70] sm:$0xff]
        %v691 = vld [vmem:[%s278 + $0xb78] sm:$0xff]
        %v692 = vld [vmem:[%s278 + $0xb80] sm:$0xff]
        %v693 = vld [vmem:[%s278 + $0xb88] sm:$0xff]
        %v694 = vld [vmem:[%s278 + $0xb90] sm:$0xff]
        %v695 = vld [vmem:[%s278 + $0xb98] sm:$0xff]
        %v696 = vld [vmem:[%s278 + $0xba0] sm:$0xff]
        %v697 = vld [vmem:[%s278 + $0xba8] sm:$0xff]
        %v698 = vld [vmem:[%s278 + $0xbb0] sm:$0xff]
        %v699 = vld [vmem:[%s278 + $0xbb8] sm:$0xff]
        %v700 = vld [vmem:[%s278 + $0xbc0] sm:$0xff]
        %v701 = vld [vmem:[%s278 + $0xbc8] sm:$0xff]
        %v702 = vld [vmem:[%s278 + $0xbd0] sm:$0xff]
        %v703 = vld [vmem:[%s278 + $0xbd8] sm:$0xff]
        %v704 = vld [vmem:[%s278 + $0xbe0] sm:$0xff]
        %v705 = vld [vmem:[%s278 + $0xbe8] sm:$0xff]
        %v706 = vld [vmem:[%s278 + $0xbf0] sm:$0xff]
        %v707 = vld [vmem:[%s278 + $0xbf8] sm:$0xff]
        %v708 = vld [vmem:[%s278 + $0xc00] sm:$0xff]
        %v709 = vld [vmem:[%s278 + $0xc08] sm:$0xff]
        %v710 = vld [vmem:[%s278 + $0xc10] sm:$0xff]
        %v711 = vld [vmem:[%s278 + $0xc18] sm:$0xff]
        %v712 = vld [vmem:[%s278 + $0xc20] sm:$0xff]
        %v713 = vld [vmem:[%s278 + $0xc28] sm:$0xff]
        %v714 = vld [vmem:[%s278 + $0xc30] sm:$0xff]
        %v715 = vld [vmem:[%s278 + $0xc38] sm:$0xff]
        %v716 = vld [vmem:[%s278 + $0xc40] sm:$0xff]
        %v717 = vld [vmem:[%s278 + $0xc48] sm:$0xff]
        %v718 = vld [vmem:[%s278 + $0xc50] sm:$0xff]
        %v719 = vld [vmem:[%s278 + $0xc58] sm:$0xff]
        %v720 = vld [vmem:[%s278 + $0xc60] sm:$0xff]
        %v721 = vld [vmem:[%s278 + $0xc68] sm:$0xff]
        %v722 = vld [vmem:[%s278 + $0xc70] sm:$0xff]
        %v723 = vld [vmem:[%s278 + $0xc78] sm:$0xff]
        %v724 = vld [vmem:[%s2] sm:$0xff]
        %v725 = vld [vmem:[%s2 + $0x8] sm:$0xff]
        %v726 = vld [vmem:[%s2 + $0x10] sm:$0xff]
        %v727 = vld [vmem:[%s2 + $0x18] sm:$0xff]
        %v728 = vld [vmem:[%s2 + $0x20] sm:$0xff]
        %v729 = vld [vmem:[%s2 + $0x28] sm:$0xff]
        %v730 = vld [vmem:[%s2 + $0x30] sm:$0xff]
        %v731 = vld [vmem:[%s2 + $0x38] sm:$0xff]
        %v732 = vld [vmem:[%s2 + $0x40] sm:$0xff]
        %v733 = vld [vmem:[%s2 + $0x48] sm:$0xff]
        %v734 = vld [vmem:[%s2 + $0x50] sm:$0xff]
        %v735 = vld [vmem:[%s2 + $0x58] sm:$0xff]
        %v736 = vld [vmem:[%s2 + $0x60] sm:$0xff]
        %v737 = vld [vmem:[%s2 + $0x68] sm:$0xff]
        %v738 = vld [vmem:[%s2 + $0x70] sm:$0xff]
        %v739 = vld [vmem:[%s2 + $0x78] sm:$0xff]
        %v740 = vld [vmem:[%s2 + $0x80] sm:$0xff]
        %v741 = vld [vmem:[%s2 + $0x88] sm:$0xff]
        %v742 = vld [vmem:[%s2 + $0x90] sm:$0xff]
        %v743 = vld [vmem:[%s2 + $0x98] sm:$0xff]
        %v744 = vld [vmem:[%s2 + $0xa0] sm:$0xff]
        %v745 = vld [vmem:[%s2 + $0xa8] sm:$0xff]
        %v746 = vld [vmem:[%s2 + $0xb0] sm:$0xff]
        %v747 = vld [vmem:[%s2 + $0xb8] sm:$0xff]
        %v748 = vld [vmem:[%s2 + $0xc0] sm:$0xff]
        %v749 = vld [vmem:[%s2 + $0xc8] sm:$0xff]
        %v750 = vld [vmem:[%s2 + $0xd0] sm:$0xff]
        %v751 = vld [vmem:[%s2 + $0xd8] sm:$0xff]
        %v752 = vld [vmem:[%s2 + $0xe0] sm:$0xff]
        %v753 = vld [vmem:[%s2 + $0xe8] sm:$0xff]
        %v754 = vld [vmem:[%s2 + $0xf0] sm:$0xff]
        %v755 = vld [vmem:[%s2 + $0xf8] sm:$0xff]
        %v756 = vld [vmem:[%s2 + $0x100] sm:$0xff]
        %v757 = vld [vmem:[%s2 + $0x108] sm:$0xff]
        %v758 = vld [vmem:[%s2 + $0x110] sm:$0xff]
        %v759 = vld [vmem:[%s2 + $0x118] sm:$0xff]
        %v760 = vld [vmem:[%s2 + $0x120] sm:$0xff]
        %v761 = vld [vmem:[%s2 + $0x128] sm:$0xff]
        %v762 = vld [vmem:[%s2 + $0x130] sm:$0xff]
        %v763 = vld [vmem:[%s2 + $0x138] sm:$0xff]
        %v764 = vld [vmem:[%s2 + $0x140] sm:$0xff]
        %v765 = vld [vmem:[%s2 + $0x148] sm:$0xff]
        %v766 = vld [vmem:[%s2 + $0x150] sm:$0xff]
        %v767 = vld [vmem:[%s2 + $0x158] sm:$0xff]
        %v768 = vld [vmem:[%s2 + $0x160] sm:$0xff]
        %v769 = vld [vmem:[%s2 + $0x168] sm:$0xff]
        %v770 = vld [vmem:[%s2 + $0x170] sm:$0xff]
        %v771 = vld [vmem:[%s2 + $0x178] sm:$0xff]
        %v772 = vld [vmem:[%s2 + $0x180] sm:$0xff]
        %v773 = vld [vmem:[%s2 + $0x188] sm:$0xff]
        %v774 = vld [vmem:[%s2 + $0x190] sm:$0xff]
        %v775 = vld [vmem:[%s2 + $0x198] sm:$0xff]
        %v776 = vld [vmem:[%s2 + $0x1a0] sm:$0xff]
        %v777 = vld [vmem:[%s2 + $0x1a8] sm:$0xff]
        %v778 = vld [vmem:[%s2 + $0x1b0] sm:$0xff]
        %v779 = vld [vmem:[%s2 + $0x1b8] sm:$0xff]
        %v780 = vld [vmem:[%s2 + $0x1c0] sm:$0xff]
        %v781 = vld [vmem:[%s2 + $0x1c8] sm:$0xff]
        %v782 = vld [vmem:[%s2 + $0x1d0] sm:$0xff]
        %v783 = vld [vmem:[%s2 + $0x1d8] sm:$0xff]
        %v784 = vld [vmem:[%s2 + $0x1e0] sm:$0xff]
        %v785 = vld [vmem:[%s2 + $0x1e8] sm:$0xff]
        %v786 = vld [vmem:[%s2 + $0x1f0] sm:$0xff]
        %v787 = vld [vmem:[%s2 + $0x1f8] sm:$0xff]
        %v788 = vld [vmem:[%s2 + $0x200] sm:$0xff]
        %v789 = vld [vmem:[%s2 + $0x208] sm:$0xff]
        %v790 = vld [vmem:[%s2 + $0x210] sm:$0xff]
        %v791 = vld [vmem:[%s2 + $0x218] sm:$0xff]
        %v792 = vld [vmem:[%s2 + $0x220] sm:$0xff]
        %v793 = vld [vmem:[%s2 + $0x228] sm:$0xff]
        %v794 = vld [vmem:[%s2 + $0x230] sm:$0xff]
        %v795 = vld [vmem:[%s2 + $0x238] sm:$0xff]
        %v796 = vld [vmem:[%s2 + $0x240] sm:$0xff]
        %v797 = vld [vmem:[%s2 + $0x248] sm:$0xff]
        %v798 = vld [vmem:[%s2 + $0x250] sm:$0xff]
        %v799 = vld [vmem:[%s2 + $0x258] sm:$0xff]
        %v800 = vld [vmem:[%s2 + $0x260] sm:$0xff]
        %v801 = vld [vmem:[%s2 + $0x268] sm:$0xff]
        %v802 = vld [vmem:[%s2 + $0x270] sm:$0xff]
        %v803 = vld [vmem:[%s2 + $0x278] sm:$0xff]
        %v804 = vld [vmem:[%s2 + $0x280] sm:$0xff]
        %v805 = vld [vmem:[%s2 + $0x288] sm:$0xff]
        %v806 = vld [vmem:[%s2 + $0x290] sm:$0xff]
        %v807 = vld [vmem:[%s2 + $0x298] sm:$0xff]
        %v808 = vld [vmem:[%s2 + $0x2a0] sm:$0xff]
        %v809 = vld [vmem:[%s2 + $0x2a8] sm:$0xff]
        %v810 = vld [vmem:[%s2 + $0x2b0] sm:$0xff]
        %v811 = vld [vmem:[%s2 + $0x2b8] sm:$0xff]
        %v812 = vld [vmem:[%s2 + $0x2c0] sm:$0xff]
        %v813 = vld [vmem:[%s2 + $0x2c8] sm:$0xff]
        %v814 = vld [vmem:[%s2 + $0x2d0] sm:$0xff]
        %v815 = vld [vmem:[%s2 + $0x2d8] sm:$0xff]
        %v816 = vld [vmem:[%s2 + $0x2e0] sm:$0xff]
        %v817 = vld [vmem:[%s2 + $0x2e8] sm:$0xff]
        %v818 = vld [vmem:[%s2 + $0x2f0] sm:$0xff]
        %v819 = vld [vmem:[%s2 + $0x2f8] sm:$0xff]
        %v820 = vld [vmem:[%s2 + $0x300] sm:$0xff]
        %v821 = vld [vmem:[%s2 + $0x308] sm:$0xff]
        %v822 = vld [vmem:[%s2 + $0x310] sm:$0xff]
        %v823 = vld [vmem:[%s2 + $0x318] sm:$0xff]
        %v824 = vld [vmem:[%s2 + $0x320] sm:$0xff]
        %v825 = vld [vmem:[%s2 + $0x328] sm:$0xff]
        %v826 = vld [vmem:[%s2 + $0x330] sm:$0xff]
        %v827 = vld [vmem:[%s2 + $0x338] sm:$0xff]
        %v828 = vld [vmem:[%s2 + $0x340] sm:$0xff]
        %v829 = vld [vmem:[%s2 + $0x348] sm:$0xff]
        %v830 = vld [vmem:[%s2 + $0x350] sm:$0xff]
        %v831 = vld [vmem:[%s2 + $0x358] sm:$0xff]
        %v832 = vld [vmem:[%s2 + $0x360] sm:$0xff]
        %v833 = vld [vmem:[%s2 + $0x368] sm:$0xff]
        %v834 = vld [vmem:[%s2 + $0x370] sm:$0xff]
        %v835 = vld [vmem:[%s2 + $0x378] sm:$0xff]
        %v836 = vld [vmem:[%s2 + $0x380] sm:$0xff]
        %v837 = vld [vmem:[%s2 + $0x388] sm:$0xff]
        %v838 = vld [vmem:[%s2 + $0x390] sm:$0xff]
        %v839 = vld [vmem:[%s2 + $0x398] sm:$0xff]
        %v840 = vld [vmem:[%s2 + $0x3a0] sm:$0xff]
        %v841 = vld [vmem:[%s2 + $0x3a8] sm:$0xff]
        %v842 = vld [vmem:[%s2 + $0x3b0] sm:$0xff]
        %v843 = vld [vmem:[%s2 + $0x3b8] sm:$0xff]
        %v844 = vld [vmem:[%s2 + $0x3c0] sm:$0xff]
        %v845 = vld [vmem:[%s2 + $0x3c8] sm:$0xff]
        %v846 = vld [vmem:[%s2 + $0x3d0] sm:$0xff]
        %v847 = vld [vmem:[%s2 + $0x3d8] sm:$0xff]
        %v848 = vld [vmem:[%s2 + $0x3e0] sm:$0xff]
        %v849 = vld [vmem:[%s2 + $0x3e8] sm:$0xff]
        %v850 = vld [vmem:[%s2 + $0x3f0] sm:$0xff]
        %v851 = vld [vmem:[%s2 + $0x3f8] sm:$0xff]
        %v852 = vld [vmem:[#allocation7] sm:$0x1]
        %v854 = vlaneseq
        %v855 = vshrl.u32 %v854, 7
        %v856 = vsub.s32 0, %v855
        %v857 = vrot.slane %v852, %v856
        %859 = vmatprep.subr.mxu0 0.0
        %860 = vmatpush1.msra.mxu0 %v724
        %861 = vmatprep.subr.mxu0 0.0
        %862 = vmatpush1.msra.mxu0 %v725
        %863 = vmatprep.subr.mxu0 0.0
        %864 = vmatpush1.msra.mxu0 %v726
        %865 = vmatprep.subr.mxu0 0.0
        %866 = vmatpush1.msra.mxu0 %v727
        %867 = vmatprep.subr.mxu0 0.0
        %868 = vmatpush1.msra.mxu0 %v728
        %869 = vmatprep.subr.mxu0 0.0
        %870 = vmatpush1.msra.mxu0 %v729
        %871 = vmatprep.subr.mxu0 0.0
        %872 = vmatpush1.msra.mxu0 %v730
        %873 = vmatprep.subr.mxu0 0.0
        %874 = vmatpush1.msra.mxu0 %v731
        %875 = vmatprep.subr.mxu0 0.0
        %876 = vmatpush1.msra.mxu0 %v732
        %877 = vmatprep.subr.mxu0 0.0
        %878 = vmatpush1.msra.mxu0 %v733
        %879 = vmatprep.subr.mxu0 0.0
        %880 = vmatpush1.msra.mxu0 %v734
        %881 = vmatprep.subr.mxu0 0.0
        %882 = vmatpush1.msra.mxu0 %v735
        %883 = vmatprep.subr.mxu0 0.0
        %884 = vmatpush1.msra.mxu0 %v736
        %885 = vmatprep.subr.mxu0 0.0
        %886 = vmatpush1.msra.mxu0 %v737
        %887 = vmatprep.subr.mxu0 0.0
        %888 = vmatpush1.msra.mxu0 %v738
        %889 = vmatprep.subr.mxu0 0.0
        %890 = vmatpush1.msra.mxu0 %v739
        %891 = vmatprep.subr.mxu0 0.0
        %892 = vmatpush1.msra.mxu0 %v740
        %893 = vmatprep.subr.mxu0 0.0
        %894 = vmatpush1.msra.mxu0 %v741
        %895 = vmatprep.subr.mxu0 0.0
        %896 = vmatpush1.msra.mxu0 %v742
        %897 = vmatprep.subr.mxu0 0.0
        %898 = vmatpush1.msra.mxu0 %v743
        %899 = vmatprep.subr.mxu0 0.0
        %900 = vmatpush1.msra.mxu0 %v744
        %901 = vmatprep.subr.mxu0 0.0
        %902 = vmatpush1.msra.mxu0 %v745
        %903 = vmatprep.subr.mxu0 0.0
        %904 = vmatpush1.msra.mxu0 %v746
        %905 = vmatprep.subr.mxu0 0.0
        %906 = vmatpush1.msra.mxu0 %v747
        %907 = vmatprep.subr.mxu0 0.0
        %908 = vmatpush1.msra.mxu0 %v748
        %909 = vmatprep.subr.mxu0 0.0
        %910 = vmatpush1.msra.mxu0 %v749
        %911 = vmatprep.subr.mxu0 0.0
        %912 = vmatpush1.msra.mxu0 %v750
        %913 = vmatprep.subr.mxu0 0.0
        %914 = vmatpush1.msra.mxu0 %v751
        %915 = vmatprep.subr.mxu0 0.0
        %916 = vmatpush1.msra.mxu0 %v752
        %917 = vmatprep.subr.mxu0 0.0
        %918 = vmatpush1.msra.mxu0 %v753
        %919 = vmatprep.subr.mxu0 0.0
        %920 = vmatpush1.msra.mxu0 %v754
        %921 = vmatprep.subr.mxu0 0.0
        %922 = vmatpush1.msra.mxu0 %v755
        %923 = vmatprep.mubr.f32.mxu0 %v325
        %924 = vmatmul.mubr.f32.gmra.mrb[0].mxu0 %v324
        %v925 = vpop.f32.mrb[0].mxu0
        %v926 = vadd.f32 %v857, %v925
        %v927 = vpop.f32.mrb[0].mxu0
        %928 = vmatprep.mubr.f32.mxu0 %v333
        %929 = vmatmul.mubr.f32.gmra.mrb[0].mxu0 %v332
        %v930 = vpop.f32.mrb[0].mxu0
        %v931 = vadd.f32 %v857, %v930
        %v932 = vpop.f32.mrb[0].mxu0
        %933 = vmatprep.mubr.f32.mxu0 %v341
        %934 = vmatmul.mubr.f32.gmra.mrb[0].mxu0 %v340
        %v935 = vpop.f32.mrb[0].mxu0
        %v936 = vadd.f32 %v857, %v935
        %v937 = vpop.f32.mrb[0].mxu0
        %938 = vmatprep.mubr.f32.mxu0 %v349
        %939 = vmatmul.mubr.f32.gmra.mrb[0].mxu0 %v348
        %v940 = vpop.f32.mrb[0].mxu0
        %v941 = vadd.f32 %v857, %v940
        %v942 = vpop.f32.mrb[0].mxu0
        %943 = vmatprep.mubr.f32.mxu0 %v357
        %944 = vmatmul.mubr.f32.gmra.mrb[0].mxu0 %v356
        %v945 = vpop.f32.mrb[0].mxu0
        %v946 = vadd.f32 %v857, %v945
        %v947 = vpop.f32.mrb[0].mxu0
        %948 = vmatprep.mubr.f32.mxu0 %v365
        %949 = vmatmul.mubr.f32.gmra.mrb[0].mxu0 %v364
        %v950 = vpop.f32.mrb[0].mxu0
        %v951 = vadd.f32 %v857, %v950
        %v952 = vpop.f32.mrb[0].mxu0
        %953 = vmatprep.mubr.f32.mxu0 %v373
        %954 = vmatmul.mubr.f32.gmra.mrb[0].mxu0 %v372
        %v955 = vpop.f32.mrb[0].mxu0
        %v956 = vadd.f32 %v857, %v955
        %v957 = vpop.f32.mrb[0].mxu0
        %958 = vmatprep.mubr.f32.mxu0 %v381
        %959 = vmatmul.mubr.f32.gmra.mrb[0].mxu0 %v380
        %v960 = vpop.f32.mrb[0].mxu0
        %v961 = vadd.f32 %v857, %v960
        %v962 = vpop.f32.mrb[0].mxu0
        %963 = vmatprep.mubr.f32.mxu0 %v389
        %964 = vmatmul.mubr.f32.gmra.mrb[0].mxu0 %v388
        %v965 = vpop.f32.mrb[0].mxu0
        %v966 = vadd.f32 %v857, %v965
        %v967 = vpop.f32.mrb[0].mxu0
        %968 = vmatprep.mubr.f32.mxu0 %v397
        %969 = vmatmul.mubr.f32.gmra.mrb[0].mxu0 %v396
        %v970 = vpop.f32.mrb[0].mxu0
        %v971 = vadd.f32 %v857, %v970
        %v972 = vpop.f32.mrb[0].mxu0
        %973 = vmatprep.mubr.f32.mxu0 %v405
        %974 = vmatmul.mubr.f32.gmra.mrb[0].mxu0 %v404
        %v975 = vpop.f32.mrb[0].mxu0
        %v976 = vadd.f32 %v857, %v975
        %v977 = vpop.f32.mrb[0].mxu0
        %978 = vmatprep.mubr.f32.mxu0 %v413
        %979 = vmatmul.mubr.f32.gmra.mrb[0].mxu0 %v412
        %v980 = vpop.f32.mrb[0].mxu0
        %v981 = vadd.f32 %v857, %v980
        %v982 = vpop.f32.mrb[0].mxu0
        %983 = vmatprep.mubr.f32.mxu0 %v421
        %984 = vmatmul.mubr.f32.gmra.mrb[0].mxu0 %v420
        %v985 = vpop.f32.mrb[0].mxu0
        %v986 = vadd.f32 %v857, %v985
        %v987 = vpop.f32.mrb[0].mxu0
        %988 = vmatprep.mubr.f32.mxu0 %v429
        %989 = vmatmul.mubr.f32.gmra.mrb[0].mxu0 %v428
        %v990 = vpop.f32.mrb[0].mxu0
        %v991 = vadd.f32 %v857, %v990
        %v992 = vpop.f32.mrb[0].mxu0
        %993 = vmatprep.mubr.f32.mxu0 %v437
        %994 = vmatmul.mubr.f32.gmra.mrb[0].mxu0 %v436
        %v995 = vpop.f32.mrb[0].mxu0
        %v996 = vadd.f32 %v857, %v995
        %v997 = vpop.f32.mrb[0].mxu0
        %998 = vmatprep.mubr.f32.mxu0 %v445
        %999 = vmatmul.mubr.f32.gmra.mrb[0].mxu0 %v444
        %v1000 = vpop.f32.mrb[0].mxu0
        %v1001 = vadd.f32 %v857, %v1000
        %v1002 = vpop.f32.mrb[0].mxu0
        %1003 = vmatprep.mubr.f32.mxu0 %v453
        %1004 = vmatmul.mubr.f32.gmra.mrb[0].mxu0 %v452
        %v1005 = vpop.f32.mrb[0].mxu0
        %v1006 = vadd.f32 %v857, %v1005
        %v1007 = vpop.f32.mrb[0].mxu0
        %1008 = vmatprep.mubr.f32.mxu0 %v461
        %1009 = vmatmul.mubr.f32.gmra.mrb[0].mxu0 %v460
        %v1010 = vpop.f32.mrb[0].mxu0
        %v1011 = vadd.f32 %v857, %v1010
        %v1012 = vpop.f32.mrb[0].mxu0
        %1013 = vmatprep.mubr.f32.mxu0 %v469
        %1014 = vmatmul.mubr.f32.gmra.mrb[0].mxu0 %v468
        %v1015 = vpop.f32.mrb[0].mxu0
        %v1016 = vadd.f32 %v857, %v1015
        %v1017 = vpop.f32.mrb[0].mxu0
        %1018 = vmatprep.mubr.f32.mxu0 %v477
        %1019 = vmatmul.mubr.f32.gmra.mrb[0].mxu0 %v476
        %v1020 = vpop.f32.mrb[0].mxu0
        %v1021 = vadd.f32 %v857, %v1020
        %v1022 = vpop.f32.mrb[0].mxu0
        %1023 = vmatprep.mubr.f32.mxu0 %v485
        %1024 = vmatmul.mubr.f32.gmra.mrb[0].mxu0 %v484
        %v1025 = vpop.f32.mrb[0].mxu0
        %v1026 = vadd.f32 %v857, %v1025
        %v1027 = vpop.f32.mrb[0].mxu0
        %1028 = vmatprep.mubr.f32.mxu0 %v493
        %1029 = vmatmul.mubr.f32.gmra.mrb[0].mxu0 %v492
        %v1030 = vpop.f32.mrb[0].mxu0
        %v1031 = vadd.f32 %v857, %v1030
        %v1032 = vpop.f32.mrb[0].mxu0
        %1033 = vmatprep.mubr.f32.mxu0 %v501
        %1034 = vmatmul.mubr.f32.gmra.mrb[0].mxu0 %v500
        %v1035 = vpop.f32.mrb[0].mxu0
        %v1036 = vadd.f32 %v857, %v1035
        %v1037 = vpop.f32.mrb[0].mxu0
        %1038 = vmatprep.mubr.f32.mxu0 %v509
        %1039 = vmatmul.mubr.f32.gmra.mrb[0].mxu0 %v508
        %v1040 = vpop.f32.mrb[0].mxu0
        %v1041 = vadd.f32 %v857, %v1040
        %v1042 = vpop.f32.mrb[0].mxu0
        %1043 = vmatprep.mubr.f32.mxu0 %v517
        %1044 = vmatmul.mubr.f32.gmra.mrb[0].mxu0 %v516
        %v1045 = vpop.f32.mrb[0].mxu0
        %v1046 = vadd.f32 %v857, %v1045
        %v1047 = vpop.f32.mrb[0].mxu0
        %1048 = vmatprep.mubr.f32.mxu0 %v525
        %1049 = vmatmul.mubr.f32.gmra.mrb[0].mxu0 %v524
        %v1050 = vpop.f32.mrb[0].mxu0
        %v1051 = vadd.f32 %v857, %v1050
        %v1052 = vpop.f32.mrb[0].mxu0
        %1053 = vmatprep.mubr.f32.mxu0 %v533
        %1054 = vmatmul.mubr.f32.gmra.mrb[0].mxu0 %v532
        %v1055 = vpop.f32.mrb[0].mxu0
        %v1056 = vadd.f32 %v857, %v1055
        %v1057 = vpop.f32.mrb[0].mxu0
        %1058 = vmatprep.mubr.f32.mxu0 %v541
        %1059 = vmatmul.mubr.f32.gmra.mrb[0].mxu0 %v540
        %v1060 = vpop.f32.mrb[0].mxu0
        %v1061 = vadd.f32 %v857, %v1060
        %v1062 = vpop.f32.mrb[0].mxu0
        %1063 = vmatprep.mubr.f32.mxu0 %v549
        %1064 = vmatmul.mubr.f32.gmra.mrb[0].mxu0 %v548
        %v1065 = vpop.f32.mrb[0].mxu0
        %v1066 = vadd.f32 %v857, %v1065
        %v1067 = vpop.f32.mrb[0].mxu0
        %1068 = vmatprep.mubr.f32.mxu0 %v557
        %1069 = vmatmul.mubr.f32.gmra.mrb[0].mxu0 %v556
        %v1070 = vpop.f32.mrb[0].mxu0
        %v1071 = vadd.f32 %v857, %v1070
        %v1072 = vpop.f32.mrb[0].mxu0
        %1073 = vmatprep.mubr.f32.mxu0 %v565
        %1074 = vmatmul.mubr.f32.gmra.mrb[0].mxu0 %v564
        %v1075 = vpop.f32.mrb[0].mxu0
        %v1076 = vadd.f32 %v857, %v1075
        %v1077 = vpop.f32.mrb[0].mxu0
        %1078 = vmatprep.mubr.f32.mxu0 %v573
        %1079 = vmatmul.mubr.f32.gmra.mrb[0].mxu0 %v572
        %v1080 = vpop.f32.mrb[0].mxu0
        %v1081 = vadd.f32 %v857, %v1080
        %v1082 = vpop.f32.mrb[0].mxu0
        %1083 = vmatprep.mubr.f32.mxu0 %v581
        %1084 = vmatmul.mubr.f32.gmra.mrb[0].mxu0 %v580
        %v1085 = vpop.f32.mrb[0].mxu0
        %v1086 = vadd.f32 %v857, %v1085
        %v1087 = vpop.f32.mrb[0].mxu0
        %1088 = vmatprep.mubr.f32.mxu0 %v589
        %1089 = vmatmul.mubr.f32.gmra.mrb[0].mxu0 %v588
        %v1090 = vpop.f32.mrb[0].mxu0
        %v1091 = vadd.f32 %v857, %v1090
        %v1092 = vpop.f32.mrb[0].mxu0
        %1093 = vmatprep.mubr.f32.mxu0 %v597
        %1094 = vmatmul.mubr.f32.gmra.mrb[0].mxu0 %v596
        %v1095 = vpop.f32.mrb[0].mxu0
        %v1096 = vadd.f32 %v857, %v1095
        %v1097 = vpop.f32.mrb[0].mxu0
        %1098 = vmatprep.mubr.f32.mxu0 %v605
        %1099 = vmatmul.mubr.f32.gmra.mrb[0].mxu0 %v604
        %v1100 = vpop.f32.mrb[0].mxu0
        %v1101 = vadd.f32 %v857, %v1100
        %v1102 = vpop.f32.mrb[0].mxu0
        %1103 = vmatprep.mubr.f32.mxu0 %v613
        %1104 = vmatmul.mubr.f32.gmra.mrb[0].mxu0 %v612
        %v1105 = vpop.f32.mrb[0].mxu0
        %v1106 = vadd.f32 %v857, %v1105
        %v1107 = vpop.f32.mrb[0].mxu0
        %1108 = vmatprep.mubr.f32.mxu0 %v621
        %1109 = vmatmul.mubr.f32.gmra.mrb[0].mxu0 %v620
        %v1110 = vpop.f32.mrb[0].mxu0
        %v1111 = vadd.f32 %v857, %v1110
        %v1112 = vpop.f32.mrb[0].mxu0
        %1113 = vmatprep.mubr.f32.mxu0 %v629
        %1114 = vmatmul.mubr.f32.gmra.mrb[0].mxu0 %v628
        %v1115 = vpop.f32.mrb[0].mxu0
        %v1116 = vadd.f32 %v857, %v1115
        %v1117 = vpop.f32.mrb[0].mxu0
        %1118 = vmatprep.mubr.f32.mxu0 %v637
        %1119 = vmatmul.mubr.f32.gmra.mrb[0].mxu0 %v636
        %v1120 = vpop.f32.mrb[0].mxu0
        %v1121 = vadd.f32 %v857, %v1120
        %v1122 = vpop.f32.mrb[0].mxu0
        %1123 = vmatprep.mubr.f32.mxu0 %v645
        %1124 = vmatmul.mubr.f32.gmra.mrb[0].mxu0 %v644
        %v1125 = vpop.f32.mrb[0].mxu0
        %v1126 = vadd.f32 %v857, %v1125
        %v1127 = vpop.f32.mrb[0].mxu0
        %1128 = vmatprep.mubr.f32.mxu0 %v653
        %1129 = vmatmul.mubr.f32.gmra.mrb[0].mxu0 %v652
        %v1130 = vpop.f32.mrb[0].mxu0
        %v1131 = vadd.f32 %v857, %v1130
        %v1132 = vpop.f32.mrb[0].mxu0
        %1133 = vmatprep.mubr.f32.mxu0 %v661
        %1134 = vmatmul.mubr.f32.gmra.mrb[0].mxu0 %v660
        %v1135 = vpop.f32.mrb[0].mxu0
        %v1136 = vadd.f32 %v857, %v1135
        %v1137 = vpop.f32.mrb[0].mxu0
        %1138 = vmatprep.mubr.f32.mxu0 %v669
        %1139 = vmatmul.mubr.f32.gmra.mrb[0].mxu0 %v668
        %v1140 = vpop.f32.mrb[0].mxu0
        %v1141 = vadd.f32 %v857, %v1140
        %v1142 = vpop.f32.mrb[0].mxu0
        %1143 = vmatprep.mubr.f32.mxu0 %v677
        %1144 = vmatmul.mubr.f32.gmra.mrb[0].mxu0 %v676
        %v1145 = vpop.f32.mrb[0].mxu0
        %v1146 = vadd.f32 %v857, %v1145
        %v1147 = vpop.f32.mrb[0].mxu0
        %1148 = vmatprep.mubr.f32.mxu0 %v685
        %1149 = vmatmul.mubr.f32.gmra.mrb[0].mxu0 %v684
        %v1150 = vpop.f32.mrb[0].mxu0
        %v1151 = vadd.f32 %v857, %v1150
        %v1152 = vpop.f32.mrb[0].mxu0
        %1153 = vmatprep.mubr.f32.mxu0 %v693
        %1154 = vmatmul.mubr.f32.gmra.mrb[0].mxu0 %v692
        %v1155 = vpop.f32.mrb[0].mxu0
        %v1156 = vadd.f32 %v857, %v1155
        %v1157 = vpop.f32.mrb[0].mxu0
        %1158 = vmatprep.mubr.f32.mxu0 %v701
        %1159 = vmatmul.mubr.f32.gmra.mrb[0].mxu0 %v700
        %v1160 = vpop.f32.mrb[0].mxu0
        %v1161 = vadd.f32 %v857, %v1160
        %v1162 = vpop.f32.mrb[0].mxu0
        %1163 = vmatprep.mubr.f32.mxu0 %v709
        %1164 = vmatmul.mubr.f32.gmra.mrb[0].mxu0 %v708
        %v1165 = vpop.f32.mrb[0].mxu0
        %v1166 = vadd.f32 %v857, %v1165
        %v1167 = vpop.f32.mrb[0].mxu0
        %1168 = vmatprep.mubr.f32.mxu0 %v717
        %1169 = vmatmul.mubr.f32.gmra.mrb[0].mxu0 %v716
        %v1170 = vpop.f32.mrb[0].mxu0
        %v1171 = vadd.f32 %v857, %v1170
        %v1172 = vpop.f32.mrb[0].mxu0
        %1173 = vdwg.mxu0
        %1174 = vmatprep.subr.mxu0 0.0
        %1175 = vmatpush1.msra.mxu0 %v756
        %1176 = vmatprep.subr.mxu0 0.0
        %1177 = vmatpush1.msra.mxu0 %v757
        %1178 = vmatprep.subr.mxu0 0.0
        %1179 = vmatpush1.msra.mxu0 %v758
        %1180 = vmatprep.subr.mxu0 0.0
        %1181 = vmatpush1.msra.mxu0 %v759
        %1182 = vmatprep.subr.mxu0 0.0
        %1183 = vmatpush1.msra.mxu0 %v760
        %1184 = vmatprep.subr.mxu0 0.0
        %1185 = vmatpush1.msra.mxu0 %v761
        %1186 = vmatprep.subr.mxu0 0.0
        %1187 = vmatpush1.msra.mxu0 %v762
        %1188 = vmatprep.subr.mxu0 0.0
        %1189 = vmatpush1.msra.mxu0 %v763
        %1190 = vmatprep.subr.mxu0 0.0
        %1191 = vmatpush1.msra.mxu0 %v764
        %1192 = vmatprep.subr.mxu0 0.0
        %1193 = vmatpush1.msra.mxu0 %v765
        %1194 = vmatprep.subr.mxu0 0.0
        %1195 = vmatpush1.msra.mxu0 %v766
        %1196 = vmatprep.subr.mxu0 0.0
        %1197 = vmatpush1.msra.mxu0 %v767
        %1198 = vmatprep.subr.mxu0 0.0
        %1199 = vmatpush1.msra.mxu0 %v768
        %1200 = vmatprep.subr.mxu0 0.0
        %1201 = vmatpush1.msra.mxu0 %v769
        %1202 = vmatprep.subr.mxu0 0.0
        %1203 = vmatpush1.msra.mxu0 %v770
        %1204 = vmatprep.subr.mxu0 0.0
        %1205 = vmatpush1.msra.mxu0 %v771
        %1206 = vmatprep.subr.mxu0 0.0
        %1207 = vmatpush1.msra.mxu0 %v772
        %1208 = vmatprep.subr.mxu0 0.0
        %1209 = vmatpush1.msra.mxu0 %v773
        %1210 = vmatprep.subr.mxu0 0.0
        %1211 = vmatpush1.msra.mxu0 %v774
        %1212 = vmatprep.subr.mxu0 0.0
        %1213 = vmatpush1.msra.mxu0 %v775
        %1214 = vmatprep.subr.mxu0 0.0
        %1215 = vmatpush1.msra.mxu0 %v776
        %1216 = vmatprep.subr.mxu0 0.0
        %1217 = vmatpush1.msra.mxu0 %v777
        %1218 = vmatprep.subr.mxu0 0.0
        %1219 = vmatpush1.msra.mxu0 %v778
        %1220 = vmatprep.subr.mxu0 0.0
        %1221 = vmatpush1.msra.mxu0 %v779
        %1222 = vmatprep.subr.mxu0 0.0
        %1223 = vmatpush1.msra.mxu0 %v780
        %1224 = vmatprep.subr.mxu0 0.0
        %1225 = vmatpush1.msra.mxu0 %v781
        %1226 = vmatprep.subr.mxu0 0.0
        %1227 = vmatpush1.msra.mxu0 %v782
        %1228 = vmatprep.subr.mxu0 0.0
        %1229 = vmatpush1.msra.mxu0 %v783
        %1230 = vmatprep.subr.mxu0 0.0
        %1231 = vmatpush1.msra.mxu0 %v784
        %1232 = vmatprep.subr.mxu0 0.0
        %1233 = vmatpush1.msra.mxu0 %v785
        %1234 = vmatprep.subr.mxu0 0.0
        %1235 = vmatpush1.msra.mxu0 %v786
        %1236 = vmatprep.subr.mxu0 0.0
        %1237 = vmatpush1.msra.mxu0 %v787
        %1238 = vmatprep.mubr.f32.mxu0 %v327
        %1239 = vmatmul.mubr.f32.gmra.mrb[0].mxu0 %v326
        %v1240 = vpop.f32.mrb[0].mxu0
        %v1241 = vadd.f32 %v926, %v1240
        %v1242 = vpop.f32.mrb[0].mxu0
        %1243 = vmatprep.mubr.f32.mxu0 %v335
        %1244 = vmatmul.mubr.f32.gmra.mrb[0].mxu0 %v334
        %v1245 = vpop.f32.mrb[0].mxu0
        %v1246 = vadd.f32 %v931, %v1245
        %v1247 = vpop.f32.mrb[0].mxu0
        %1248 = vmatprep.mubr.f32.mxu0 %v343
        %1249 = vmatmul.mubr.f32.gmra.mrb[0].mxu0 %v342
        %v1250 = vpop.f32.mrb[0].mxu0
        %v1251 = vadd.f32 %v936, %v1250
        %v1252 = vpop.f32.mrb[0].mxu0
        %1253 = vmatprep.mubr.f32.mxu0 %v351
        %1254 = vmatmul.mubr.f32.gmra.mrb[0].mxu0 %v350
        %v1255 = vpop.f32.mrb[0].mxu0
        %v1256 = vadd.f32 %v941, %v1255
        %v1257 = vpop.f32.mrb[0].mxu0
        %1258 = vmatprep.mubr.f32.mxu0 %v359
        %1259 = vmatmul.mubr.f32.gmra.mrb[0].mxu0 %v358
        %v1260 = vpop.f32.mrb[0].mxu0
        %v1261 = vadd.f32 %v946, %v1260
        %v1262 = vpop.f32.mrb[0].mxu0
        %1263 = vmatprep.mubr.f32.mxu0 %v367
        %1264 = vmatmul.mubr.f32.gmra.mrb[0].mxu0 %v366
        %v1265 = vpop.f32.mrb[0].mxu0
        %v1266 = vadd.f32 %v951, %v1265
        %v1267 = vpop.f32.mrb[0].mxu0
        %1268 = vmatprep.mubr.f32.mxu0 %v375
        %1269 = vmatmul.mubr.f32.gmra.mrb[0].mxu0 %v374
        %v1270 = vpop.f32.mrb[0].mxu0
        %v1271 = vadd.f32 %v956, %v1270
        %v1272 = vpop.f32.mrb[0].mxu0
        %1273 = vmatprep.mubr.f32.mxu0 %v383
        %1274 = vmatmul.mubr.f32.gmra.mrb[0].mxu0 %v382
        %v1275 = vpop.f32.mrb[0].mxu0
        %v1276 = vadd.f32 %v961, %v1275
        %v1277 = vpop.f32.mrb[0].mxu0
        %1278 = vmatprep.mubr.f32.mxu0 %v391
        %1279 = vmatmul.mubr.f32.gmra.mrb[0].mxu0 %v390
        %v1280 = vpop.f32.mrb[0].mxu0
        %v1281 = vadd.f32 %v966, %v1280
        %v1282 = vpop.f32.mrb[0].mxu0
        %1283 = vmatprep.mubr.f32.mxu0 %v399
        %1284 = vmatmul.mubr.f32.gmra.mrb[0].mxu0 %v398
        %v1285 = vpop.f32.mrb[0].mxu0
        %v1286 = vadd.f32 %v971, %v1285
        %v1287 = vpop.f32.mrb[0].mxu0
        %1288 = vmatprep.mubr.f32.mxu0 %v407
        %1289 = vmatmul.mubr.f32.gmra.mrb[0].mxu0 %v406
        %v1290 = vpop.f32.mrb[0].mxu0
        %v1291 = vadd.f32 %v976, %v1290
        %v1292 = vpop.f32.mrb[0].mxu0
        %1293 = vmatprep.mubr.f32.mxu0 %v415
        %1294 = vmatmul.mubr.f32.gmra.mrb[0].mxu0 %v414
        %v1295 = vpop.f32.mrb[0].mxu0
        %v1296 = vadd.f32 %v981, %v1295
        %v1297 = vpop.f32.mrb[0].mxu0
        %1298 = vmatprep.mubr.f32.mxu0 %v423
        %1299 = vmatmul.mubr.f32.gmra.mrb[0].mxu0 %v422
        %v1300 = vpop.f32.mrb[0].mxu0
        %v1301 = vadd.f32 %v986, %v1300
        %v1302 = vpop.f32.mrb[0].mxu0
        %1303 = vmatprep.mubr.f32.mxu0 %v431
        %1304 = vmatmul.mubr.f32.gmra.mrb[0].mxu0 %v430
        %v1305 = vpop.f32.mrb[0].mxu0
        %v1306 = vadd.f32 %v991, %v1305
        %v1307 = vpop.f32.mrb[0].mxu0
        %1308 = vmatprep.mubr.f32.mxu0 %v439
        %1309 = vmatmul.mubr.f32.gmra.mrb[0].mxu0 %v438
        %v1310 = vpop.f32.mrb[0].mxu0
        %v1311 = vadd.f32 %v996, %v1310
        %v1312 = vpop.f32.mrb[0].mxu0
        %1313 = vmatprep.mubr.f32.mxu0 %v447
        %1314 = vmatmul.mubr.f32.gmra.mrb[0].mxu0 %v446
        %v1315 = vpop.f32.mrb[0].mxu0
        %v1316 = vadd.f32 %v1001, %v1315
        %v1317 = vpop.f32.mrb[0].mxu0
        %1318 = vmatprep.mubr.f32.mxu0 %v455
        %1319 = vmatmul.mubr.f32.gmra.mrb[0].mxu0 %v454
        %v1320 = vpop.f32.mrb[0].mxu0
        %v1321 = vadd.f32 %v1006, %v1320
        %v1322 = vpop.f32.mrb[0].mxu0
        %1323 = vmatprep.mubr.f32.mxu0 %v463
        %1324 = vmatmul.mubr.f32.gmra.mrb[0].mxu0 %v462
        %v1325 = vpop.f32.mrb[0].mxu0
        %v1326 = vadd.f32 %v1011, %v1325
        %v1327 = vpop.f32.mrb[0].mxu0
        %1328 = vmatprep.mubr.f32.mxu0 %v471
        %1329 = vmatmul.mubr.f32.gmra.mrb[0].mxu0 %v470
        %v1330 = vpop.f32.mrb[0].mxu0
        %v1331 = vadd.f32 %v1016, %v1330
        %v1332 = vpop.f32.mrb[0].mxu0
        %1333 = vmatprep.mubr.f32.mxu0 %v479
        %1334 = vmatmul.mubr.f32.gmra.mrb[0].mxu0 %v478
        %v1335 = vpop.f32.mrb[0].mxu0
        %v1336 = vadd.f32 %v1021, %v1335
        %v1337 = vpop.f32.mrb[0].mxu0
        %1338 = vmatprep.mubr.f32.mxu0 %v487
        %1339 = vmatmul.mubr.f32.gmra.mrb[0].mxu0 %v486
        %v1340 = vpop.f32.mrb[0].mxu0
        %v1341 = vadd.f32 %v1026, %v1340
        %v1342 = vpop.f32.mrb[0].mxu0
        %1343 = vmatprep.mubr.f32.mxu0 %v495
        %1344 = vmatmul.mubr.f32.gmra.mrb[0].mxu0 %v494
        %v1345 = vpop.f32.mrb[0].mxu0
        %v1346 = vadd.f32 %v1031, %v1345
        %v1347 = vpop.f32.mrb[0].mxu0
        %1348 = vmatprep.mubr.f32.mxu0 %v503
        %1349 = vmatmul.mubr.f32.gmra.mrb[0].mxu0 %v502
        %v1350 = vpop.f32.mrb[0].mxu0
        %v1351 = vadd.f32 %v1036, %v1350
        %v1352 = vpop.f32.mrb[0].mxu0
        %1353 = vmatprep.mubr.f32.mxu0 %v511
        %1354 = vmatmul.mubr.f32.gmra.mrb[0].mxu0 %v510
        %v1355 = vpop.f32.mrb[0].mxu0
        %v1356 = vadd.f32 %v1041, %v1355
        %v1357 = vpop.f32.mrb[0].mxu0
        %1358 = vmatprep.mubr.f32.mxu0 %v519
        %1359 = vmatmul.mubr.f32.gmra.mrb[0].mxu0 %v518
        %v1360 = vpop.f32.mrb[0].mxu0
        %v1361 = vadd.f32 %v1046, %v1360
        %v1362 = vpop.f32.mrb[0].mxu0
        %1363 = vmatprep.mubr.f32.mxu0 %v527
        %1364 = vmatmul.mubr.f32.gmra.mrb[0].mxu0 %v526
        %v1365 = vpop.f32.mrb[0].mxu0
        %v1366 = vadd.f32 %v1051, %v1365
        %v1367 = vpop.f32.mrb[0].mxu0
        %1368 = vmatprep.mubr.f32.mxu0 %v535
        %1369 = vmatmul.mubr.f32.gmra.mrb[0].mxu0 %v534
        %v1370 = vpop.f32.mrb[0].mxu0
        %v1371 = vadd.f32 %v1056, %v1370
        %v1372 = vpop.f32.mrb[0].mxu0
        %1373 = vmatprep.mubr.f32.mxu0 %v543
        %1374 = vmatmul.mubr.f32.gmra.mrb[0].mxu0 %v542
        %v1375 = vpop.f32.mrb[0].mxu0
        %v1376 = vadd.f32 %v1061, %v1375
        %v1377 = vpop.f32.mrb[0].mxu0
        %1378 = vmatprep.mubr.f32.mxu0 %v551
        %1379 = vmatmul.mubr.f32.gmra.mrb[0].mxu0 %v550
        %v1380 = vpop.f32.mrb[0].mxu0
        %v1381 = vadd.f32 %v1066, %v1380
        %v1382 = vpop.f32.mrb[0].mxu0
        %1383 = vmatprep.mubr.f32.mxu0 %v559
        %1384 = vmatmul.mubr.f32.gmra.mrb[0].mxu0 %v558
        %v1385 = vpop.f32.mrb[0].mxu0
        %v1386 = vadd.f32 %v1071, %v1385
        %v1387 = vpop.f32.mrb[0].mxu0
        %1388 = vmatprep.mubr.f32.mxu0 %v567
        %1389 = vmatmul.mubr.f32.gmra.mrb[0].mxu0 %v566
        %v1390 = vpop.f32.mrb[0].mxu0
        %v1391 = vadd.f32 %v1076, %v1390
        %v1392 = vpop.f32.mrb[0].mxu0
        %1393 = vmatprep.mubr.f32.mxu0 %v575
        %1394 = vmatmul.mubr.f32.gmra.mrb[0].mxu0 %v574
        %v1395 = vpop.f32.mrb[0].mxu0
        %v1396 = vadd.f32 %v1081, %v1395
        %v1397 = vpop.f32.mrb[0].mxu0
        %1398 = vmatprep.mubr.f32.mxu0 %v583
        %1399 = vmatmul.mubr.f32.gmra.mrb[0].mxu0 %v582
        %v1400 = vpop.f32.mrb[0].mxu0
        %v1401 = vadd.f32 %v1086, %v1400
        %v1402 = vpop.f32.mrb[0].mxu0
        %1403 = vmatprep.mubr.f32.mxu0 %v591
        %1404 = vmatmul.mubr.f32.gmra.mrb[0].mxu0 %v590
        %v1405 = vpop.f32.mrb[0].mxu0
        %v1406 = vadd.f32 %v1091, %v1405
        %v1407 = vpop.f32.mrb[0].mxu0
        %1408 = vmatprep.mubr.f32.mxu0 %v599
        %1409 = vmatmul.mubr.f32.gmra.mrb[0].mxu0 %v598
        %v1410 = vpop.f32.mrb[0].mxu0
        %v1411 = vadd.f32 %v1096, %v1410
        %v1412 = vpop.f32.mrb[0].mxu0
        %1413 = vmatprep.mubr.f32.mxu0 %v607
        %1414 = vmatmul.mubr.f32.gmra.mrb[0].mxu0 %v606
        %v1415 = vpop.f32.mrb[0].mxu0
        %v1416 = vadd.f32 %v1101, %v1415
        %v1417 = vpop.f32.mrb[0].mxu0
        %1418 = vmatprep.mubr.f32.mxu0 %v615
        %1419 = vmatmul.mubr.f32.gmra.mrb[0].mxu0 %v614
        %v1420 = vpop.f32.mrb[0].mxu0
        %v1421 = vadd.f32 %v1106, %v1420
        %v1422 = vpop.f32.mrb[0].mxu0
        %1423 = vmatprep.mubr.f32.mxu0 %v623
        %1424 = vmatmul.mubr.f32.gmra.mrb[0].mxu0 %v622
        %v1425 = vpop.f32.mrb[0].mxu0
        %v1426 = vadd.f32 %v1111, %v1425
        %v1427 = vpop.f32.mrb[0].mxu0
        %1428 = vmatprep.mubr.f32.mxu0 %v631
        %1429 = vmatmul.mubr.f32.gmra.mrb[0].mxu0 %v630
        %v1430 = vpop.f32.mrb[0].mxu0
        %v1431 = vadd.f32 %v1116, %v1430
        %v1432 = vpop.f32.mrb[0].mxu0
        %1433 = vmatprep.mubr.f32.mxu0 %v639
        %1434 = vmatmul.mubr.f32.gmra.mrb[0].mxu0 %v638
        %v1435 = vpop.f32.mrb[0].mxu0
        %v1436 = vadd.f32 %v1121, %v1435
        %v1437 = vpop.f32.mrb[0].mxu0
        %1438 = vmatprep.mubr.f32.mxu0 %v647
        %1439 = vmatmul.mubr.f32.gmra.mrb[0].mxu0 %v646
        %v1440 = vpop.f32.mrb[0].mxu0
        %v1441 = vadd.f32 %v1126, %v1440
        %v1442 = vpop.f32.mrb[0].mxu0
        %1443 = vmatprep.mubr.f32.mxu0 %v655
        %1444 = vmatmul.mubr.f32.gmra.mrb[0].mxu0 %v654
        %v1445 = vpop.f32.mrb[0].mxu0
        %v1446 = vadd.f32 %v1131, %v1445
        %v1447 = vpop.f32.mrb[0].mxu0
        %1448 = vmatprep.mubr.f32.mxu0 %v663
        %1449 = vmatmul.mubr.f32.gmra.mrb[0].mxu0 %v662
        %v1450 = vpop.f32.mrb[0].mxu0
        %v1451 = vadd.f32 %v1136, %v1450
        %v1452 = vpop.f32.mrb[0].mxu0
        %1453 = vmatprep.mubr.f32.mxu0 %v671
        %1454 = vmatmul.mubr.f32.gmra.mrb[0].mxu0 %v670
        %v1455 = vpop.f32.mrb[0].mxu0
        %v1456 = vadd.f32 %v1141, %v1455
        %v1457 = vpop.f32.mrb[0].mxu0
        %1458 = vmatprep.mubr.f32.mxu0 %v679
        %1459 = vmatmul.mubr.f32.gmra.mrb[0].mxu0 %v678
        %v1460 = vpop.f32.mrb[0].mxu0
        %v1461 = vadd.f32 %v1146, %v1460
        %v1462 = vpop.f32.mrb[0].mxu0
        %1463 = vmatprep.mubr.f32.mxu0 %v687
        %1464 = vmatmul.mubr.f32.gmra.mrb[0].mxu0 %v686
        %v1465 = vpop.f32.mrb[0].mxu0
        %v1466 = vadd.f32 %v1151, %v1465
        %v1467 = vpop.f32.mrb[0].mxu0
        %1468 = vmatprep.mubr.f32.mxu0 %v695
        %1469 = vmatmul.mubr.f32.gmra.mrb[0].mxu0 %v694
        %v1470 = vpop.f32.mrb[0].mxu0
        %v1471 = vadd.f32 %v1156, %v1470
        %v1472 = vpop.f32.mrb[0].mxu0
        %1473 = vmatprep.mubr.f32.mxu0 %v703
        %1474 = vmatmul.mubr.f32.gmra.mrb[0].mxu0 %v702
        %v1475 = vpop.f32.mrb[0].mxu0
        %v1476 = vadd.f32 %v1161, %v1475
        %v1477 = vpop.f32.mrb[0].mxu0
        %1478 = vmatprep.mubr.f32.mxu0 %v711
        %1479 = vmatmul.mubr.f32.gmra.mrb[0].mxu0 %v710
        %v1480 = vpop.f32.mrb[0].mxu0
        %v1481 = vadd.f32 %v1166, %v1480
        %v1482 = vpop.f32.mrb[0].mxu0
        %1483 = vmatprep.mubr.f32.mxu0 %v719
        %1484 = vmatmul.mubr.f32.gmra.mrb[0].mxu0 %v718
        %v1485 = vpop.f32.mrb[0].mxu0
        %v1486 = vadd.f32 %v1171, %v1485
        %v1487 = vpop.f32.mrb[0].mxu0
        %1488 = vdwg.mxu0
        %1489 = vmatprep.subr.mxu0 0.0
        %1490 = vmatpush1.msra.mxu0 %v788
        %1491 = vmatprep.subr.mxu0 0.0
        %1492 = vmatpush1.msra.mxu0 %v789
        %1493 = vmatprep.subr.mxu0 0.0
        %1494 = vmatpush1.msra.mxu0 %v790
        %1495 = vmatprep.subr.mxu0 0.0
        %1496 = vmatpush1.msra.mxu0 %v791
        %1497 = vmatprep.subr.mxu0 0.0
        %1498 = vmatpush1.msra.mxu0 %v792
        %1499 = vmatprep.subr.mxu0 0.0
        %1500 = vmatpush1.msra.mxu0 %v793
        %1501 = vmatprep.subr.mxu0 0.0
        %1502 = vmatpush1.msra.mxu0 %v794
        %1503 = vmatprep.subr.mxu0 0.0
        %1504 = vmatpush1.msra.mxu0 %v795
        %1505 = vmatprep.subr.mxu0 0.0
        %1506 = vmatpush1.msra.mxu0 %v796
        %1507 = vmatprep.subr.mxu0 0.0
        %1508 = vmatpush1.msra.mxu0 %v797
        %1509 = vmatprep.subr.mxu0 0.0
        %1510 = vmatpush1.msra.mxu0 %v798
        %1511 = vmatprep.subr.mxu0 0.0
        %1512 = vmatpush1.msra.mxu0 %v799
        %1513 = vmatprep.subr.mxu0 0.0
        %1514 = vmatpush1.msra.mxu0 %v800
        %1515 = vmatprep.subr.mxu0 0.0
        %1516 = vmatpush1.msra.mxu0 %v801
        %1517 = vmatprep.subr.mxu0 0.0
        %1518 = vmatpush1.msra.mxu0 %v802
        %1519 = vmatprep.subr.mxu0 0.0
        %1520 = vmatpush1.msra.mxu0 %v803
        %1521 = vmatprep.subr.mxu0 0.0
        %1522 = vmatpush1.msra.mxu0 %v804
        %1523 = vmatprep.subr.mxu0 0.0
        %1524 = vmatpush1.msra.mxu0 %v805
        %1525 = vmatprep.subr.mxu0 0.0
        %1526 = vmatpush1.msra.mxu0 %v806
        %1527 = vmatprep.subr.mxu0 0.0
        %1528 = vmatpush1.msra.mxu0 %v807
        %1529 = vmatprep.subr.mxu0 0.0
        %1530 = vmatpush1.msra.mxu0 %v808
        %1531 = vmatprep.subr.mxu0 0.0
        %1532 = vmatpush1.msra.mxu0 %v809
        %1533 = vmatprep.subr.mxu0 0.0
        %1534 = vmatpush1.msra.mxu0 %v810
        %1535 = vmatprep.subr.mxu0 0.0
        %1536 = vmatpush1.msra.mxu0 %v811
        %1537 = vmatprep.subr.mxu0 0.0
        %1538 = vmatpush1.msra.mxu0 %v812
        %1539 = vmatprep.subr.mxu0 0.0
        %1540 = vmatpush1.msra.mxu0 %v813
        %1541 = vmatprep.subr.mxu0 0.0
        %1542 = vmatpush1.msra.mxu0 %v814
        %1543 = vmatprep.subr.mxu0 0.0
        %1544 = vmatpush1.msra.mxu0 %v815
        %1545 = vmatprep.subr.mxu0 0.0
        %1546 = vmatpush1.msra.mxu0 %v816
        %1547 = vmatprep.subr.mxu0 0.0
        %1548 = vmatpush1.msra.mxu0 %v817
        %1549 = vmatprep.subr.mxu0 0.0
        %1550 = vmatpush1.msra.mxu0 %v818
        %1551 = vmatprep.subr.mxu0 0.0
        %1552 = vmatpush1.msra.mxu0 %v819
        %1553 = vmatprep.mubr.f32.mxu0 %v329
        %1554 = vmatmul.mubr.f32.gmra.mrb[0].mxu0 %v328
        %v1555 = vpop.f32.mrb[0].mxu0
        %v1556 = vadd.f32 %v1241, %v1555
        %v1557 = vpop.f32.mrb[0].mxu0
        %1558 = vmatprep.mubr.f32.mxu0 %v337
        %1559 = vmatmul.mubr.f32.gmra.mrb[0].mxu0 %v336
        %v1560 = vpop.f32.mrb[0].mxu0
        %v1561 = vadd.f32 %v1246, %v1560
        %v1562 = vpop.f32.mrb[0].mxu0
        %1563 = vmatprep.mubr.f32.mxu0 %v345
        %1564 = vmatmul.mubr.f32.gmra.mrb[0].mxu0 %v344
        %v1565 = vpop.f32.mrb[0].mxu0
        %v1566 = vadd.f32 %v1251, %v1565
        %v1567 = vpop.f32.mrb[0].mxu0
        %1568 = vmatprep.mubr.f32.mxu0 %v353
        %1569 = vmatmul.mubr.f32.gmra.mrb[0].mxu0 %v352
        %v1570 = vpop.f32.mrb[0].mxu0
        %v1571 = vadd.f32 %v1256, %v1570
        %v1572 = vpop.f32.mrb[0].mxu0
        %1573 = vmatprep.mubr.f32.mxu0 %v361
        %1574 = vmatmul.mubr.f32.gmra.mrb[0].mxu0 %v360
        %v1575 = vpop.f32.mrb[0].mxu0
        %v1576 = vadd.f32 %v1261, %v1575
        %v1577 = vpop.f32.mrb[0].mxu0
        %1578 = vmatprep.mubr.f32.mxu0 %v369
        %1579 = vmatmul.mubr.f32.gmra.mrb[0].mxu0 %v368
        %v1580 = vpop.f32.mrb[0].mxu0
        %v1581 = vadd.f32 %v1266, %v1580
        %v1582 = vpop.f32.mrb[0].mxu0
        %1583 = vmatprep.mubr.f32.mxu0 %v377
        %1584 = vmatmul.mubr.f32.gmra.mrb[0].mxu0 %v376
        %v1585 = vpop.f32.mrb[0].mxu0
        %v1586 = vadd.f32 %v1271, %v1585
        %v1587 = vpop.f32.mrb[0].mxu0
        %1588 = vmatprep.mubr.f32.mxu0 %v385
        %1589 = vmatmul.mubr.f32.gmra.mrb[0].mxu0 %v384
        %v1590 = vpop.f32.mrb[0].mxu0
        %v1591 = vadd.f32 %v1276, %v1590
        %v1592 = vpop.f32.mrb[0].mxu0
        %1593 = vmatprep.mubr.f32.mxu0 %v393
        %1594 = vmatmul.mubr.f32.gmra.mrb[0].mxu0 %v392
        %v1595 = vpop.f32.mrb[0].mxu0
        %v1596 = vadd.f32 %v1281, %v1595
        %v1597 = vpop.f32.mrb[0].mxu0
        %1598 = vmatprep.mubr.f32.mxu0 %v401
        %1599 = vmatmul.mubr.f32.gmra.mrb[0].mxu0 %v400
        %v1600 = vpop.f32.mrb[0].mxu0
        %v1601 = vadd.f32 %v1286, %v1600
        %v1602 = vpop.f32.mrb[0].mxu0
        %1603 = vmatprep.mubr.f32.mxu0 %v409
        %1604 = vmatmul.mubr.f32.gmra.mrb[0].mxu0 %v408
        %v1605 = vpop.f32.mrb[0].mxu0
        %v1606 = vadd.f32 %v1291, %v1605
        %v1607 = vpop.f32.mrb[0].mxu0
        %1608 = vmatprep.mubr.f32.mxu0 %v417
        %1609 = vmatmul.mubr.f32.gmra.mrb[0].mxu0 %v416
        %v1610 = vpop.f32.mrb[0].mxu0
        %v1611 = vadd.f32 %v1296, %v1610
        %v1612 = vpop.f32.mrb[0].mxu0
        %1613 = vmatprep.mubr.f32.mxu0 %v425
        %1614 = vmatmul.mubr.f32.gmra.mrb[0].mxu0 %v424
        %v1615 = vpop.f32.mrb[0].mxu0
        %v1616 = vadd.f32 %v1301, %v1615
        %v1617 = vpop.f32.mrb[0].mxu0
        %1618 = vmatprep.mubr.f32.mxu0 %v433
        %1619 = vmatmul.mubr.f32.gmra.mrb[0].mxu0 %v432
        %v1620 = vpop.f32.mrb[0].mxu0
        %v1621 = vadd.f32 %v1306, %v1620
        %v1622 = vpop.f32.mrb[0].mxu0
        %1623 = vmatprep.mubr.f32.mxu0 %v441
        %1624 = vmatmul.mubr.f32.gmra.mrb[0].mxu0 %v440
        %v1625 = vpop.f32.mrb[0].mxu0
        %v1626 = vadd.f32 %v1311, %v1625
        %v1627 = vpop.f32.mrb[0].mxu0
        %1628 = vmatprep.mubr.f32.mxu0 %v449
        %1629 = vmatmul.mubr.f32.gmra.mrb[0].mxu0 %v448
        %v1630 = vpop.f32.mrb[0].mxu0
        %v1631 = vadd.f32 %v1316, %v1630
        %v1632 = vpop.f32.mrb[0].mxu0
        %1633 = vmatprep.mubr.f32.mxu0 %v457
        %1634 = vmatmul.mubr.f32.gmra.mrb[0].mxu0 %v456
        %v1635 = vpop.f32.mrb[0].mxu0
        %v1636 = vadd.f32 %v1321, %v1635
        %v1637 = vpop.f32.mrb[0].mxu0
        %1638 = vmatprep.mubr.f32.mxu0 %v465
        %1639 = vmatmul.mubr.f32.gmra.mrb[0].mxu0 %v464
        %v1640 = vpop.f32.mrb[0].mxu0
        %v1641 = vadd.f32 %v1326, %v1640
        %v1642 = vpop.f32.mrb[0].mxu0
        %1643 = vmatprep.mubr.f32.mxu0 %v473
        %1644 = vmatmul.mubr.f32.gmra.mrb[0].mxu0 %v472
        %v1645 = vpop.f32.mrb[0].mxu0
        %v1646 = vadd.f32 %v1331, %v1645
        %v1647 = vpop.f32.mrb[0].mxu0
        %1648 = vmatprep.mubr.f32.mxu0 %v481
        %1649 = vmatmul.mubr.f32.gmra.mrb[0].mxu0 %v480
        %v1650 = vpop.f32.mrb[0].mxu0
        %v1651 = vadd.f32 %v1336, %v1650
        %v1652 = vpop.f32.mrb[0].mxu0
        %1653 = vmatprep.mubr.f32.mxu0 %v489
        %1654 = vmatmul.mubr.f32.gmra.mrb[0].mxu0 %v488
        %v1655 = vpop.f32.mrb[0].mxu0
        %v1656 = vadd.f32 %v1341, %v1655
        %v1657 = vpop.f32.mrb[0].mxu0
        %1658 = vmatprep.mubr.f32.mxu0 %v497
        %1659 = vmatmul.mubr.f32.gmra.mrb[0].mxu0 %v496
        %v1660 = vpop.f32.mrb[0].mxu0
        %v1661 = vadd.f32 %v1346, %v1660
        %v1662 = vpop.f32.mrb[0].mxu0
        %1663 = vmatprep.mubr.f32.mxu0 %v505
        %1664 = vmatmul.mubr.f32.gmra.mrb[0].mxu0 %v504
        %v1665 = vpop.f32.mrb[0].mxu0
        %v1666 = vadd.f32 %v1351, %v1665
        %v1667 = vpop.f32.mrb[0].mxu0
        %1668 = vmatprep.mubr.f32.mxu0 %v513
        %1669 = vmatmul.mubr.f32.gmra.mrb[0].mxu0 %v512
        %v1670 = vpop.f32.mrb[0].mxu0
        %v1671 = vadd.f32 %v1356, %v1670
        %v1672 = vpop.f32.mrb[0].mxu0
        %1673 = vmatprep.mubr.f32.mxu0 %v521
        %1674 = vmatmul.mubr.f32.gmra.mrb[0].mxu0 %v520
        %v1675 = vpop.f32.mrb[0].mxu0
        %v1676 = vadd.f32 %v1361, %v1675
        %v1677 = vpop.f32.mrb[0].mxu0
        %1678 = vmatprep.mubr.f32.mxu0 %v529
        %1679 = vmatmul.mubr.f32.gmra.mrb[0].mxu0 %v528
        %v1680 = vpop.f32.mrb[0].mxu0
        %v1681 = vadd.f32 %v1366, %v1680
        %v1682 = vpop.f32.mrb[0].mxu0
        %1683 = vmatprep.mubr.f32.mxu0 %v537
        %1684 = vmatmul.mubr.f32.gmra.mrb[0].mxu0 %v536
        %v1685 = vpop.f32.mrb[0].mxu0
        %v1686 = vadd.f32 %v1371, %v1685
        %v1687 = vpop.f32.mrb[0].mxu0
        %1688 = vmatprep.mubr.f32.mxu0 %v545
        %1689 = vmatmul.mubr.f32.gmra.mrb[0].mxu0 %v544
        %v1690 = vpop.f32.mrb[0].mxu0
        %v1691 = vadd.f32 %v1376, %v1690
        %v1692 = vpop.f32.mrb[0].mxu0
        %1693 = vmatprep.mubr.f32.mxu0 %v553
        %1694 = vmatmul.mubr.f32.gmra.mrb[0].mxu0 %v552
        %v1695 = vpop.f32.mrb[0].mxu0
        %v1696 = vadd.f32 %v1381, %v1695
        %v1697 = vpop.f32.mrb[0].mxu0
        %1698 = vmatprep.mubr.f32.mxu0 %v561
        %1699 = vmatmul.mubr.f32.gmra.mrb[0].mxu0 %v560
        %v1700 = vpop.f32.mrb[0].mxu0
        %v1701 = vadd.f32 %v1386, %v1700
        %v1702 = vpop.f32.mrb[0].mxu0
        %1703 = vmatprep.mubr.f32.mxu0 %v569
        %1704 = vmatmul.mubr.f32.gmra.mrb[0].mxu0 %v568
        %v1705 = vpop.f32.mrb[0].mxu0
        %v1706 = vadd.f32 %v1391, %v1705
        %v1707 = vpop.f32.mrb[0].mxu0
        %1708 = vmatprep.mubr.f32.mxu0 %v577
        %1709 = vmatmul.mubr.f32.gmra.mrb[0].mxu0 %v576
        %v1710 = vpop.f32.mrb[0].mxu0
        %v1711 = vadd.f32 %v1396, %v1710
        %v1712 = vpop.f32.mrb[0].mxu0
        %1713 = vmatprep.mubr.f32.mxu0 %v585
        %1714 = vmatmul.mubr.f32.gmra.mrb[0].mxu0 %v584
        %v1715 = vpop.f32.mrb[0].mxu0
        %v1716 = vadd.f32 %v1401, %v1715
        %v1717 = vpop.f32.mrb[0].mxu0
        %1718 = vmatprep.mubr.f32.mxu0 %v593
        %1719 = vmatmul.mubr.f32.gmra.mrb[0].mxu0 %v592
        %v1720 = vpop.f32.mrb[0].mxu0
        %v1721 = vadd.f32 %v1406, %v1720
        %v1722 = vpop.f32.mrb[0].mxu0
        %1723 = vmatprep.mubr.f32.mxu0 %v601
        %1724 = vmatmul.mubr.f32.gmra.mrb[0].mxu0 %v600
        %v1725 = vpop.f32.mrb[0].mxu0
        %v1726 = vadd.f32 %v1411, %v1725
        %v1727 = vpop.f32.mrb[0].mxu0
        %1728 = vmatprep.mubr.f32.mxu0 %v609
        %1729 = vmatmul.mubr.f32.gmra.mrb[0].mxu0 %v608
        %v1730 = vpop.f32.mrb[0].mxu0
        %v1731 = vadd.f32 %v1416, %v1730
        %v1732 = vpop.f32.mrb[0].mxu0
        %1733 = vmatprep.mubr.f32.mxu0 %v617
        %1734 = vmatmul.mubr.f32.gmra.mrb[0].mxu0 %v616
        %v1735 = vpop.f32.mrb[0].mxu0
        %v1736 = vadd.f32 %v1421, %v1735
        %v1737 = vpop.f32.mrb[0].mxu0
        %1738 = vmatprep.mubr.f32.mxu0 %v625
        %1739 = vmatmul.mubr.f32.gmra.mrb[0].mxu0 %v624
        %v1740 = vpop.f32.mrb[0].mxu0
        %v1741 = vadd.f32 %v1426, %v1740
        %v1742 = vpop.f32.mrb[0].mxu0
        %1743 = vmatprep.mubr.f32.mxu0 %v633
        %1744 = vmatmul.mubr.f32.gmra.mrb[0].mxu0 %v632
        %v1745 = vpop.f32.mrb[0].mxu0
        %v1746 = vadd.f32 %v1431, %v1745
        %v1747 = vpop.f32.mrb[0].mxu0
        %1748 = vmatprep.mubr.f32.mxu0 %v641
        %1749 = vmatmul.mubr.f32.gmra.mrb[0].mxu0 %v640
        %v1750 = vpop.f32.mrb[0].mxu0
        %v1751 = vadd.f32 %v1436, %v1750
        %v1752 = vpop.f32.mrb[0].mxu0
        %1753 = vmatprep.mubr.f32.mxu0 %v649
        %1754 = vmatmul.mubr.f32.gmra.mrb[0].mxu0 %v648
        %v1755 = vpop.f32.mrb[0].mxu0
        %v1756 = vadd.f32 %v1441, %v1755
        %v1757 = vpop.f32.mrb[0].mxu0
        %1758 = vmatprep.mubr.f32.mxu0 %v657
        %1759 = vmatmul.mubr.f32.gmra.mrb[0].mxu0 %v656
        %v1760 = vpop.f32.mrb[0].mxu0
        %v1761 = vadd.f32 %v1446, %v1760
        %v1762 = vpop.f32.mrb[0].mxu0
        %1763 = vmatprep.mubr.f32.mxu0 %v665
        %1764 = vmatmul.mubr.f32.gmra.mrb[0].mxu0 %v664
        %v1765 = vpop.f32.mrb[0].mxu0
        %v1766 = vadd.f32 %v1451, %v1765
        %v1767 = vpop.f32.mrb[0].mxu0
        %1768 = vmatprep.mubr.f32.mxu0 %v673
        %1769 = vmatmul.mubr.f32.gmra.mrb[0].mxu0 %v672
        %v1770 = vpop.f32.mrb[0].mxu0
        %v1771 = vadd.f32 %v1456, %v1770
        %v1772 = vpop.f32.mrb[0].mxu0
        %1773 = vmatprep.mubr.f32.mxu0 %v681
        %1774 = vmatmul.mubr.f32.gmra.mrb[0].mxu0 %v680
        %v1775 = vpop.f32.mrb[0].mxu0
        %v1776 = vadd.f32 %v1461, %v1775
        %v1777 = vpop.f32.mrb[0].mxu0
        %1778 = vmatprep.mubr.f32.mxu0 %v689
        %1779 = vmatmul.mubr.f32.gmra.mrb[0].mxu0 %v688
        %v1780 = vpop.f32.mrb[0].mxu0
        %v1781 = vadd.f32 %v1466, %v1780
        %v1782 = vpop.f32.mrb[0].mxu0
        %1783 = vmatprep.mubr.f32.mxu0 %v697
        %1784 = vmatmul.mubr.f32.gmra.mrb[0].mxu0 %v696
        %v1785 = vpop.f32.mrb[0].mxu0
        %v1786 = vadd.f32 %v1471, %v1785
        %v1787 = vpop.f32.mrb[0].mxu0
        %1788 = vmatprep.mubr.f32.mxu0 %v705
        %1789 = vmatmul.mubr.f32.gmra.mrb[0].mxu0 %v704
        %v1790 = vpop.f32.mrb[0].mxu0
        %v1791 = vadd.f32 %v1476, %v1790
        %v1792 = vpop.f32.mrb[0].mxu0
        %1793 = vmatprep.mubr.f32.mxu0 %v713
        %1794 = vmatmul.mubr.f32.gmra.mrb[0].mxu0 %v712
        %v1795 = vpop.f32.mrb[0].mxu0
        %v1796 = vadd.f32 %v1481, %v1795
        %v1797 = vpop.f32.mrb[0].mxu0
        %1798 = vmatprep.mubr.f32.mxu0 %v721
        %1799 = vmatmul.mubr.f32.gmra.mrb[0].mxu0 %v720
        %v1800 = vpop.f32.mrb[0].mxu0
        %v1801 = vadd.f32 %v1486, %v1800
        %v1802 = vpop.f32.mrb[0].mxu0
        %1803 = vdwg.mxu0
        %1804 = vmatprep.subr.mxu0 0.0
        %1805 = vmatpush1.msra.mxu0 %v820
        %1806 = vmatprep.subr.mxu0 0.0
        %1807 = vmatpush1.msra.mxu0 %v821
        %1808 = vmatprep.subr.mxu0 0.0
        %1809 = vmatpush1.msra.mxu0 %v822
        %1810 = vmatprep.subr.mxu0 0.0
        %1811 = vmatpush1.msra.mxu0 %v823
        %1812 = vmatprep.subr.mxu0 0.0
        %1813 = vmatpush1.msra.mxu0 %v824
        %1814 = vmatprep.subr.mxu0 0.0
        %1815 = vmatpush1.msra.mxu0 %v825
        %1816 = vmatprep.subr.mxu0 0.0
        %1817 = vmatpush1.msra.mxu0 %v826
        %1818 = vmatprep.subr.mxu0 0.0
        %1819 = vmatpush1.msra.mxu0 %v827
        %1820 = vmatprep.subr.mxu0 0.0
        %1821 = vmatpush1.msra.mxu0 %v828
        %1822 = vmatprep.subr.mxu0 0.0
        %1823 = vmatpush1.msra.mxu0 %v829
        %1824 = vmatprep.subr.mxu0 0.0
        %1825 = vmatpush1.msra.mxu0 %v830
        %1826 = vmatprep.subr.mxu0 0.0
        %1827 = vmatpush1.msra.mxu0 %v831
        %1828 = vmatprep.subr.mxu0 0.0
        %1829 = vmatpush1.msra.mxu0 %v832
        %1830 = vmatprep.subr.mxu0 0.0
        %1831 = vmatpush1.msra.mxu0 %v833
        %1832 = vmatprep.subr.mxu0 0.0
        %1833 = vmatpush1.msra.mxu0 %v834
        %1834 = vmatprep.subr.mxu0 0.0
        %1835 = vmatpush1.msra.mxu0 %v835
        %1836 = vmatprep.subr.mxu0 0.0
        %1837 = vmatpush1.msra.mxu0 %v836
        %1838 = vmatprep.subr.mxu0 0.0
        %1839 = vmatpush1.msra.mxu0 %v837
        %1840 = vmatprep.subr.mxu0 0.0
        %1841 = vmatpush1.msra.mxu0 %v838
        %1842 = vmatprep.subr.mxu0 0.0
        %1843 = vmatpush1.msra.mxu0 %v839
        %1844 = vmatprep.subr.mxu0 0.0
        %1845 = vmatpush1.msra.mxu0 %v840
        %1846 = vmatprep.subr.mxu0 0.0
        %1847 = vmatpush1.msra.mxu0 %v841
        %1848 = vmatprep.subr.mxu0 0.0
        %1849 = vmatpush1.msra.mxu0 %v842
        %1850 = vmatprep.subr.mxu0 0.0
        %1851 = vmatpush1.msra.mxu0 %v843
        %1852 = vmatprep.subr.mxu0 0.0
        %1853 = vmatpush1.msra.mxu0 %v844
        %1854 = vmatprep.subr.mxu0 0.0
        %1855 = vmatpush1.msra.mxu0 %v845
        %1856 = vmatprep.subr.mxu0 0.0
        %1857 = vmatpush1.msra.mxu0 %v846
        %1858 = vmatprep.subr.mxu0 0.0
        %1859 = vmatpush1.msra.mxu0 %v847
        %1860 = vmatprep.subr.mxu0 0.0
        %1861 = vmatpush1.msra.mxu0 %v848
        %1862 = vmatprep.subr.mxu0 0.0
        %1863 = vmatpush1.msra.mxu0 %v849
        %1864 = vmatprep.subr.mxu0 0.0
        %1865 = vmatpush1.msra.mxu0 %v850
        %1866 = vmatprep.subr.mxu0 0.0
        %1867 = vmatpush1.msra.mxu0 %v851
        %1868 = vmatprep.mubr.f32.mxu0 %v331
        %1869 = vmatmul.mubr.f32.gmra.mrb[0].mxu0 %v330
        %v1870 = vpop.f32.mrb[0].mxu0
        %v1871 = vadd.f32 %v1556, %v1870
        %v1872 = vpop.f32.mrb[0].mxu0
        %1873 = vmatprep.mubr.f32.mxu0 %v339
        %1874 = vmatmul.mubr.f32.gmra.mrb[0].mxu0 %v338
        %v1875 = vpop.f32.mrb[0].mxu0
        %v1876 = vadd.f32 %v1561, %v1875
        %v1877 = vpop.f32.mrb[0].mxu0
        %1878 = vmatprep.mubr.f32.mxu0 %v347
        %1879 = vmatmul.mubr.f32.gmra.mrb[0].mxu0 %v346
        %v1880 = vpop.f32.mrb[0].mxu0
        %v1881 = vadd.f32 %v1566, %v1880
        %v1882 = vpop.f32.mrb[0].mxu0
        %1883 = vmatprep.mubr.f32.mxu0 %v355
        %1884 = vmatmul.mubr.f32.gmra.mrb[0].mxu0 %v354
        %v1885 = vpop.f32.mrb[0].mxu0
        %v1886 = vadd.f32 %v1571, %v1885
        %v1887 = vpop.f32.mrb[0].mxu0
        %1888 = vmatprep.mubr.f32.mxu0 %v363
        %1889 = vmatmul.mubr.f32.gmra.mrb[0].mxu0 %v362
        %v1890 = vpop.f32.mrb[0].mxu0
        %v1891 = vadd.f32 %v1576, %v1890
        %v1892 = vpop.f32.mrb[0].mxu0
        %1893 = vmatprep.mubr.f32.mxu0 %v371
        %1894 = vmatmul.mubr.f32.gmra.mrb[0].mxu0 %v370
        %v1895 = vpop.f32.mrb[0].mxu0
        %v1896 = vadd.f32 %v1581, %v1895
        %v1897 = vpop.f32.mrb[0].mxu0
        %1898 = vmatprep.mubr.f32.mxu0 %v379
        %1899 = vmatmul.mubr.f32.gmra.mrb[0].mxu0 %v378
        %v1900 = vpop.f32.mrb[0].mxu0
        %v1901 = vadd.f32 %v1586, %v1900
        %v1902 = vpop.f32.mrb[0].mxu0
        %1903 = vmatprep.mubr.f32.mxu0 %v387
        %1904 = vmatmul.mubr.f32.gmra.mrb[0].mxu0 %v386
        %v1905 = vpop.f32.mrb[0].mxu0
        %v1906 = vadd.f32 %v1591, %v1905
        %v1907 = vpop.f32.mrb[0].mxu0
        %1908 = vmatprep.mubr.f32.mxu0 %v395
        %1909 = vmatmul.mubr.f32.gmra.mrb[0].mxu0 %v394
        %v1910 = vpop.f32.mrb[0].mxu0
        %v1911 = vadd.f32 %v1596, %v1910
        %v1912 = vpop.f32.mrb[0].mxu0
        %1913 = vmatprep.mubr.f32.mxu0 %v403
        %1914 = vmatmul.mubr.f32.gmra.mrb[0].mxu0 %v402
        %v1915 = vpop.f32.mrb[0].mxu0
        %v1916 = vadd.f32 %v1601, %v1915
        %v1917 = vpop.f32.mrb[0].mxu0
        %1918 = vmatprep.mubr.f32.mxu0 %v411
        %1919 = vmatmul.mubr.f32.gmra.mrb[0].mxu0 %v410
        %v1920 = vpop.f32.mrb[0].mxu0
        %v1921 = vadd.f32 %v1606, %v1920
        %v1922 = vpop.f32.mrb[0].mxu0
        %1923 = vmatprep.mubr.f32.mxu0 %v419
        %1924 = vmatmul.mubr.f32.gmra.mrb[0].mxu0 %v418
        %v1925 = vpop.f32.mrb[0].mxu0
        %v1926 = vadd.f32 %v1611, %v1925
        %v1927 = vpop.f32.mrb[0].mxu0
        %1928 = vmatprep.mubr.f32.mxu0 %v427
        %1929 = vmatmul.mubr.f32.gmra.mrb[0].mxu0 %v426
        %v1930 = vpop.f32.mrb[0].mxu0
        %v1931 = vadd.f32 %v1616, %v1930
        %v1932 = vpop.f32.mrb[0].mxu0
        %1933 = vmatprep.mubr.f32.mxu0 %v435
        %1934 = vmatmul.mubr.f32.gmra.mrb[0].mxu0 %v434
        %v1935 = vpop.f32.mrb[0].mxu0
        %v1936 = vadd.f32 %v1621, %v1935
        %v1937 = vpop.f32.mrb[0].mxu0
        %1938 = vmatprep.mubr.f32.mxu0 %v443
        %1939 = vmatmul.mubr.f32.gmra.mrb[0].mxu0 %v442
        %v1940 = vpop.f32.mrb[0].mxu0
        %v1941 = vadd.f32 %v1626, %v1940
        %v1942 = vpop.f32.mrb[0].mxu0
        %1943 = vmatprep.mubr.f32.mxu0 %v451
        %1944 = vmatmul.mubr.f32.gmra.mrb[0].mxu0 %v450
        %v1945 = vpop.f32.mrb[0].mxu0
        %v1946 = vadd.f32 %v1631, %v1945
        %v1947 = vpop.f32.mrb[0].mxu0
        %1948 = vmatprep.mubr.f32.mxu0 %v459
        %1949 = vmatmul.mubr.f32.gmra.mrb[0].mxu0 %v458
        %v1950 = vpop.f32.mrb[0].mxu0
        %v1951 = vadd.f32 %v1636, %v1950
        %v1952 = vpop.f32.mrb[0].mxu0
        %1953 = vmatprep.mubr.f32.mxu0 %v467
        %1954 = vmatmul.mubr.f32.gmra.mrb[0].mxu0 %v466
        %v1955 = vpop.f32.mrb[0].mxu0
        %v1956 = vadd.f32 %v1641, %v1955
        %v1957 = vpop.f32.mrb[0].mxu0
        %1958 = vmatprep.mubr.f32.mxu0 %v475
        %1959 = vmatmul.mubr.f32.gmra.mrb[0].mxu0 %v474
        %v1960 = vpop.f32.mrb[0].mxu0
        %v1961 = vadd.f32 %v1646, %v1960
        %v1962 = vpop.f32.mrb[0].mxu0
        %1963 = vmatprep.mubr.f32.mxu0 %v483
        %1964 = vmatmul.mubr.f32.gmra.mrb[0].mxu0 %v482
        %v1965 = vpop.f32.mrb[0].mxu0
        %v1966 = vadd.f32 %v1651, %v1965
        %v1967 = vpop.f32.mrb[0].mxu0
        %1968 = vmatprep.mubr.f32.mxu0 %v491
        %1969 = vmatmul.mubr.f32.gmra.mrb[0].mxu0 %v490
        %v1970 = vpop.f32.mrb[0].mxu0
        %v1971 = vadd.f32 %v1656, %v1970
        %v1972 = vpop.f32.mrb[0].mxu0
        %1973 = vmatprep.mubr.f32.mxu0 %v499
        %1974 = vmatmul.mubr.f32.gmra.mrb[0].mxu0 %v498
        %v1975 = vpop.f32.mrb[0].mxu0
        %v1976 = vadd.f32 %v1661, %v1975
        %v1977 = vpop.f32.mrb[0].mxu0
        %1978 = vmatprep.mubr.f32.mxu0 %v507
        %1979 = vmatmul.mubr.f32.gmra.mrb[0].mxu0 %v506
        %v1980 = vpop.f32.mrb[0].mxu0
        %v1981 = vadd.f32 %v1666, %v1980
        %v1982 = vpop.f32.mrb[0].mxu0
        %1983 = vmatprep.mubr.f32.mxu0 %v515
        %1984 = vmatmul.mubr.f32.gmra.mrb[0].mxu0 %v514
        %v1985 = vpop.f32.mrb[0].mxu0
        %v1986 = vadd.f32 %v1671, %v1985
        %v1987 = vpop.f32.mrb[0].mxu0
        %1988 = vmatprep.mubr.f32.mxu0 %v523
        %1989 = vmatmul.mubr.f32.gmra.mrb[0].mxu0 %v522
        %v1990 = vpop.f32.mrb[0].mxu0
        %v1991 = vadd.f32 %v1676, %v1990
        %v1992 = vpop.f32.mrb[0].mxu0
        %1993 = vmatprep.mubr.f32.mxu0 %v531
        %1994 = vmatmul.mubr.f32.gmra.mrb[0].mxu0 %v530
        %v1995 = vpop.f32.mrb[0].mxu0
        %v1996 = vadd.f32 %v1681, %v1995
        %v1997 = vpop.f32.mrb[0].mxu0
        %1998 = vmatprep.mubr.f32.mxu0 %v539
        %1999 = vmatmul.mubr.f32.gmra.mrb[0].mxu0 %v538
        %v2000 = vpop.f32.mrb[0].mxu0
        %v2001 = vadd.f32 %v1686, %v2000
        %v2002 = vpop.f32.mrb[0].mxu0
        %2003 = vmatprep.mubr.f32.mxu0 %v547
        %2004 = vmatmul.mubr.f32.gmra.mrb[0].mxu0 %v546
        %v2005 = vpop.f32.mrb[0].mxu0
        %v2006 = vadd.f32 %v1691, %v2005
        %v2007 = vpop.f32.mrb[0].mxu0
        %2008 = vmatprep.mubr.f32.mxu0 %v555
        %2009 = vmatmul.mubr.f32.gmra.mrb[0].mxu0 %v554
        %v2010 = vpop.f32.mrb[0].mxu0
        %v2011 = vadd.f32 %v1696, %v2010
        %v2012 = vpop.f32.mrb[0].mxu0
        %2013 = vmatprep.mubr.f32.mxu0 %v563
        %2014 = vmatmul.mubr.f32.gmra.mrb[0].mxu0 %v562
        %v2015 = vpop.f32.mrb[0].mxu0
        %v2016 = vadd.f32 %v1701, %v2015
        %v2017 = vpop.f32.mrb[0].mxu0
        %2018 = vmatprep.mubr.f32.mxu0 %v571
        %2019 = vmatmul.mubr.f32.gmra.mrb[0].mxu0 %v570
        %v2020 = vpop.f32.mrb[0].mxu0
        %v2021 = vadd.f32 %v1706, %v2020
        %v2022 = vpop.f32.mrb[0].mxu0
        %2023 = vmatprep.mubr.f32.mxu0 %v579
        %2024 = vmatmul.mubr.f32.gmra.mrb[0].mxu0 %v578
        %v2025 = vpop.f32.mrb[0].mxu0
        %v2026 = vadd.f32 %v1711, %v2025
        %v2027 = vpop.f32.mrb[0].mxu0
        %2028 = vmatprep.mubr.f32.mxu0 %v587
        %2029 = vmatmul.mubr.f32.gmra.mrb[0].mxu0 %v586
        %v2030 = vpop.f32.mrb[0].mxu0
        %v2031 = vadd.f32 %v1716, %v2030
        %v2032 = vpop.f32.mrb[0].mxu0
        %2033 = vmatprep.mubr.f32.mxu0 %v595
        %2034 = vmatmul.mubr.f32.gmra.mrb[0].mxu0 %v594
        %v2035 = vpop.f32.mrb[0].mxu0
        %v2036 = vadd.f32 %v1721, %v2035
        %v2037 = vpop.f32.mrb[0].mxu0
        %2038 = vmatprep.mubr.f32.mxu0 %v603
        %2039 = vmatmul.mubr.f32.gmra.mrb[0].mxu0 %v602
        %v2040 = vpop.f32.mrb[0].mxu0
        %v2041 = vadd.f32 %v1726, %v2040
        %v2042 = vpop.f32.mrb[0].mxu0
        %2043 = vmatprep.mubr.f32.mxu0 %v611
        %2044 = vmatmul.mubr.f32.gmra.mrb[0].mxu0 %v610
        %v2045 = vpop.f32.mrb[0].mxu0
        %v2046 = vadd.f32 %v1731, %v2045
        %v2047 = vpop.f32.mrb[0].mxu0
        %2048 = vmatprep.mubr.f32.mxu0 %v619
        %2049 = vmatmul.mubr.f32.gmra.mrb[0].mxu0 %v618
        %v2050 = vpop.f32.mrb[0].mxu0
        %v2051 = vadd.f32 %v1736, %v2050
        %v2052 = vpop.f32.mrb[0].mxu0
        %2053 = vmatprep.mubr.f32.mxu0 %v627
        %2054 = vmatmul.mubr.f32.gmra.mrb[0].mxu0 %v626
        %v2055 = vpop.f32.mrb[0].mxu0
        %v2056 = vadd.f32 %v1741, %v2055
        %v2057 = vpop.f32.mrb[0].mxu0
        %2058 = vmatprep.mubr.f32.mxu0 %v635
        %2059 = vmatmul.mubr.f32.gmra.mrb[0].mxu0 %v634
        %v2060 = vpop.f32.mrb[0].mxu0
        %v2061 = vadd.f32 %v1746, %v2060
        %v2062 = vpop.f32.mrb[0].mxu0
        %2063 = vmatprep.mubr.f32.mxu0 %v643
        %2064 = vmatmul.mubr.f32.gmra.mrb[0].mxu0 %v642
        %v2065 = vpop.f32.mrb[0].mxu0
        %v2066 = vadd.f32 %v1751, %v2065
        %v2067 = vpop.f32.mrb[0].mxu0
        %2068 = vmatprep.mubr.f32.mxu0 %v651
        %2069 = vmatmul.mubr.f32.gmra.mrb[0].mxu0 %v650
        %v2070 = vpop.f32.mrb[0].mxu0
        %v2071 = vadd.f32 %v1756, %v2070
        %v2072 = vpop.f32.mrb[0].mxu0
        %2073 = vmatprep.mubr.f32.mxu0 %v659
        %2074 = vmatmul.mubr.f32.gmra.mrb[0].mxu0 %v658
        %v2075 = vpop.f32.mrb[0].mxu0
        %v2076 = vadd.f32 %v1761, %v2075
        %v2077 = vpop.f32.mrb[0].mxu0
        %2078 = vmatprep.mubr.f32.mxu0 %v667
        %2079 = vmatmul.mubr.f32.gmra.mrb[0].mxu0 %v666
        %v2080 = vpop.f32.mrb[0].mxu0
        %v2081 = vadd.f32 %v1766, %v2080
        %v2082 = vpop.f32.mrb[0].mxu0
        %2083 = vmatprep.mubr.f32.mxu0 %v675
        %2084 = vmatmul.mubr.f32.gmra.mrb[0].mxu0 %v674
        %v2085 = vpop.f32.mrb[0].mxu0
        %v2086 = vadd.f32 %v1771, %v2085
        %v2087 = vpop.f32.mrb[0].mxu0
        %2088 = vmatprep.mubr.f32.mxu0 %v683
        %2089 = vmatmul.mubr.f32.gmra.mrb[0].mxu0 %v682
        %v2090 = vpop.f32.mrb[0].mxu0
        %v2091 = vadd.f32 %v1776, %v2090
        %v2092 = vpop.f32.mrb[0].mxu0
        %2093 = vmatprep.mubr.f32.mxu0 %v691
        %2094 = vmatmul.mubr.f32.gmra.mrb[0].mxu0 %v690
        %v2095 = vpop.f32.mrb[0].mxu0
        %v2096 = vadd.f32 %v1781, %v2095
        %v2097 = vpop.f32.mrb[0].mxu0
        %2098 = vmatprep.mubr.f32.mxu0 %v699
        %2099 = vmatmul.mubr.f32.gmra.mrb[0].mxu0 %v698
        %v2100 = vpop.f32.mrb[0].mxu0
        %v2101 = vadd.f32 %v1786, %v2100
        %v2102 = vpop.f32.mrb[0].mxu0
        %2103 = vmatprep.mubr.f32.mxu0 %v707
        %2104 = vmatmul.mubr.f32.gmra.mrb[0].mxu0 %v706
        %v2105 = vpop.f32.mrb[0].mxu0
        %v2106 = vadd.f32 %v1791, %v2105
        %v2107 = vpop.f32.mrb[0].mxu0
        %2108 = vmatprep.mubr.f32.mxu0 %v715
        %2109 = vmatmul.mubr.f32.gmra.mrb[0].mxu0 %v714
        %v2110 = vpop.f32.mrb[0].mxu0
        %v2111 = vadd.f32 %v1796, %v2110
        %v2112 = vpop.f32.mrb[0].mxu0
        %2113 = vmatprep.mubr.f32.mxu0 %v723
        %2114 = vmatmul.mubr.f32.gmra.mrb[0].mxu0 %v722
        %v2115 = vpop.f32.mrb[0].mxu0
        %v2116 = vadd.f32 %v1801, %v2115
        %v2117 = vpop.f32.mrb[0].mxu0
        %2118 = vdwg.mxu0
        %v2119 = vmax.f32 %v1871, 0.0
        %v2120 = vmax.f32 %v1876, 0.0
        %v2121 = vmax.f32 %v1881, 0.0
        %v2122 = vmax.f32 %v1886, 0.0
        %v2123 = vmax.f32 %v1891, 0.0
        %v2124 = vmax.f32 %v1896, 0.0
        %v2125 = vmax.f32 %v1901, 0.0
        %v2126 = vmax.f32 %v1906, 0.0
        %v2127 = vmax.f32 %v1911, 0.0
        %v2128 = vmax.f32 %v1916, 0.0
        %v2129 = vmax.f32 %v1921, 0.0
        %v2130 = vmax.f32 %v1926, 0.0
        %v2131 = vmax.f32 %v1931, 0.0
        %v2132 = vmax.f32 %v1936, 0.0
        %v2133 = vmax.f32 %v1941, 0.0
        %v2134 = vmax.f32 %v1946, 0.0
        %v2135 = vmax.f32 %v1951, 0.0
        %v2136 = vmax.f32 %v1956, 0.0
        %v2137 = vmax.f32 %v1961, 0.0
        %v2138 = vmax.f32 %v1966, 0.0
        %v2139 = vmax.f32 %v1971, 0.0
        %v2140 = vmax.f32 %v1976, 0.0
        %v2141 = vmax.f32 %v1981, 0.0
        %v2142 = vmax.f32 %v1986, 0.0
        %v2143 = vmax.f32 %v1991, 0.0
        %v2144 = vmax.f32 %v1996, 0.0
        %v2145 = vmax.f32 %v2001, 0.0
        %v2146 = vmax.f32 %v2006, 0.0
        %v2147 = vmax.f32 %v2011, 0.0
        %v2148 = vmax.f32 %v2016, 0.0
        %v2149 = vmax.f32 %v2021, 0.0
        %v2150 = vmax.f32 %v2026, 0.0
        %v2151 = vmax.f32 %v2031, 0.0
        %v2152 = vmax.f32 %v2036, 0.0
        %v2153 = vmax.f32 %v2041, 0.0
        %v2154 = vmax.f32 %v2046, 0.0
        %v2155 = vmax.f32 %v2051, 0.0
        %v2156 = vmax.f32 %v2056, 0.0
        %v2157 = vmax.f32 %v2061, 0.0
        %v2158 = vmax.f32 %v2066, 0.0
        %v2159 = vmax.f32 %v2071, 0.0
        %v2160 = vmax.f32 %v2076, 0.0
        %v2161 = vmax.f32 %v2081, 0.0
        %v2162 = vmax.f32 %v2086, 0.0
        %v2163 = vmax.f32 %v2091, 0.0
        %v2164 = vmax.f32 %v2096, 0.0
        %v2165 = vmax.f32 %v2101, 0.0
        %v2166 = vmax.f32 %v2106, 0.0
        %v2167 = vmax.f32 %v2111, 0.0
        %v2168 = vmax.f32 %v2116, 0.0
        %v2169 = vld [vmem:[#allocation5] sm:$0xff]
        %v2170 = vld [vmem:[#allocation5 + $0x8] sm:$0xff]
        %v2173 = vcombine.high %v2169, %v2169
        %v2174 = vcombine.high %v2170, %v2170
        %vm2176 = vcmask 130048
        %v2177 = vsel %vm2176, %v2174, 0
        %2179 = vmatprep.subr.mxu0 0.0
        %2180 = vmatpush1.msra.mxu0 %v2119
        %2181 = vmatprep.subr.mxu0 0.0
        %2182 = vmatpush1.msra.mxu0 %v2120
        %2183 = vmatprep.subr.mxu0 0.0
        %2184 = vmatpush1.msra.mxu0 %v2121
        %2185 = vmatprep.subr.mxu0 0.0
        %2186 = vmatpush1.msra.mxu0 %v2122
        %2187 = vmatprep.subr.mxu0 0.0
        %2188 = vmatpush1.msra.mxu0 %v2123
        %2189 = vmatprep.subr.mxu0 0.0
        %2190 = vmatpush1.msra.mxu0 %v2124
        %2191 = vmatprep.subr.mxu0 0.0
        %2192 = vmatpush1.msra.mxu0 %v2125
        %2193 = vmatprep.subr.mxu0 0.0
        %2194 = vmatpush1.msra.mxu0 %v2126
        %2195 = vmatprep.subr.mxu0 0.0
        %2196 = vmatpush1.msra.mxu0 %v2127
        %2197 = vmatprep.subr.mxu0 0.0
        %2198 = vmatpush1.msra.mxu0 %v2128
        %2199 = vmatprep.subr.mxu0 0.0
        %2200 = vmatpush1.msra.mxu0 %v2129
        %2201 = vmatprep.subr.mxu0 0.0
        %2202 = vmatpush1.msra.mxu0 %v2130
        %2203 = vmatprep.subr.mxu0 0.0
        %2204 = vmatpush1.msra.mxu0 %v2131
        %2205 = vmatprep.subr.mxu0 0.0
        %2206 = vmatpush1.msra.mxu0 %v2132
        %2207 = vmatprep.subr.mxu0 0.0
        %2208 = vmatpush1.msra.mxu0 %v2133
        %2209 = vmatprep.subr.mxu0 0.0
        %2210 = vmatpush1.msra.mxu0 %v2134
        %2211 = vmatprep.subr.mxu0 0.0
        %2212 = vmatpush1.msra.mxu0 %v2135
        %2213 = vmatprep.subr.mxu0 0.0
        %2214 = vmatpush1.msra.mxu0 %v2136
        %2215 = vmatprep.subr.mxu0 0.0
        %2216 = vmatpush1.msra.mxu0 %v2137
        %2217 = vmatprep.subr.mxu0 0.0
        %2218 = vmatpush1.msra.mxu0 %v2138
        %2219 = vmatprep.subr.mxu0 0.0
        %2220 = vmatpush1.msra.mxu0 %v2139
        %2221 = vmatprep.subr.mxu0 0.0
        %2222 = vmatpush1.msra.mxu0 %v2140
        %2223 = vmatprep.subr.mxu0 0.0
        %2224 = vmatpush1.msra.mxu0 %v2141
        %2225 = vmatprep.subr.mxu0 0.0
        %2226 = vmatpush1.msra.mxu0 %v2142
        %2227 = vmatprep.subr.mxu0 0.0
        %2228 = vmatpush1.msra.mxu0 %v2143
        %2229 = vmatprep.subr.mxu0 0.0
        %2230 = vmatpush1.msra.mxu0 %v2144
        %2231 = vmatprep.subr.mxu0 0.0
        %2232 = vmatpush1.msra.mxu0 %v2145
        %2233 = vmatprep.subr.mxu0 0.0
        %2234 = vmatpush1.msra.mxu0 %v2146
        %2235 = vmatprep.subr.mxu0 0.0
        %2236 = vmatpush1.msra.mxu0 %v2147
        %2237 = vmatprep.subr.mxu0 0.0
        %2238 = vmatpush1.msra.mxu0 %v2148
        %2239 = vmatprep.subr.mxu0 0.0
        %2240 = vmatpush1.msra.mxu0 %v2149
        %2241 = vmatprep.subr.mxu0 0.0
        %2242 = vmatpush1.msra.mxu0 %v2150
        %2243 = vmatprep.mubr.f32.mxu0 %v2173
        %2244 = vmatmul.mubr.f32.gmra.mrb[0].mxu0 %v2169
        %v2245 = vpop.f32.mrb[0].mxu0
        %v2246 = vadd.f32 0.0, %v2245
        %v2247 = vpop.f32.mrb[0].mxu0
        %2248 = vdwg.mxu0
        %2249 = vmatprep.subr.mxu0 0.0
        %2250 = vmatpush1.msra.mxu0 %v2151
        %2251 = vmatprep.subr.mxu0 0.0
        %2252 = vmatpush1.msra.mxu0 %v2152
        %2253 = vmatprep.subr.mxu0 0.0
        %2254 = vmatpush1.msra.mxu0 %v2153
        %2255 = vmatprep.subr.mxu0 0.0
        %2256 = vmatpush1.msra.mxu0 %v2154
        %2257 = vmatprep.subr.mxu0 0.0
        %2258 = vmatpush1.msra.mxu0 %v2155
        %2259 = vmatprep.subr.mxu0 0.0
        %2260 = vmatpush1.msra.mxu0 %v2156
        %2261 = vmatprep.subr.mxu0 0.0
        %2262 = vmatpush1.msra.mxu0 %v2157
        %2263 = vmatprep.subr.mxu0 0.0
        %2264 = vmatpush1.msra.mxu0 %v2158
        %2265 = vmatprep.subr.mxu0 0.0
        %2266 = vmatpush1.msra.mxu0 %v2159
        %2267 = vmatprep.subr.mxu0 0.0
        %2268 = vmatpush1.msra.mxu0 %v2160
        %2269 = vmatprep.subr.mxu0 0.0
        %2270 = vmatpush1.msra.mxu0 %v2161
        %2271 = vmatprep.subr.mxu0 0.0
        %2272 = vmatpush1.msra.mxu0 %v2162
        %2273 = vmatprep.subr.mxu0 0.0
        %2274 = vmatpush1.msra.mxu0 %v2163
        %2275 = vmatprep.subr.mxu0 0.0
        %2276 = vmatpush1.msra.mxu0 %v2164
        %2277 = vmatprep.subr.mxu0 0.0
        %2278 = vmatpush1.msra.mxu0 %v2165
        %2279 = vmatprep.subr.mxu0 0.0
        %2280 = vmatpush1.msra.mxu0 %v2166
        %2281 = vmatprep.subr.mxu0 0.0
        %2282 = vmatpush1.msra.mxu0 %v2167
        %2283 = vmatprep.subr.mxu0 0.0
        %2284 = vmatpush1.msra.mxu0 %v2168
        %2285 = vmatprep.subr.mxu0 0.0
        %2286 = vmatpush1.msra.mxu0 0.0
        %2287 = vmatprep.subr.mxu0 0.0
        %2288 = vmatpush1.msra.mxu0 0.0
        %2289 = vmatprep.subr.mxu0 0.0
        %2290 = vmatpush1.msra.mxu0 0.0
        %2291 = vmatprep.subr.mxu0 0.0
        %2292 = vmatpush1.msra.mxu0 0.0
        %2293 = vmatprep.subr.mxu0 0.0
        %2294 = vmatpush1.msra.mxu0 0.0
        %2295 = vmatprep.subr.mxu0 0.0
        %2296 = vmatpush1.msra.mxu0 0.0
        %2297 = vmatprep.subr.mxu0 0.0
        %2298 = vmatpush1.msra.mxu0 0.0
        %2299 = vmatprep.subr.mxu0 0.0
        %2300 = vmatpush1.msra.mxu0 0.0
        %2301 = vmatprep.subr.mxu0 0.0
        %2302 = vmatpush1.msra.mxu0 0.0
        %2303 = vmatprep.subr.mxu0 0.0
        %2304 = vmatpush1.msra.mxu0 0.0
        %2305 = vmatprep.subr.mxu0 0.0
        %2306 = vmatpush1.msra.mxu0 0.0
        %2307 = vmatprep.subr.mxu0 0.0
        %2308 = vmatpush1.msra.mxu0 0.0
        %2309 = vmatprep.subr.mxu0 0.0
        %2310 = vmatpush1.msra.mxu0 0.0
        %2311 = vmatprep.subr.mxu0 0.0
        %2312 = vmatpush1.msra.mxu0 0.0
        %2313 = vmatprep.mubr.f32.mxu0 %v2177
        %2314 = vmatmul.mubr.f32.gmra.mrb[0].mxu0 %v2170
        %v2315 = vpop.f32.mrb[0].mxu0
        %v2316 = vadd.f32 %v2246, %v2315
        %v2317 = vpop.f32.mrb[0].mxu0
        %2318 = vdwg.mxu0
        %v2319 = vld [vmem:[#allocation8] sm:$0xff]
        %v2320 = vld [vmem:[#allocation8 + $0x8] sm:$0xff]
        %v2321 = vld [vmem:[#allocation8 + $0x10] sm:$0xff]
        %v2322 = vld [vmem:[#allocation8 + $0x18] sm:$0xff]
        %v2323 = vld [vmem:[#allocation10] sm:$0x1]
        %v2325 = vlaneseq
        %v2326 = vshrl.u32 %v2325, 7
        %v2327 = vsub.s32 0, %v2326
        %v2328 = vrot.slane %v2323, %v2327
        %vm2330 = vcmask 261120
        %v2332 = vsel %vm2330, %v2316, 0
        %2334 = vmatprep.subr.mxu0 0.0
        %2335 = vmatpush1.msra.mxu0 %v2319
        %2336 = vmatprep.subr.mxu0 0.0
        %2337 = vmatpush1.msra.mxu0 %v2320
        %2338 = vmatprep.subr.mxu0 0.0
        %2339 = vmatpush1.msra.mxu0 %v2321
        %2340 = vmatprep.subr.mxu0 0.0
        %2341 = vmatpush1.msra.mxu0 %v2322
        %2342 = vmatprep.subr.mxu0 0.0
        %2343 = vmatpush1.msra.mxu0 0.0
        %2344 = vmatprep.subr.mxu0 0.0
        %2345 = vmatpush1.msra.mxu0 0.0
        %2346 = vmatprep.subr.mxu0 0.0
        %2347 = vmatpush1.msra.mxu0 0.0
        %2348 = vmatprep.subr.mxu0 0.0
        %2349 = vmatpush1.msra.mxu0 0.0
        %2350 = vmatprep.subr.mxu0 0.0
        %2351 = vmatpush1.msra.mxu0 0.0
        %2352 = vmatprep.subr.mxu0 0.0
        %2353 = vmatpush1.msra.mxu0 0.0
        %2354 = vmatprep.subr.mxu0 0.0
        %2355 = vmatpush1.msra.mxu0 0.0
        %2356 = vmatprep.subr.mxu0 0.0
        %2357 = vmatpush1.msra.mxu0 0.0
        %2358 = vmatprep.subr.mxu0 0.0
        %2359 = vmatpush1.msra.mxu0 0.0
        %2360 = vmatprep.subr.mxu0 0.0
        %2361 = vmatpush1.msra.mxu0 0.0
        %2362 = vmatprep.subr.mxu0 0.0
        %2363 = vmatpush1.msra.mxu0 0.0
        %2364 = vmatprep.subr.mxu0 0.0
        %2365 = vmatpush1.msra.mxu0 0.0
        %2366 = vmatprep.subr.mxu0 0.0
        %2367 = vmatpush1.msra.mxu0 0.0
        %2368 = vmatprep.subr.mxu0 0.0
        %2369 = vmatpush1.msra.mxu0 0.0
        %2370 = vmatprep.subr.mxu0 0.0
        %2371 = vmatpush1.msra.mxu0 0.0
        %2372 = vmatprep.subr.mxu0 0.0
        %2373 = vmatpush1.msra.mxu0 0.0
        %2374 = vmatprep.subr.mxu0 0.0
        %2375 = vmatpush1.msra.mxu0 0.0
        %2376 = vmatprep.subr.mxu0 0.0
        %2377 = vmatpush1.msra.mxu0 0.0
        %2378 = vmatprep.subr.mxu0 0.0
        %2379 = vmatpush1.msra.mxu0 0.0
        %2380 = vmatprep.subr.mxu0 0.0
        %2381 = vmatpush1.msra.mxu0 0.0
        %2382 = vmatprep.subr.mxu0 0.0
        %2383 = vmatpush1.msra.mxu0 0.0
        %2384 = vmatprep.subr.mxu0 0.0
        %2385 = vmatpush1.msra.mxu0 0.0
        %2386 = vmatprep.subr.mxu0 0.0
        %2387 = vmatpush1.msra.mxu0 0.0
        %2388 = vmatprep.subr.mxu0 0.0
        %2389 = vmatpush1.msra.mxu0 0.0
        %2390 = vmatprep.subr.mxu0 0.0
        %2391 = vmatpush1.msra.mxu0 0.0
        %2392 = vmatprep.subr.mxu0 0.0
        %2393 = vmatpush1.msra.mxu0 0.0
        %2394 = vmatprep.subr.mxu0 0.0
        %2395 = vmatpush1.msra.mxu0 0.0
        %2396 = vmatprep.subr.mxu0 0.0
        %2397 = vmatpush1.msra.mxu0 0.0
        %2398 = vmatprep.mubr.f32.mxu0 0.0
        %2399 = vmatmul.mubr.f32.gmra.mrb[0].mxu0 %v2332
        %v2400 = vpop.f32.mrb[0].mxu0
        %v2401 = vadd.f32 %v2328, %v2400
        %v2402 = vpop.f32.mrb[0].mxu0
        %2403 = vdwg.mxu0
        %2404 = vst [vmem:[%s322] sm:$0xf] %v2401
        %s2405 = sand.u32 %s164, 1
        %s2406 = scalar_lea.sflag [#allocation4], %s2405
        %s2407 = sand.u32 %s164, 1
        %s2408 = smul.addr %s2407, 4
        %s2409 = scalar_lea.vmem [#allocation11], %s2408
        // Predicated region
        $region65: #{tpu_custom_call.1} parent=43 // pred_check
          %p2410 = pneg %p174
        $region66: #{tpu_custom_call.1} parent=43 // pred_check_branch
          %2412 = sbr.rel (%p2410) target = $region68
        $region67: #{tpu_custom_call.1} parent=43 // pred_region
          %s2414 = ssub.s32 64, 64
          %2415 = vsyncadd %s2406, %s2414
          %s2416 = smul.addr %s25, 64
          %s2417 = scalar_lea.hbm %s6, %s2416
          %s2419 = sshll.u32 %s2409, 4
          %s2420 = int_to_ptr.vmem [resolvable:$true] %s2419
          %2422 = dma.vmem_to_hbm [thread:$0]  %s2420, 64, %s2417, %s2406
        $region68: #{tpu_custom_call.1} parent=43 // pred_fallthru
          _
      $region44: #{tpu_custom_call.1} parent=5 // pred_fallthru
        _
      %p2423 = scmp.le.s32.totalorder 2, %s20
      // Predicated region
      $region69: #{tpu_custom_call.1} parent=5 // pred_check
        %p2424 = pneg %p2423
      $region70: #{tpu_custom_call.1} parent=5 // pred_check_branch
        %2426 = sbr.rel (%p2424) target = $region72
      $region71: #{tpu_custom_call.1} parent=5 // pred_region
        %s2427 = ssub.s32 %s20, 2
        // Predicated region
        $region73: #{tpu_custom_call.1} parent=71 // pred_check
          %p2428 = pneg %p180
        $region74: #{tpu_custom_call.1} parent=71 // pred_check_branch
          %2430 = sbr.rel (%p2428) target = $region76
        $region75: #{tpu_custom_call.1} parent=71 // pred_region
          %s2431 = sand.u32 %s165, 1
          %s2432 = scalar_lea.sflag [#allocation4], %s2431
          %s2433 = sand.u32 %s165, 1
          %s2434 = smul.addr %s2433, 4
          %s2435 = scalar_lea.vmem [#allocation11], %s2434
          %2436 = dma.done %s2432, 64
        $region76: #{tpu_custom_call.1} parent=71 // pred_fallthru
          _
      $region72: #{tpu_custom_call.1} parent=5 // pred_fallthru
        _
    $region6: #{tpu_custom_call.1} parent=1 // loop_footer
      %s24 = sadd.s32 1, %s20
    $region7: #{tpu_custom_call.1} parent=1 // loop_footer_branch
      %19 = sbr.rel target = $region3
    $region8: #{tpu_custom_call.1} parent=1 // loop_exit
      _
    %2437 = vsyncpa [#allocation3], 1
    %s2438 = scalar_lea.sflag [#allocation3], 1
    %2439 = vsyncpa %s2438, 1
    %2440 = vsyncpa [#allocation6], 1
    %2441 = vsyncpa [#allocation9], 1
    %2442 = vsyncpa [#allocation4], 1
    %s2443 = scalar_lea.sflag [#allocation4], 1
    %2444 = vsyncpa %s2443, 1

// kernel: tpu_custom_call.1
$region0: #{tpu_custom_call.1}
  #allocation0 [shape = 'u32[]', space=smem, size = 0x4, offset = 0x4, fixed_abs, tag = 'smem constant byte address 0x4 - core index']
  #allocation1 [shape = 'u32[144,128]{1,0:T(1,128)}', space=vmem, size = 0x12000, scoped, tag = 'internal scratch']
  %s0 = inlined_call_operand.hbm [shape: f32[1600,1024], index: 0, kind: input, shape index: {}]
  %s1 = inlined_call_operand.hbm [shape: f32[4,400], index: 1, kind: input, shape index: {}]
  %s2 = inlined_call_operand.vmem [shape: f32[1024,32], index: 2, kind: input, shape index: {}]
  %s3 = inlined_call_operand.hbm [shape: f32[1,32], index: 3, kind: input, shape index: {}]
  %s4 = inlined_call_operand.hbm [shape: f32[32,128], index: 4, kind: input, shape index: {}]
  %s5 = inlined_call_operand.hbm [shape: f32[1,128], index: 5, kind: input, shape index: {}]
  %s6 = inlined_call_operand.hbm [shape: f32[4,4,128], index: 6, kind: output, shape index: {}]
  %s7 = sld [smem:[#allocation0]]
  $region77: #{tpu_custom_call.1} parent=0
    _
  %s9 = ssub.s32 1, %s7
  %s10 = scalar_select 0, %s9, %s7
  $region1: #{tpu_custom_call.1} parent=0
    #allocation2 [shape = 'u8[3276800]{0}', space=vmem, size = 0x320000, scoped, tag = 'input window, operand 0']
    #allocation3 [shape = 's32[2]{0}', space=sflag, size = 0x8, scoped, tag = 'scoped memory for tpu_custom_call.1']
    #allocation4 [shape = 's32[2]{0}', space=sflag, size = 0x8, scoped, tag = 'scoped memory for tpu_custom_call.1']
    #allocation5 [shape = 'u8[8192]{0}', space=vmem, size = 0x2000, scoped, tag = 'input window, operand 1, single buffered']
    #allocation6 [shape = 's32[1]{0}', space=sflag, size = 0x4, scoped, tag = 'scoped memory for tpu_custom_call.1']
    #allocation7 [shape = 'u8[512]{0}', space=vmem, size = 0x400, scoped, tag = 'input window, operand 3, single buffered']
    #allocation8 [shape = 'u8[16384]{0}', space=vmem, size = 0x4000, scoped, tag = 'input window, operand 4, single buffered']
    #allocation9 [shape = 's32[1]{0}', space=sflag, size = 0x4, scoped, tag = 'scoped memory for tpu_custom_call.1']
    #allocation10 [shape = 'u8[512]{0}', space=vmem, size = 0x400, scoped, tag = 'input window, operand 5, single buffered']
    #allocation11 [shape = 'u8[4096]{0}', space=vmem, size = 0x1000, scoped, tag = 'output window, operand 0']
    %11 = vsyncpa [#allocation3], 0
    %s12 = scalar_lea.sflag [#allocation3], 1
    %13 = vsyncpa %s12, 0
    %14 = vsyncpa [#allocation6], 0
    %15 = vsyncpa [#allocation9], 0
    %16 = vsyncpa [#allocation4], 0
    %s17 = scalar_lea.sflag [#allocation4], 1
    %18 = vsyncpa %s17, 0
    loop: start=0, step=1, limit=6
    $region2: #{tpu_custom_call.1} parent=1 // loop_pre_header
      _
    $region3: #{tpu_custom_call.1} parent=1 // loop_header
      %s20 = sphi 0, %s24
      %p21 = scmp.ge.s32.totalorder %s20, 6
      %s30 = sphi 0, %s32
      %s33 = sphi 0, %s30
      %s34 = sphi 0, %s33
      %s50 = sphi 0, %s34
      %s54 = sphi 0, %s54
      %s56 = sphi 0, %s54
      %s57 = sphi 0, %s56
      %s71 = sphi 0, %s57
      %s75 = sphi 0, %s75
      %s77 = sphi 0, %s75
      %s78 = sphi 0, %s77
      %s92 = sphi 0, %s78
      %s96 = sphi 0, %s96
      %s98 = sphi 0, %s96
      %s99 = sphi 0, %s98
      %s113 = sphi 0, %s99
      %s117 = sphi 0, %s117
      %s119 = sphi 0, %s117
      %s120 = sphi 0, %s119
      %s134 = sphi 0, %s120
      %s138 = sphi 0, %s138
      %s140 = sphi 0, %s138
      %s141 = sphi 0, %s140
      %s155 = sphi 0, %s141
      %s161 = sphi 0, %s163
      %s164 = sphi 0, %s161
      %s165 = sphi 0, %s164
      %s181 = sphi 0, %s165
    $region4: #{tpu_custom_call.1} parent=1 // loop_header_branch
      %23 = sbr.rel (%p21) target = $region8
    $region5: #{tpu_custom_call.1} parent=1 // loop_body
      %s25 = ssub.s32 %s20, 1
      %s26 = ssub.s32 %s20, 2
      %s27 = sadd.s32 %s20, 1
      %s28 = ssub.s32 %s20, %s27
      %p29 = scmp.eq.s32.totalorder %s28, 0
      %s31 = sadd.s32 %s30, 1
      %s32 = scalar_select %p29, %s30, %s31
      %p35 = pneg %p29
      %p36 = scmp.eq.s32.totalorder %s20, 3
      %p37 = por %p35, %p36
      %p38 = scmp.ne.s32.totalorder %s30, %s33
      %p39 = scmp.eq.s32.totalorder %s20, 0
      %p40 = por %p38, %p39
      %p41 = scmp.ne.s32.totalorder %s30, %s33
      %p42 = scmp.eq.s32.totalorder %s25, 3
      %p43 = por %p41, %p42
      %p44 = scmp.ne.s32.totalorder %s33, %s34
      %p45 = scmp.eq.s32.totalorder %s25, 0
      %p46 = por %p44, %p45
      %p47 = scmp.ne.s32.totalorder %s33, %s34
      %p48 = scmp.eq.s32.totalorder %s26, 3
      %p49 = por %p47, %p48
      %p51 = scmp.ne.s32.totalorder %s34, %s50
      %p52 = scmp.eq.s32.totalorder %s26, 0
      %p53 = por %p51, %p52
      %s55 = sadd.s32 %s54, 1
      %p58 = scmp.eq.s32.totalorder %s20, 3
      %p59 = scmp.ne.s32.totalorder %s54, %s56
      %p60 = scmp.eq.s32.totalorder %s20, 0
      %p61 = por %p59, %p60
      %p62 = scmp.ne.s32.totalorder %s54, %s56
      %p63 = scmp.eq.s32.totalorder %s25, 3
      %p64 = por %p62, %p63
      %p65 = scmp.ne.s32.totalorder %s56, %s57
      %p66 = scmp.eq.s32.totalorder %s25, 0
      %p67 = por %p65, %p66
      %p68 = scmp.ne.s32.totalorder %s56, %s57
      %p69 = scmp.eq.s32.totalorder %s26, 3
      %p70 = por %p68, %p69
      %p72 = scmp.ne.s32.totalorder %s57, %s71
      %p73 = scmp.eq.s32.totalorder %s26, 0
      %p74 = por %p72, %p73
      %s76 = sadd.s32 %s75, 1
      %p79 = scmp.eq.s32.totalorder %s20, 3
      %p80 = scmp.ne.s32.totalorder %s75, %s77
      %p81 = scmp.eq.s32.totalorder %s20, 0
      %p82 = por %p80, %p81
      %p83 = scmp.ne.s32.totalorder %s75, %s77
      %p84 = scmp.eq.s32.totalorder %s25, 3
      %p85 = por %p83, %p84
      %p86 = scmp.ne.s32.totalorder %s77, %s78
      %p87 = scmp.eq.s32.totalorder %s25, 0
      %p88 = por %p86, %p87
      %p89 = scmp.ne.s32.totalorder %s77, %s78
      %p90 = scmp.eq.s32.totalorder %s26, 3
      %p91 = por %p89, %p90
      %p93 = scmp.ne.s32.totalorder %s78, %s92
      %p94 = scmp.eq.s32.totalorder %s26, 0
      %p95 = por %p93, %p94
      %s97 = sadd.s32 %s96, 1
      %p100 = scmp.eq.s32.totalorder %s20, 3
      %p101 = scmp.ne.s32.totalorder %s96, %s98
      %p102 = scmp.eq.s32.totalorder %s20, 0
      %p103 = por %p101, %p102
      %p104 = scmp.ne.s32.totalorder %s96, %s98
      %p105 = scmp.eq.s32.totalorder %s25, 3
      %p106 = por %p104, %p105
      %p107 = scmp.ne.s32.totalorder %s98, %s99
      %p108 = scmp.eq.s32.totalorder %s25, 0
      %p109 = por %p107, %p108
      %p110 = scmp.ne.s32.totalorder %s98, %s99
      %p111 = scmp.eq.s32.totalorder %s26, 3
      %p112 = por %p110, %p111
      %p114 = scmp.ne.s32.totalorder %s99, %s113
      %p115 = scmp.eq.s32.totalorder %s26, 0
      %p116 = por %p114, %p115
      %s118 = sadd.s32 %s117, 1
      %p121 = scmp.eq.s32.totalorder %s20, 3
      %p122 = scmp.ne.s32.totalorder %s117, %s119
      %p123 = scmp.eq.s32.totalorder %s20, 0
      %p124 = por %p122, %p123
      %p125 = scmp.ne.s32.totalorder %s117, %s119
      %p126 = scmp.eq.s32.totalorder %s25, 3
      %p127 = por %p125, %p126
      %p128 = scmp.ne.s32.totalorder %s119, %s120
      %p129 = scmp.eq.s32.totalorder %s25, 0
      %p130 = por %p128, %p129
      %p131 = scmp.ne.s32.totalorder %s119, %s120
      %p132 = scmp.eq.s32.totalorder %s26, 3
      %p133 = por %p131, %p132
      %p135 = scmp.ne.s32.totalorder %s120, %s134
      %p136 = scmp.eq.s32.totalorder %s26, 0
      %p137 = por %p135, %p136
      %s139 = sadd.s32 %s138, 1
      %p142 = scmp.eq.s32.totalorder %s20, 3
      %p143 = scmp.ne.s32.totalorder %s138, %s140
      %p144 = scmp.eq.s32.totalorder %s20, 0
      %p145 = por %p143, %p144
      %p146 = scmp.ne.s32.totalorder %s138, %s140
      %p147 = scmp.eq.s32.totalorder %s25, 3
      %p148 = por %p146, %p147
      %p149 = scmp.ne.s32.totalorder %s140, %s141
      %p150 = scmp.eq.s32.totalorder %s25, 0
      %p151 = por %p149, %p150
      %p152 = scmp.ne.s32.totalorder %s140, %s141
      %p153 = scmp.eq.s32.totalorder %s26, 3
      %p154 = por %p152, %p153
      %p156 = scmp.ne.s32.totalorder %s141, %s155
      %p157 = scmp.eq.s32.totalorder %s26, 0
      %p158 = por %p156, %p157
      %s159 = ssub.s32 %s20, %s27
      %p160 = scmp.eq.s32.totalorder %s159, 0
      %s162 = sadd.s32 %s161, 1
      %s163 = scalar_select %p160, %s161, %s162
      %p166 = pneg %p160
      %p167 = scmp.eq.s32.totalorder %s20, 3
      %p168 = por %p166, %p167
      %p169 = scmp.ne.s32.totalorder %s161, %s164
      %p170 = scmp.eq.s32.totalorder %s20, 0
      %p171 = por %p169, %p170
      %p172 = scmp.ne.s32.totalorder %s161, %s164
      %p173 = scmp.eq.s32.totalorder %s25, 3
      %p174 = por %p172, %p173
      %p175 = scmp.ne.s32.totalorder %s164, %s165
      %p176 = scmp.eq.s32.totalorder %s25, 0
      %p177 = por %p175, %p176
      %p178 = scmp.ne.s32.totalorder %s164, %s165
      %p179 = scmp.eq.s32.totalorder %s26, 3
      %p180 = por %p178, %p179
      %p182 = scmp.ne.s32.totalorder %s165, %s181
      %p183 = scmp.eq.s32.totalorder %s26, 0
      %p184 = por %p182, %p183
      %p185 = scmp.le.s32.totalorder 1, %s20
      %p186 = scmp.lt.s32.totalorder %s20, 5
      %p187 = pnand %p185, %p186
      %p188 = pneg %p187
      // Predicated region
      $region9: #{tpu_custom_call.1} parent=5 // pred_check
        _
      $region10: #{tpu_custom_call.1} parent=5 // pred_check_branch
        %190 = sbr.rel (%p187) target = $region12
      $region11: #{tpu_custom_call.1} parent=5 // pred_region
        %s191 = ssub.s32 %s20, 1
        // Predicated region
        $region13: #{tpu_custom_call.1} parent=11 // pred_check
          %p192 = pneg %p67
        $region14: #{tpu_custom_call.1} parent=11 // pred_check_branch
          %194 = sbr.rel (%p192) target = $region16
        $region15: #{tpu_custom_call.1} parent=11 // pred_region
          %s196 = ssub.s32 256, 256
          %197 = vsyncadd [#allocation6], %s196
          %s199 = sshll.u32 [#allocation5], 4
          %s200 = int_to_ptr.vmem [resolvable:$true] %s199
          %202 = dma.hbm_to_vmem [thread:$0]  %s1, 256, %s200, [#allocation6]
        $region16: #{tpu_custom_call.1} parent=11 // pred_fallthru
          _
        // Predicated region
        $region17: #{tpu_custom_call.1} parent=11 // pred_check
          %p203 = pneg %p88
        $region18: #{tpu_custom_call.1} parent=11 // pred_check_branch
          %205 = sbr.rel (%p203) target = $region20
        $region19: #{tpu_custom_call.1} parent=11 // pred_region
          _
        $region20: #{tpu_custom_call.1} parent=11 // pred_fallthru
          _
        // Predicated region
        $region21: #{tpu_custom_call.1} parent=11 // pred_check
          %p206 = pneg %p109
        $region22: #{tpu_custom_call.1} parent=11 // pred_check_branch
          %208 = sbr.rel (%p206) target = $region24
        $region23: #{tpu_custom_call.1} parent=11 // pred_region
          %s210 = ssub.s32 16, 16
          %211 = vsyncadd [#allocation6], %s210
          %s213 = sshll.u32 [#allocation7], 4
          %s214 = int_to_ptr.vmem [resolvable:$true] %s213
          %216 = dma.hbm_to_vmem [thread:$0]  %s3, 16, %s214, [#allocation6]
        $region24: #{tpu_custom_call.1} parent=11 // pred_fallthru
          _
        // Predicated region
        $region25: #{tpu_custom_call.1} parent=11 // pred_check
          %p217 = pneg %p130
        $region26: #{tpu_custom_call.1} parent=11 // pred_check_branch
          %219 = sbr.rel (%p217) target = $region28
        $region27: #{tpu_custom_call.1} parent=11 // pred_region
          %s221 = ssub.s32 512, 512
          %222 = vsyncadd [#allocation9], %s221
          %s223 = sshll.u32 [#allocation8], 4
          %s224 = int_to_ptr.vmem [resolvable:$true] %s223
          %229 = dma.hbm_to_vmem [thread:$0]  %s4, 512, %s224, [#allocation9], 128, 128, 8
        $region28: #{tpu_custom_call.1} parent=11 // pred_fallthru
          _
        // Predicated region
        $region29: #{tpu_custom_call.1} parent=11 // pred_check
          %p230 = pneg %p151
        $region30: #{tpu_custom_call.1} parent=11 // pred_check_branch
          %232 = sbr.rel (%p230) target = $region32
        $region31: #{tpu_custom_call.1} parent=11 // pred_region
          %s234 = ssub.s32 16, 16
          %235 = vsyncadd [#allocation9], %s234
          %s237 = sshll.u32 [#allocation10], 4
          %s238 = int_to_ptr.vmem [resolvable:$true] %s237
          %240 = dma.hbm_to_vmem [thread:$0]  %s5, 16, %s238, [#allocation9]
        $region32: #{tpu_custom_call.1} parent=11 // pred_fallthru
          _
      $region12: #{tpu_custom_call.1} parent=5 // pred_fallthru
        _
      %p241 = scmp.lt.s32.totalorder %s20, 4
      // Predicated region
      $region33: #{tpu_custom_call.1} parent=5 // pred_check
        %p242 = pneg %p241
      $region34: #{tpu_custom_call.1} parent=5 // pred_check_branch
        %244 = sbr.rel (%p242) target = $region36
      $region35: #{tpu_custom_call.1} parent=5 // pred_region
        // Predicated region
        $region37: #{tpu_custom_call.1} parent=35 // pred_check
          %p245 = pneg %p40
        $region38: #{tpu_custom_call.1} parent=35 // pred_check_branch
          %247 = sbr.rel (%p245) target = $region40
        $region39: #{tpu_custom_call.1} parent=35 // pred_region
          %s248 = sand.u32 %s30, 1
          %s249 = scalar_lea.sflag [#allocation3], %s248
          %s250 = sand.u32 %s30, 1
          %s251 = smul.addr %s250, 3200
          %s252 = scalar_lea.vmem [#allocation2], %s251
          %s253 = smul.u32 50, %s20
          %s255 = ssub.s32 51200, 51200
          %256 = vsyncadd %s249, %s255
          %s257 = smul.addr %s253, 8
          %s258 = smul.addr %s257, 128
          %s259 = scalar_lea.hbm %s0, %s258
          %s260 = sshll.u32 %s252, 4
          %s261 = int_to_ptr.vmem [resolvable:$true] %s260
          %266 = dma.hbm_to_vmem [thread:$0]  %s259, 51200, %s261, %s249, 1024, 1024, 64
        $region40: #{tpu_custom_call.1} parent=35 // pred_fallthru
          _
      $region36: #{tpu_custom_call.1} parent=5 // pred_fallthru
        _
      %p267 = scmp.le.s32.totalorder 1, %s20
      %p268 = scmp.lt.s32.totalorder %s20, 5
      %p269 = pnand %p267, %p268
      %p270 = pneg %p269
      // Predicated region
      $region41: #{tpu_custom_call.1} parent=5 // pred_check
        _
      $region42: #{tpu_custom_call.1} parent=5 // pred_check_branch
        %272 = sbr.rel (%p269) target = $region44
      $region43: #{tpu_custom_call.1} parent=5 // pred_region
        %s273 = ssub.s32 %s20, 1
        %s274 = sand.u32 %s33, 1
        %s275 = scalar_lea.sflag [#allocation3], %s274
        %s276 = sand.u32 %s33, 1
        %s277 = smul.addr %s276, 3200
        %s278 = scalar_lea.vmem [#allocation2], %s277
        // Predicated region
        $region45: #{tpu_custom_call.1} parent=43 // pred_check
          %p279 = pneg %p46
        $region46: #{tpu_custom_call.1} parent=43 // pred_check_branch
          %281 = sbr.rel (%p279) target = $region48
        $region47: #{tpu_custom_call.1} parent=43 // pred_region
          %282 = dma.done %s275, 51200
        $region48: #{tpu_custom_call.1} parent=43 // pred_fallthru
          _
        // Predicated region
        $region49: #{tpu_custom_call.1} parent=43 // pred_check
          %p283 = pneg %p67
        $region50: #{tpu_custom_call.1} parent=43 // pred_check_branch
          %285 = sbr.rel (%p283) target = $region52
        $region51: #{tpu_custom_call.1} parent=43 // pred_region
          %286 = dma.done [#allocation6], 256
        $region52: #{tpu_custom_call.1} parent=43 // pred_fallthru
          _
        // Predicated region
        $region53: #{tpu_custom_call.1} parent=43 // pred_check
          %p287 = pneg %p109
        $region54: #{tpu_custom_call.1} parent=43 // pred_check_branch
          %289 = sbr.rel (%p287) target = $region56
        $region55: #{tpu_custom_call.1} parent=43 // pred_region
          %290 = dma.done [#allocation6], 16
        $region56: #{tpu_custom_call.1} parent=43 // pred_fallthru
          _
        // Predicated region
        $region57: #{tpu_custom_call.1} parent=43 // pred_check
          %p291 = pneg %p130
        $region58: #{tpu_custom_call.1} parent=43 // pred_check_branch
          %293 = sbr.rel (%p291) target = $region60
        $region59: #{tpu_custom_call.1} parent=43 // pred_region
          %294 = dma.done [#allocation9], 512
        $region60: #{tpu_custom_call.1} parent=43 // pred_fallthru
          _
        // Predicated region
        $region61: #{tpu_custom_call.1} parent=43 // pred_check
          %p295 = pneg %p151
        $region62: #{tpu_custom_call.1} parent=43 // pred_check_branch
          %297 = sbr.rel (%p295) target = $region64
        $region63: #{tpu_custom_call.1} parent=43 // pred_region
          %298 = dma.done [#allocation9], 16
        $region64: #{tpu_custom_call.1} parent=43 // pred_fallthru
          _
        %s299 = sand.u32 %s33, 1
        %s300 = scalar_lea.sflag [#allocation3], %s299
        %s301 = sand.u32 %s33, 1
        %s302 = smul.addr %s301, 3200
        %s303 = scalar_lea.vmem [#allocation2], %s302
        %p304 = pneg %p46
        %p305 = pneg %p43
        %p306 = pneg %p67
        %p307 = pneg %p64
        %p308 = pneg %p88
        %p309 = pneg %p85
        %p310 = pneg %p109
        %p311 = pneg %p106
        %p312 = pneg %p130
        %p313 = pneg %p127
        %p314 = pneg %p151
        %p315 = pneg %p148
        %p316 = pneg %p177
        %p317 = pneg %p174
        %s318 = sand.u32 %s164, 1
        %s319 = scalar_lea.sflag [#allocation4], %s318
        %s320 = sand.u32 %s164, 1
        %s321 = smul.addr %s320, 4
        %s322 = scalar_lea.vmem [#allocation11], %s321
        %s323 = smul.u32 50, %s25
        %v324 = vld [vmem:[%s278] sm:$0xff]
        %v325 = vld [vmem:[%s278 + $0x8] sm:$0xff]
        %v326 = vld [vmem:[%s278 + $0x10] sm:$0xff]
        %v327 = vld [vmem:[%s278 + $0x18] sm:$0xff]
        %v328 = vld [vmem:[%s278 + $0x20] sm:$0xff]
        %v329 = vld [vmem:[%s278 + $0x28] sm:$0xff]
        %v330 = vld [vmem:[%s278 + $0x30] sm:$0xff]
        %v331 = vld [vmem:[%s278 + $0x38] sm:$0xff]
        %v332 = vld [vmem:[%s278 + $0x40] sm:$0xff]
        %v333 = vld [vmem:[%s278 + $0x48] sm:$0xff]
        %v334 = vld [vmem:[%s278 + $0x50] sm:$0xff]
        %v335 = vld [vmem:[%s278 + $0x58] sm:$0xff]
        %v336 = vld [vmem:[%s278 + $0x60] sm:$0xff]
        %v337 = vld [vmem:[%s278 + $0x68] sm:$0xff]
        %v338 = vld [vmem:[%s278 + $0x70] sm:$0xff]
        %v339 = vld [vmem:[%s278 + $0x78] sm:$0xff]
        %v340 = vld [vmem:[%s278 + $0x80] sm:$0xff]
        %v341 = vld [vmem:[%s278 + $0x88] sm:$0xff]
        %v342 = vld [vmem:[%s278 + $0x90] sm:$0xff]
        %v343 = vld [vmem:[%s278 + $0x98] sm:$0xff]
        %v344 = vld [vmem:[%s278 + $0xa0] sm:$0xff]
        %v345 = vld [vmem:[%s278 + $0xa8] sm:$0xff]
        %v346 = vld [vmem:[%s278 + $0xb0] sm:$0xff]
        %v347 = vld [vmem:[%s278 + $0xb8] sm:$0xff]
        %v348 = vld [vmem:[%s278 + $0xc0] sm:$0xff]
        %v349 = vld [vmem:[%s278 + $0xc8] sm:$0xff]
        %v350 = vld [vmem:[%s278 + $0xd0] sm:$0xff]
        %v351 = vld [vmem:[%s278 + $0xd8] sm:$0xff]
        %v352 = vld [vmem:[%s278 + $0xe0] sm:$0xff]
        %v353 = vld [vmem:[%s278 + $0xe8] sm:$0xff]
        %v354 = vld [vmem:[%s278 + $0xf0] sm:$0xff]
        %v355 = vld [vmem:[%s278 + $0xf8] sm:$0xff]
        %v356 = vld [vmem:[%s278 + $0x100] sm:$0xff]
        %v357 = vld [vmem:[%s278 + $0x108] sm:$0xff]
        %v358 = vld [vmem:[%s278 + $0x110] sm:$0xff]
        %v359 = vld [vmem:[%s278 + $0x118] sm:$0xff]
        %v360 = vld [vmem:[%s278 + $0x120] sm:$0xff]
        %v361 = vld [vmem:[%s278 + $0x128] sm:$0xff]
        %v362 = vld [vmem:[%s278 + $0x130] sm:$0xff]
        %v363 = vld [vmem:[%s278 + $0x138] sm:$0xff]
        %v364 = vld [vmem:[%s278 + $0x140] sm:$0xff]
        %v365 = vld [vmem:[%s278 + $0x148] sm:$0xff]
        %v366 = vld [vmem:[%s278 + $0x150] sm:$0xff]
        %v367 = vld [vmem:[%s278 + $0x158] sm:$0xff]
        %v368 = vld [vmem:[%s278 + $0x160] sm:$0xff]
        %v369 = vld [vmem:[%s278 + $0x168] sm:$0xff]
        %v370 = vld [vmem:[%s278 + $0x170] sm:$0xff]
        %v371 = vld [vmem:[%s278 + $0x178] sm:$0xff]
        %v372 = vld [vmem:[%s278 + $0x180] sm:$0xff]
        %v373 = vld [vmem:[%s278 + $0x188] sm:$0xff]
        %v374 = vld [vmem:[%s278 + $0x190] sm:$0xff]
        %v375 = vld [vmem:[%s278 + $0x198] sm:$0xff]
        %v376 = vld [vmem:[%s278 + $0x1a0] sm:$0xff]
        %v377 = vld [vmem:[%s278 + $0x1a8] sm:$0xff]
        %v378 = vld [vmem:[%s278 + $0x1b0] sm:$0xff]
        %v379 = vld [vmem:[%s278 + $0x1b8] sm:$0xff]
        %v380 = vld [vmem:[%s278 + $0x1c0] sm:$0xff]
        %v381 = vld [vmem:[%s278 + $0x1c8] sm:$0xff]
        %v382 = vld [vmem:[%s278 + $0x1d0] sm:$0xff]
        %v383 = vld [vmem:[%s278 + $0x1d8] sm:$0xff]
        %v384 = vld [vmem:[%s278 + $0x1e0] sm:$0xff]
        %v385 = vld [vmem:[%s278 + $0x1e8] sm:$0xff]
        %v386 = vld [vmem:[%s278 + $0x1f0] sm:$0xff]
        %v387 = vld [vmem:[%s278 + $0x1f8] sm:$0xff]
        %v388 = vld [vmem:[%s278 + $0x200] sm:$0xff]
        %v389 = vld [vmem:[%s278 + $0x208] sm:$0xff]
        %v390 = vld [vmem:[%s278 + $0x210] sm:$0xff]
        %v391 = vld [vmem:[%s278 + $0x218] sm:$0xff]
        %v392 = vld [vmem:[%s278 + $0x220] sm:$0xff]
        %v393 = vld [vmem:[%s278 + $0x228] sm:$0xff]
        %v394 = vld [vmem:[%s278 + $0x230] sm:$0xff]
        %v395 = vld [vmem:[%s278 + $0x238] sm:$0xff]
        %v396 = vld [vmem:[%s278 + $0x240] sm:$0xff]
        %v397 = vld [vmem:[%s278 + $0x248] sm:$0xff]
        %v398 = vld [vmem:[%s278 + $0x250] sm:$0xff]
        %v399 = vld [vmem:[%s278 + $0x258] sm:$0xff]
        %v400 = vld [vmem:[%s278 + $0x260] sm:$0xff]
        %v401 = vld [vmem:[%s278 + $0x268] sm:$0xff]
        %v402 = vld [vmem:[%s278 + $0x270] sm:$0xff]
        %v403 = vld [vmem:[%s278 + $0x278] sm:$0xff]
        %v404 = vld [vmem:[%s278 + $0x280] sm:$0xff]
        %v405 = vld [vmem:[%s278 + $0x288] sm:$0xff]
        %v406 = vld [vmem:[%s278 + $0x290] sm:$0xff]
        %v407 = vld [vmem:[%s278 + $0x298] sm:$0xff]
        %v408 = vld [vmem:[%s278 + $0x2a0] sm:$0xff]
        %v409 = vld [vmem:[%s278 + $0x2a8] sm:$0xff]
        %v410 = vld [vmem:[%s278 + $0x2b0] sm:$0xff]
        %v411 = vld [vmem:[%s278 + $0x2b8] sm:$0xff]
        %v412 = vld [vmem:[%s278 + $0x2c0] sm:$0xff]
        %v413 = vld [vmem:[%s278 + $0x2c8] sm:$0xff]
        %v414 = vld [vmem:[%s278 + $0x2d0] sm:$0xff]
        %v415 = vld [vmem:[%s278 + $0x2d8] sm:$0xff]
        %v416 = vld [vmem:[%s278 + $0x2e0] sm:$0xff]
        %v417 = vld [vmem:[%s278 + $0x2e8] sm:$0xff]
        %v418 = vld [vmem:[%s278 + $0x2f0] sm:$0xff]
        %v419 = vld [vmem:[%s278 + $0x2f8] sm:$0xff]
        %v420 = vld [vmem:[%s278 + $0x300] sm:$0xff]
        %v421 = vld [vmem:[%s278 + $0x308] sm:$0xff]
        %v422 = vld [vmem:[%s278 + $0x310] sm:$0xff]
        %v423 = vld [vmem:[%s278 + $0x318] sm:$0xff]
        %v424 = vld [vmem:[%s278 + $0x320] sm:$0xff]
        %v425 = vld [vmem:[%s278 + $0x328] sm:$0xff]
        %v426 = vld [vmem:[%s278 + $0x330] sm:$0xff]
        %v427 = vld [vmem:[%s278 + $0x338] sm:$0xff]
        %v428 = vld [vmem:[%s278 + $0x340] sm:$0xff]
        %v429 = vld [vmem:[%s278 + $0x348] sm:$0xff]
        %v430 = vld [vmem:[%s278 + $0x350] sm:$0xff]
        %v431 = vld [vmem:[%s278 + $0x358] sm:$0xff]
        %v432 = vld [vmem:[%s278 + $0x360] sm:$0xff]
        %v433 = vld [vmem:[%s278 + $0x368] sm:$0xff]
        %v434 = vld [vmem:[%s278 + $0x370] sm:$0xff]
        %v435 = vld [vmem:[%s278 + $0x378] sm:$0xff]
        %v436 = vld [vmem:[%s278 + $0x380] sm:$0xff]
        %v437 = vld [vmem:[%s278 + $0x388] sm:$0xff]
        %v438 = vld [vmem:[%s278 + $0x390] sm:$0xff]
        %v439 = vld [vmem:[%s278 + $0x398] sm:$0xff]
        %v440 = vld [vmem:[%s278 + $0x3a0] sm:$0xff]
        %v441 = vld [vmem:[%s278 + $0x3a8] sm:$0xff]
        %v442 = vld [vmem:[%s278 + $0x3b0] sm:$0xff]
        %v443 = vld [vmem:[%s278 + $0x3b8] sm:$0xff]
        %v444 = vld [vmem:[%s278 + $0x3c0] sm:$0xff]
        %v445 = vld [vmem:[%s278 + $0x3c8] sm:$0xff]
        %v446 = vld [vmem:[%s278 + $0x3d0] sm:$0xff]
        %v447 = vld [vmem:[%s278 + $0x3d8] sm:$0xff]
        %v448 = vld [vmem:[%s278 + $0x3e0] sm:$0xff]
        %v449 = vld [vmem:[%s278 + $0x3e8] sm:$0xff]
        %v450 = vld [vmem:[%s278 + $0x3f0] sm:$0xff]
        %v451 = vld [vmem:[%s278 + $0x3f8] sm:$0xff]
        %v452 = vld [vmem:[%s278 + $0x400] sm:$0xff]
        %v453 = vld [vmem:[%s278 + $0x408] sm:$0xff]
        %v454 = vld [vmem:[%s278 + $0x410] sm:$0xff]
        %v455 = vld [vmem:[%s278 + $0x418] sm:$0xff]
        %v456 = vld [vmem:[%s278 + $0x420] sm:$0xff]
        %v457 = vld [vmem:[%s278 + $0x428] sm:$0xff]
        %v458 = vld [vmem:[%s278 + $0x430] sm:$0xff]
        %v459 = vld [vmem:[%s278 + $0x438] sm:$0xff]
        %v460 = vld [vmem:[%s278 + $0x440] sm:$0xff]
        %v461 = vld [vmem:[%s278 + $0x448] sm:$0xff]
        %v462 = vld [vmem:[%s278 + $0x450] sm:$0xff]
        %v463 = vld [vmem:[%s278 + $0x458] sm:$0xff]
        %v464 = vld [vmem:[%s278 + $0x460] sm:$0xff]
        %v465 = vld [vmem:[%s278 + $0x468] sm:$0xff]
        %v466 = vld [vmem:[%s278 + $0x470] sm:$0xff]
        %v467 = vld [vmem:[%s278 + $0x478] sm:$0xff]
        %v468 = vld [vmem:[%s278 + $0x480] sm:$0xff]
        %v469 = vld [vmem:[%s278 + $0x488] sm:$0xff]
        %v470 = vld [vmem:[%s278 + $0x490] sm:$0xff]
        %v471 = vld [vmem:[%s278 + $0x498] sm:$0xff]
        %v472 = vld [vmem:[%s278 + $0x4a0] sm:$0xff]
        %v473 = vld [vmem:[%s278 + $0x4a8] sm:$0xff]
        %v474 = vld [vmem:[%s278 + $0x4b0] sm:$0xff]
        %v475 = vld [vmem:[%s278 + $0x4b8] sm:$0xff]
        %v476 = vld [vmem:[%s278 + $0x4c0] sm:$0xff]
        %v477 = vld [vmem:[%s278 + $0x4c8] sm:$0xff]
        %v478 = vld [vmem:[%s278 + $0x4d0] sm:$0xff]
        %v479 = vld [vmem:[%s278 + $0x4d8] sm:$0xff]
        %v480 = vld [vmem:[%s278 + $0x4e0] sm:$0xff]
        %v481 = vld [vmem:[%s278 + $0x4e8] sm:$0xff]
        %v482 = vld [vmem:[%s278 + $0x4f0] sm:$0xff]
        %v483 = vld [vmem:[%s278 + $0x4f8] sm:$0xff]
        %v484 = vld [vmem:[%s278 + $0x500] sm:$0xff]
        %v485 = vld [vmem:[%s278 + $0x508] sm:$0xff]
        %v486 = vld [vmem:[%s278 + $0x510] sm:$0xff]
        %v487 = vld [vmem:[%s278 + $0x518] sm:$0xff]
        %v488 = vld [vmem:[%s278 + $0x520] sm:$0xff]
        %v489 = vld [vmem:[%s278 + $0x528] sm:$0xff]
        %v490 = vld [vmem:[%s278 + $0x530] sm:$0xff]
        %v491 = vld [vmem:[%s278 + $0x538] sm:$0xff]
        %v492 = vld [vmem:[%s278 + $0x540] sm:$0xff]
        %v493 = vld [vmem:[%s278 + $0x548] sm:$0xff]
        %v494 = vld [vmem:[%s278 + $0x550] sm:$0xff]
        %v495 = vld [vmem:[%s278 + $0x558] sm:$0xff]
        %v496 = vld [vmem:[%s278 + $0x560] sm:$0xff]
        %v497 = vld [vmem:[%s278 + $0x568] sm:$0xff]
        %v498 = vld [vmem:[%s278 + $0x570] sm:$0xff]
        %v499 = vld [vmem:[%s278 + $0x578] sm:$0xff]
        %v500 = vld [vmem:[%s278 + $0x580] sm:$0xff]
        %v501 = vld [vmem:[%s278 + $0x588] sm:$0xff]
        %v502 = vld [vmem:[%s278 + $0x590] sm:$0xff]
        %v503 = vld [vmem:[%s278 + $0x598] sm:$0xff]
        %v504 = vld [vmem:[%s278 + $0x5a0] sm:$0xff]
        %v505 = vld [vmem:[%s278 + $0x5a8] sm:$0xff]
        %v506 = vld [vmem:[%s278 + $0x5b0] sm:$0xff]
        %v507 = vld [vmem:[%s278 + $0x5b8] sm:$0xff]
        %v508 = vld [vmem:[%s278 + $0x5c0] sm:$0xff]
        %v509 = vld [vmem:[%s278 + $0x5c8] sm:$0xff]
        %v510 = vld [vmem:[%s278 + $0x5d0] sm:$0xff]
        %v511 = vld [vmem:[%s278 + $0x5d8] sm:$0xff]
        %v512 = vld [vmem:[%s278 + $0x5e0] sm:$0xff]
        %v513 = vld [vmem:[%s278 + $0x5e8] sm:$0xff]
        %v514 = vld [vmem:[%s278 + $0x5f0] sm:$0xff]
        %v515 = vld [vmem:[%s278 + $0x5f8] sm:$0xff]
        %v516 = vld [vmem:[%s278 + $0x600] sm:$0xff]
        %v517 = vld [vmem:[%s278 + $0x608] sm:$0xff]
        %v518 = vld [vmem:[%s278 + $0x610] sm:$0xff]
        %v519 = vld [vmem:[%s278 + $0x618] sm:$0xff]
        %v520 = vld [vmem:[%s278 + $0x620] sm:$0xff]
        %v521 = vld [vmem:[%s278 + $0x628] sm:$0xff]
        %v522 = vld [vmem:[%s278 + $0x630] sm:$0xff]
        %v523 = vld [vmem:[%s278 + $0x638] sm:$0xff]
        %v524 = vld [vmem:[%s278 + $0x640] sm:$0xff]
        %v525 = vld [vmem:[%s278 + $0x648] sm:$0xff]
        %v526 = vld [vmem:[%s278 + $0x650] sm:$0xff]
        %v527 = vld [vmem:[%s278 + $0x658] sm:$0xff]
        %v528 = vld [vmem:[%s278 + $0x660] sm:$0xff]
        %v529 = vld [vmem:[%s278 + $0x668] sm:$0xff]
        %v530 = vld [vmem:[%s278 + $0x670] sm:$0xff]
        %v531 = vld [vmem:[%s278 + $0x678] sm:$0xff]
        %v532 = vld [vmem:[%s278 + $0x680] sm:$0xff]
        %v533 = vld [vmem:[%s278 + $0x688] sm:$0xff]
        %v534 = vld [vmem:[%s278 + $0x690] sm:$0xff]
        %v535 = vld [vmem:[%s278 + $0x698] sm:$0xff]
        %v536 = vld [vmem:[%s278 + $0x6a0] sm:$0xff]
        %v537 = vld [vmem:[%s278 + $0x6a8] sm:$0xff]
        %v538 = vld [vmem:[%s278 + $0x6b0] sm:$0xff]
        %v539 = vld [vmem:[%s278 + $0x6b8] sm:$0xff]
        %v540 = vld [vmem:[%s278 + $0x6c0] sm:$0xff]
        %v541 = vld [vmem:[%s278 + $0x6c8] sm:$0xff]
        %v542 = vld [vmem:[%s278 + $0x6d0] sm:$0xff]
        %v543 = vld [vmem:[%s278 + $0x6d8] sm:$0xff]
        %v544 = vld [vmem:[%s278 + $0x6e0] sm:$0xff]
        %v545 = vld [vmem:[%s278 + $0x6e8] sm:$0xff]
        %v546 = vld [vmem:[%s278 + $0x6f0] sm:$0xff]
        %v547 = vld [vmem:[%s278 + $0x6f8] sm:$0xff]
        %v548 = vld [vmem:[%s278 + $0x700] sm:$0xff]
        %v549 = vld [vmem:[%s278 + $0x708] sm:$0xff]
        %v550 = vld [vmem:[%s278 + $0x710] sm:$0xff]
        %v551 = vld [vmem:[%s278 + $0x718] sm:$0xff]
        %v552 = vld [vmem:[%s278 + $0x720] sm:$0xff]
        %v553 = vld [vmem:[%s278 + $0x728] sm:$0xff]
        %v554 = vld [vmem:[%s278 + $0x730] sm:$0xff]
        %v555 = vld [vmem:[%s278 + $0x738] sm:$0xff]
        %v556 = vld [vmem:[%s278 + $0x740] sm:$0xff]
        %v557 = vld [vmem:[%s278 + $0x748] sm:$0xff]
        %v558 = vld [vmem:[%s278 + $0x750] sm:$0xff]
        %v559 = vld [vmem:[%s278 + $0x758] sm:$0xff]
        %v560 = vld [vmem:[%s278 + $0x760] sm:$0xff]
        %v561 = vld [vmem:[%s278 + $0x768] sm:$0xff]
        %v562 = vld [vmem:[%s278 + $0x770] sm:$0xff]
        %v563 = vld [vmem:[%s278 + $0x778] sm:$0xff]
        %v564 = vld [vmem:[%s278 + $0x780] sm:$0xff]
        %v565 = vld [vmem:[%s278 + $0x788] sm:$0xff]
        %v566 = vld [vmem:[%s278 + $0x790] sm:$0xff]
        %v567 = vld [vmem:[%s278 + $0x798] sm:$0xff]
        %v568 = vld [vmem:[%s278 + $0x7a0] sm:$0xff]
        %v569 = vld [vmem:[%s278 + $0x7a8] sm:$0xff]
        %v570 = vld [vmem:[%s278 + $0x7b0] sm:$0xff]
        %v571 = vld [vmem:[%s278 + $0x7b8] sm:$0xff]
        %v572 = vld [vmem:[%s278 + $0x7c0] sm:$0xff]
        %v573 = vld [vmem:[%s278 + $0x7c8] sm:$0xff]
        %v574 = vld [vmem:[%s278 + $0x7d0] sm:$0xff]
        %v575 = vld [vmem:[%s278 + $0x7d8] sm:$0xff]
        %v576 = vld [vmem:[%s278 + $0x7e0] sm:$0xff]
        %v577 = vld [vmem:[%s278 + $0x7e8] sm:$0xff]
        %v578 = vld [vmem:[%s278 + $0x7f0] sm:$0xff]
        %v579 = vld [vmem:[%s278 + $0x7f8] sm:$0xff]
        %v580 = vld [vmem:[%s278 + $0x800] sm:$0xff]
        %v581 = vld [vmem:[%s278 + $0x808] sm:$0xff]
        %v582 = vld [vmem:[%s278 + $0x810] sm:$0xff]
        %v583 = vld [vmem:[%s278 + $0x818] sm:$0xff]
        %v584 = vld [vmem:[%s278 + $0x820] sm:$0xff]
        %v585 = vld [vmem:[%s278 + $0x828] sm:$0xff]
        %v586 = vld [vmem:[%s278 + $0x830] sm:$0xff]
        %v587 = vld [vmem:[%s278 + $0x838] sm:$0xff]
        %v588 = vld [vmem:[%s278 + $0x840] sm:$0xff]
        %v589 = vld [vmem:[%s278 + $0x848] sm:$0xff]
        %v590 = vld [vmem:[%s278 + $0x850] sm:$0xff]
        %v591 = vld [vmem:[%s278 + $0x858] sm:$0xff]
        %v592 = vld [vmem:[%s278 + $0x860] sm:$0xff]
        %v593 = vld [vmem:[%s278 + $0x868] sm:$0xff]
        %v594 = vld [vmem:[%s278 + $0x870] sm:$0xff]
        %v595 = vld [vmem:[%s278 + $0x878] sm:$0xff]
        %v596 = vld [vmem:[%s278 + $0x880] sm:$0xff]
        %v597 = vld [vmem:[%s278 + $0x888] sm:$0xff]
        %v598 = vld [vmem:[%s278 + $0x890] sm:$0xff]
        %v599 = vld [vmem:[%s278 + $0x898] sm:$0xff]
        %v600 = vld [vmem:[%s278 + $0x8a0] sm:$0xff]
        %v601 = vld [vmem:[%s278 + $0x8a8] sm:$0xff]
        %v602 = vld [vmem:[%s278 + $0x8b0] sm:$0xff]
        %v603 = vld [vmem:[%s278 + $0x8b8] sm:$0xff]
        %v604 = vld [vmem:[%s278 + $0x8c0] sm:$0xff]
        %v605 = vld [vmem:[%s278 + $0x8c8] sm:$0xff]
        %v606 = vld [vmem:[%s278 + $0x8d0] sm:$0xff]
        %v607 = vld [vmem:[%s278 + $0x8d8] sm:$0xff]
        %v608 = vld [vmem:[%s278 + $0x8e0] sm:$0xff]
        %v609 = vld [vmem:[%s278 + $0x8e8] sm:$0xff]
        %v610 = vld [vmem:[%s278 + $0x8f0] sm:$0xff]
        %v611 = vld [vmem:[%s278 + $0x8f8] sm:$0xff]
        %v612 = vld [vmem:[%s278 + $0x900] sm:$0xff]
        %v613 = vld [vmem:[%s278 + $0x908] sm:$0xff]
        %v614 = vld [vmem:[%s278 + $0x910] sm:$0xff]
        %v615 = vld [vmem:[%s278 + $0x918] sm:$0xff]
        %v616 = vld [vmem:[%s278 + $0x920] sm:$0xff]
        %v617 = vld [vmem:[%s278 + $0x928] sm:$0xff]
        %v618 = vld [vmem:[%s278 + $0x930] sm:$0xff]
        %v619 = vld [vmem:[%s278 + $0x938] sm:$0xff]
        %v620 = vld [vmem:[%s278 + $0x940] sm:$0xff]
        %v621 = vld [vmem:[%s278 + $0x948] sm:$0xff]
        %v622 = vld [vmem:[%s278 + $0x950] sm:$0xff]
        %v623 = vld [vmem:[%s278 + $0x958] sm:$0xff]
        %v624 = vld [vmem:[%s278 + $0x960] sm:$0xff]
        %v625 = vld [vmem:[%s278 + $0x968] sm:$0xff]
        %v626 = vld [vmem:[%s278 + $0x970] sm:$0xff]
        %v627 = vld [vmem:[%s278 + $0x978] sm:$0xff]
        %v628 = vld [vmem:[%s278 + $0x980] sm:$0xff]
        %v629 = vld [vmem:[%s278 + $0x988] sm:$0xff]
        %v630 = vld [vmem:[%s278 + $0x990] sm:$0xff]
        %v631 = vld [vmem:[%s278 + $0x998] sm:$0xff]
        %v632 = vld [vmem:[%s278 + $0x9a0] sm:$0xff]
        %v633 = vld [vmem:[%s278 + $0x9a8] sm:$0xff]
        %v634 = vld [vmem:[%s278 + $0x9b0] sm:$0xff]
        %v635 = vld [vmem:[%s278 + $0x9b8] sm:$0xff]
        %v636 = vld [vmem:[%s278 + $0x9c0] sm:$0xff]
        %v637 = vld [vmem:[%s278 + $0x9c8] sm:$0xff]
        %v638 = vld [vmem:[%s278 + $0x9d0] sm:$0xff]
        %v639 = vld [vmem:[%s278 + $0x9d8] sm:$0xff]
        %v640 = vld [vmem:[%s278 + $0x9e0] sm:$0xff]
        %v641 = vld [vmem:[%s278 + $0x9e8] sm:$0xff]
        %v642 = vld [vmem:[%s278 + $0x9f0] sm:$0xff]
        %v643 = vld [vmem:[%s278 + $0x9f8] sm:$0xff]
        %v644 = vld [vmem:[%s278 + $0xa00] sm:$0xff]
        %v645 = vld [vmem:[%s278 + $0xa08] sm:$0xff]
        %v646 = vld [vmem:[%s278 + $0xa10] sm:$0xff]
        %v647 = vld [vmem:[%s278 + $0xa18] sm:$0xff]
        %v648 = vld [vmem:[%s278 + $0xa20] sm:$0xff]
        %v649 = vld [vmem:[%s278 + $0xa28] sm:$0xff]
        %v650 = vld [vmem:[%s278 + $0xa30] sm:$0xff]
        %v651 = vld [vmem:[%s278 + $0xa38] sm:$0xff]
        %v652 = vld [vmem:[%s278 + $0xa40] sm:$0xff]
        %v653 = vld [vmem:[%s278 + $0xa48] sm:$0xff]
        %v654 = vld [vmem:[%s278 + $0xa50] sm:$0xff]
        %v655 = vld [vmem:[%s278 + $0xa58] sm:$0xff]
        %v656 = vld [vmem:[%s278 + $0xa60] sm:$0xff]
        %v657 = vld [vmem:[%s278 + $0xa68] sm:$0xff]
        %v658 = vld [vmem:[%s278 + $0xa70] sm:$0xff]
        %v659 = vld [vmem:[%s278 + $0xa78] sm:$0xff]
        %v660 = vld [vmem:[%s278 + $0xa80] sm:$0xff]
        %v661 = vld [vmem:[%s278 + $0xa88] sm:$0xff]
        %v662 = vld [vmem:[%s278 + $0xa90] sm:$0xff]
        %v663 = vld [vmem:[%s278 + $0xa98] sm:$0xff]
        %v664 = vld [vmem:[%s278 + $0xaa0] sm:$0xff]
        %v665 = vld [vmem:[%s278 + $0xaa8] sm:$0xff]
        %v666 = vld [vmem:[%s278 + $0xab0] sm:$0xff]
        %v667 = vld [vmem:[%s278 + $0xab8] sm:$0xff]
        %v668 = vld [vmem:[%s278 + $0xac0] sm:$0xff]
        %v669 = vld [vmem:[%s278 + $0xac8] sm:$0xff]
        %v670 = vld [vmem:[%s278 + $0xad0] sm:$0xff]
        %v671 = vld [vmem:[%s278 + $0xad8] sm:$0xff]
        %v672 = vld [vmem:[%s278 + $0xae0] sm:$0xff]
        %v673 = vld [vmem:[%s278 + $0xae8] sm:$0xff]
        %v674 = vld [vmem:[%s278 + $0xaf0] sm:$0xff]
        %v675 = vld [vmem:[%s278 + $0xaf8] sm:$0xff]
        %v676 = vld [vmem:[%s278 + $0xb00] sm:$0xff]
        %v677 = vld [vmem:[%s278 + $0xb08] sm:$0xff]
        %v678 = vld [vmem:[%s278 + $0xb10] sm:$0xff]
        %v679 = vld [vmem:[%s278 + $0xb18] sm:$0xff]
        %v680 = vld [vmem:[%s278 + $0xb20] sm:$0xff]
        %v681 = vld [vmem:[%s278 + $0xb28] sm:$0xff]
        %v682 = vld [vmem:[%s278 + $0xb30] sm:$0xff]
        %v683 = vld [vmem:[%s278 + $0xb38] sm:$0xff]
        %v684 = vld [vmem:[%s278 + $0xb40] sm:$0xff]
        %v685 = vld [vmem:[%s278 + $0xb48] sm:$0xff]
        %v686 = vld [vmem:[%s278 + $0xb50] sm:$0xff]
        %v687 = vld [vmem:[%s278 + $0xb58] sm:$0xff]
        %v688 = vld [vmem:[%s278 + $0xb60] sm:$0xff]
        %v689 = vld [vmem:[%s278 + $0xb68] sm:$0xff]
        %v690 = vld [vmem:[%s278 + $0xb70] sm:$0xff]
        %v691 = vld [vmem:[%s278 + $0xb78] sm:$0xff]
        %v692 = vld [vmem:[%s278 + $0xb80] sm:$0xff]
        %v693 = vld [vmem:[%s278 + $0xb88] sm:$0xff]
        %v694 = vld [vmem:[%s278 + $0xb90] sm:$0xff]
        %v695 = vld [vmem:[%s278 + $0xb98] sm:$0xff]
        %v696 = vld [vmem:[%s278 + $0xba0] sm:$0xff]
        %v697 = vld [vmem:[%s278 + $0xba8] sm:$0xff]
        %v698 = vld [vmem:[%s278 + $0xbb0] sm:$0xff]
        %v699 = vld [vmem:[%s278 + $0xbb8] sm:$0xff]
        %v700 = vld [vmem:[%s278 + $0xbc0] sm:$0xff]
        %v701 = vld [vmem:[%s278 + $0xbc8] sm:$0xff]
        %v702 = vld [vmem:[%s278 + $0xbd0] sm:$0xff]
        %v703 = vld [vmem:[%s278 + $0xbd8] sm:$0xff]
        %v704 = vld [vmem:[%s278 + $0xbe0] sm:$0xff]
        %v705 = vld [vmem:[%s278 + $0xbe8] sm:$0xff]
        %v706 = vld [vmem:[%s278 + $0xbf0] sm:$0xff]
        %v707 = vld [vmem:[%s278 + $0xbf8] sm:$0xff]
        %v708 = vld [vmem:[%s278 + $0xc00] sm:$0xff]
        %v709 = vld [vmem:[%s278 + $0xc08] sm:$0xff]
        %v710 = vld [vmem:[%s278 + $0xc10] sm:$0xff]
        %v711 = vld [vmem:[%s278 + $0xc18] sm:$0xff]
        %v712 = vld [vmem:[%s278 + $0xc20] sm:$0xff]
        %v713 = vld [vmem:[%s278 + $0xc28] sm:$0xff]
        %v714 = vld [vmem:[%s278 + $0xc30] sm:$0xff]
        %v715 = vld [vmem:[%s278 + $0xc38] sm:$0xff]
        %v716 = vld [vmem:[%s278 + $0xc40] sm:$0xff]
        %v717 = vld [vmem:[%s278 + $0xc48] sm:$0xff]
        %v718 = vld [vmem:[%s278 + $0xc50] sm:$0xff]
        %v719 = vld [vmem:[%s278 + $0xc58] sm:$0xff]
        %v720 = vld [vmem:[%s278 + $0xc60] sm:$0xff]
        %v721 = vld [vmem:[%s278 + $0xc68] sm:$0xff]
        %v722 = vld [vmem:[%s278 + $0xc70] sm:$0xff]
        %v723 = vld [vmem:[%s278 + $0xc78] sm:$0xff]
        %v724 = vld [vmem:[%s2] sm:$0xff]
        %v725 = vld [vmem:[%s2 + $0x8] sm:$0xff]
        %v726 = vld [vmem:[%s2 + $0x10] sm:$0xff]
        %v727 = vld [vmem:[%s2 + $0x18] sm:$0xff]
        %v728 = vld [vmem:[%s2 + $0x20] sm:$0xff]
        %v729 = vld [vmem:[%s2 + $0x28] sm:$0xff]
        %v730 = vld [vmem:[%s2 + $0x30] sm:$0xff]
        %v731 = vld [vmem:[%s2 + $0x38] sm:$0xff]
        %v732 = vld [vmem:[%s2 + $0x40] sm:$0xff]
        %v733 = vld [vmem:[%s2 + $0x48] sm:$0xff]
        %v734 = vld [vmem:[%s2 + $0x50] sm:$0xff]
        %v735 = vld [vmem:[%s2 + $0x58] sm:$0xff]
        %v736 = vld [vmem:[%s2 + $0x60] sm:$0xff]
        %v737 = vld [vmem:[%s2 + $0x68] sm:$0xff]
        %v738 = vld [vmem:[%s2 + $0x70] sm:$0xff]
        %v739 = vld [vmem:[%s2 + $0x78] sm:$0xff]
        %v740 = vld [vmem:[%s2 + $0x80] sm:$0xff]
        %v741 = vld [vmem:[%s2 + $0x88] sm:$0xff]
        %v742 = vld [vmem:[%s2 + $0x90] sm:$0xff]
        %v743 = vld [vmem:[%s2 + $0x98] sm:$0xff]
        %v744 = vld [vmem:[%s2 + $0xa0] sm:$0xff]
        %v745 = vld [vmem:[%s2 + $0xa8] sm:$0xff]
        %v746 = vld [vmem:[%s2 + $0xb0] sm:$0xff]
        %v747 = vld [vmem:[%s2 + $0xb8] sm:$0xff]
        %v748 = vld [vmem:[%s2 + $0xc0] sm:$0xff]
        %v749 = vld [vmem:[%s2 + $0xc8] sm:$0xff]
        %v750 = vld [vmem:[%s2 + $0xd0] sm:$0xff]
        %v751 = vld [vmem:[%s2 + $0xd8] sm:$0xff]
        %v752 = vld [vmem:[%s2 + $0xe0] sm:$0xff]
        %v753 = vld [vmem:[%s2 + $0xe8] sm:$0xff]
        %v754 = vld [vmem:[%s2 + $0xf0] sm:$0xff]
        %v755 = vld [vmem:[%s2 + $0xf8] sm:$0xff]
        %v756 = vld [vmem:[%s2 + $0x100] sm:$0xff]
        %v757 = vld [vmem:[%s2 + $0x108] sm:$0xff]
        %v758 = vld [vmem:[%s2 + $0x110] sm:$0xff]
        %v759 = vld [vmem:[%s2 + $0x118] sm:$0xff]
        %v760 = vld [vmem:[%s2 + $0x120] sm:$0xff]
        %v761 = vld [vmem:[%s2 + $0x128] sm:$0xff]
        %v762 = vld [vmem:[%s2 + $0x130] sm:$0xff]
        %v763 = vld [vmem:[%s2 + $0x138] sm:$0xff]
        %v764 = vld [vmem:[%s2 + $0x140] sm:$0xff]
        %v765 = vld [vmem:[%s2 + $0x148] sm:$0xff]
        %v766 = vld [vmem:[%s2 + $0x150] sm:$0xff]
        %v767 = vld [vmem:[%s2 + $0x158] sm:$0xff]
        %v768 = vld [vmem:[%s2 + $0x160] sm:$0xff]
        %v769 = vld [vmem:[%s2 + $0x168] sm:$0xff]
        %v770 = vld [vmem:[%s2 + $0x170] sm:$0xff]
        %v771 = vld [vmem:[%s2 + $0x178] sm:$0xff]
        %v772 = vld [vmem:[%s2 + $0x180] sm:$0xff]
        %v773 = vld [vmem:[%s2 + $0x188] sm:$0xff]
        %v774 = vld [vmem:[%s2 + $0x190] sm:$0xff]
        %v775 = vld [vmem:[%s2 + $0x198] sm:$0xff]
        %v776 = vld [vmem:[%s2 + $0x1a0] sm:$0xff]
        %v777 = vld [vmem:[%s2 + $0x1a8] sm:$0xff]
        %v778 = vld [vmem:[%s2 + $0x1b0] sm:$0xff]
        %v779 = vld [vmem:[%s2 + $0x1b8] sm:$0xff]
        %v780 = vld [vmem:[%s2 + $0x1c0] sm:$0xff]
        %v781 = vld [vmem:[%s2 + $0x1c8] sm:$0xff]
        %v782 = vld [vmem:[%s2 + $0x1d0] sm:$0xff]
        %v783 = vld [vmem:[%s2 + $0x1d8] sm:$0xff]
        %v784 = vld [vmem:[%s2 + $0x1e0] sm:$0xff]
        %v785 = vld [vmem:[%s2 + $0x1e8] sm:$0xff]
        %v786 = vld [vmem:[%s2 + $0x1f0] sm:$0xff]
        %v787 = vld [vmem:[%s2 + $0x1f8] sm:$0xff]
        %v788 = vld [vmem:[%s2 + $0x200] sm:$0xff]
        %v789 = vld [vmem:[%s2 + $0x208] sm:$0xff]
        %v790 = vld [vmem:[%s2 + $0x210] sm:$0xff]
        %v791 = vld [vmem:[%s2 + $0x218] sm:$0xff]
        %v792 = vld [vmem:[%s2 + $0x220] sm:$0xff]
        %v793 = vld [vmem:[%s2 + $0x228] sm:$0xff]
        %v794 = vld [vmem:[%s2 + $0x230] sm:$0xff]
        %v795 = vld [vmem:[%s2 + $0x238] sm:$0xff]
        %v796 = vld [vmem:[%s2 + $0x240] sm:$0xff]
        %v797 = vld [vmem:[%s2 + $0x248] sm:$0xff]
        %v798 = vld [vmem:[%s2 + $0x250] sm:$0xff]
        %v799 = vld [vmem:[%s2 + $0x258] sm:$0xff]
        %v800 = vld [vmem:[%s2 + $0x260] sm:$0xff]
        %v801 = vld [vmem:[%s2 + $0x268] sm:$0xff]
        %v802 = vld [vmem:[%s2 + $0x270] sm:$0xff]
        %v803 = vld [vmem:[%s2 + $0x278] sm:$0xff]
        %v804 = vld [vmem:[%s2 + $0x280] sm:$0xff]
        %v805 = vld [vmem:[%s2 + $0x288] sm:$0xff]
        %v806 = vld [vmem:[%s2 + $0x290] sm:$0xff]
        %v807 = vld [vmem:[%s2 + $0x298] sm:$0xff]
        %v808 = vld [vmem:[%s2 + $0x2a0] sm:$0xff]
        %v809 = vld [vmem:[%s2 + $0x2a8] sm:$0xff]
        %v810 = vld [vmem:[%s2 + $0x2b0] sm:$0xff]
        %v811 = vld [vmem:[%s2 + $0x2b8] sm:$0xff]
        %v812 = vld [vmem:[%s2 + $0x2c0] sm:$0xff]
        %v813 = vld [vmem:[%s2 + $0x2c8] sm:$0xff]
        %v814 = vld [vmem:[%s2 + $0x2d0] sm:$0xff]
        %v815 = vld [vmem:[%s2 + $0x2d8] sm:$0xff]
        %v816 = vld [vmem:[%s2 + $0x2e0] sm:$0xff]
        %v817 = vld [vmem:[%s2 + $0x2e8] sm:$0xff]
        %v818 = vld [vmem:[%s2 + $0x2f0] sm:$0xff]
        %v819 = vld [vmem:[%s2 + $0x2f8] sm:$0xff]
        %v820 = vld [vmem:[%s2 + $0x300] sm:$0xff]
        %v821 = vld [vmem:[%s2 + $0x308] sm:$0xff]
        %v822 = vld [vmem:[%s2 + $0x310] sm:$0xff]
        %v823 = vld [vmem:[%s2 + $0x318] sm:$0xff]
        %v824 = vld [vmem:[%s2 + $0x320] sm:$0xff]
        %v825 = vld [vmem:[%s2 + $0x328] sm:$0xff]
        %v826 = vld [vmem:[%s2 + $0x330] sm:$0xff]
        %v827 = vld [vmem:[%s2 + $0x338] sm:$0xff]
        %v828 = vld [vmem:[%s2 + $0x340] sm:$0xff]
        %v829 = vld [vmem:[%s2 + $0x348] sm:$0xff]
        %v830 = vld [vmem:[%s2 + $0x350] sm:$0xff]
        %v831 = vld [vmem:[%s2 + $0x358] sm:$0xff]
        %v832 = vld [vmem:[%s2 + $0x360] sm:$0xff]
        %v833 = vld [vmem:[%s2 + $0x368] sm:$0xff]
        %v834 = vld [vmem:[%s2 + $0x370] sm:$0xff]
        %v835 = vld [vmem:[%s2 + $0x378] sm:$0xff]
        %v836 = vld [vmem:[%s2 + $0x380] sm:$0xff]
        %v837 = vld [vmem:[%s2 + $0x388] sm:$0xff]
        %v838 = vld [vmem:[%s2 + $0x390] sm:$0xff]
        %v839 = vld [vmem:[%s2 + $0x398] sm:$0xff]
        %v840 = vld [vmem:[%s2 + $0x3a0] sm:$0xff]
        %v841 = vld [vmem:[%s2 + $0x3a8] sm:$0xff]
        %v842 = vld [vmem:[%s2 + $0x3b0] sm:$0xff]
        %v843 = vld [vmem:[%s2 + $0x3b8] sm:$0xff]
        %v844 = vld [vmem:[%s2 + $0x3c0] sm:$0xff]
        %v845 = vld [vmem:[%s2 + $0x3c8] sm:$0xff]
        %v846 = vld [vmem:[%s2 + $0x3d0] sm:$0xff]
        %v847 = vld [vmem:[%s2 + $0x3d8] sm:$0xff]
        %v848 = vld [vmem:[%s2 + $0x3e0] sm:$0xff]
        %v849 = vld [vmem:[%s2 + $0x3e8] sm:$0xff]
        %v850 = vld [vmem:[%s2 + $0x3f0] sm:$0xff]
        %v851 = vld [vmem:[%s2 + $0x3f8] sm:$0xff]
        %v852 = vld [vmem:[#allocation7] sm:$0x1]
        %v854 = vlaneseq
        %v855 = vshrl.u32 %v854, 7
        %v856 = vsub.s32 0, %v855
        %v857 = vrot.slane %v852, %v856
        %859 = vmatprep.subr.mxu0 0.0
        %860 = vmatpush1.msra.mxu0 %v724
        %861 = vmatprep.subr.mxu0 0.0
        %862 = vmatpush1.msra.mxu0 %v725
        %863 = vmatprep.subr.mxu0 0.0
        %864 = vmatpush1.msra.mxu0 %v726
        %865 = vmatprep.subr.mxu0 0.0
        %866 = vmatpush1.msra.mxu0 %v727
        %867 = vmatprep.subr.mxu0 0.0
        %868 = vmatpush1.msra.mxu0 %v728
        %869 = vmatprep.subr.mxu0 0.0
        %870 = vmatpush1.msra.mxu0 %v729
        %871 = vmatprep.subr.mxu0 0.0
        %872 = vmatpush1.msra.mxu0 %v730
        %873 = vmatprep.subr.mxu0 0.0
        %874 = vmatpush1.msra.mxu0 %v731
        %875 = vmatprep.subr.mxu0 0.0
        %876 = vmatpush1.msra.mxu0 %v732
        %877 = vmatprep.subr.mxu0 0.0
        %878 = vmatpush1.msra.mxu0 %v733
        %879 = vmatprep.subr.mxu0 0.0
        %880 = vmatpush1.msra.mxu0 %v734
        %881 = vmatprep.subr.mxu0 0.0
        %882 = vmatpush1.msra.mxu0 %v735
        %883 = vmatprep.subr.mxu0 0.0
        %884 = vmatpush1.msra.mxu0 %v736
        %885 = vmatprep.subr.mxu0 0.0
        %886 = vmatpush1.msra.mxu0 %v737
        %887 = vmatprep.subr.mxu0 0.0
        %888 = vmatpush1.msra.mxu0 %v738
        %889 = vmatprep.subr.mxu0 0.0
        %890 = vmatpush1.msra.mxu0 %v739
        %891 = vmatprep.subr.mxu0 0.0
        %892 = vmatpush1.msra.mxu0 %v740
        %893 = vmatprep.subr.mxu0 0.0
        %894 = vmatpush1.msra.mxu0 %v741
        %895 = vmatprep.subr.mxu0 0.0
        %896 = vmatpush1.msra.mxu0 %v742
        %897 = vmatprep.subr.mxu0 0.0
        %898 = vmatpush1.msra.mxu0 %v743
        %899 = vmatprep.subr.mxu0 0.0
        %900 = vmatpush1.msra.mxu0 %v744
        %901 = vmatprep.subr.mxu0 0.0
        %902 = vmatpush1.msra.mxu0 %v745
        %903 = vmatprep.subr.mxu0 0.0
        %904 = vmatpush1.msra.mxu0 %v746
        %905 = vmatprep.subr.mxu0 0.0
        %906 = vmatpush1.msra.mxu0 %v747
        %907 = vmatprep.subr.mxu0 0.0
        %908 = vmatpush1.msra.mxu0 %v748
        %909 = vmatprep.subr.mxu0 0.0
        %910 = vmatpush1.msra.mxu0 %v749
        %911 = vmatprep.subr.mxu0 0.0
        %912 = vmatpush1.msra.mxu0 %v750
        %913 = vmatprep.subr.mxu0 0.0
        %914 = vmatpush1.msra.mxu0 %v751
        %915 = vmatprep.subr.mxu0 0.0
        %916 = vmatpush1.msra.mxu0 %v752
        %917 = vmatprep.subr.mxu0 0.0
        %918 = vmatpush1.msra.mxu0 %v753
        %919 = vmatprep.subr.mxu0 0.0
        %920 = vmatpush1.msra.mxu0 %v754
        %921 = vmatprep.subr.mxu0 0.0
        %922 = vmatpush1.msra.mxu0 %v755
        %923 = vmatprep.mubr.f32.mxu0 %v325
        %924 = vmatmul.mubr.f32.gmra.mrb[0].mxu0 %v324
        %v925 = vpop.f32.mrb[0].mxu0
        %v926 = vadd.f32 %v857, %v925
        %v927 = vpop.f32.mrb[0].mxu0
        %928 = vmatprep.mubr.f32.mxu0 %v333
        %929 = vmatmul.mubr.f32.gmra.mrb[0].mxu0 %v332
        %v930 = vpop.f32.mrb[0].mxu0
        %v931 = vadd.f32 %v857, %v930
        %v932 = vpop.f32.mrb[0].mxu0
        %933 = vmatprep.mubr.f32.mxu0 %v341
        %934 = vmatmul.mubr.f32.gmra.mrb[0].mxu0 %v340
        %v935 = vpop.f32.mrb[0].mxu0
        %v936 = vadd.f32 %v857, %v935
        %v937 = vpop.f32.mrb[0].mxu0
        %938 = vmatprep.mubr.f32.mxu0 %v349
        %939 = vmatmul.mubr.f32.gmra.mrb[0].mxu0 %v348
        %v940 = vpop.f32.mrb[0].mxu0
        %v941 = vadd.f32 %v857, %v940
        %v942 = vpop.f32.mrb[0].mxu0
        %943 = vmatprep.mubr.f32.mxu0 %v357
        %944 = vmatmul.mubr.f32.gmra.mrb[0].mxu0 %v356
        %v945 = vpop.f32.mrb[0].mxu0
        %v946 = vadd.f32 %v857, %v945
        %v947 = vpop.f32.mrb[0].mxu0
        %948 = vmatprep.mubr.f32.mxu0 %v365
        %949 = vmatmul.mubr.f32.gmra.mrb[0].mxu0 %v364
        %v950 = vpop.f32.mrb[0].mxu0
        %v951 = vadd.f32 %v857, %v950
        %v952 = vpop.f32.mrb[0].mxu0
        %953 = vmatprep.mubr.f32.mxu0 %v373
        %954 = vmatmul.mubr.f32.gmra.mrb[0].mxu0 %v372
        %v955 = vpop.f32.mrb[0].mxu0
        %v956 = vadd.f32 %v857, %v955
        %v957 = vpop.f32.mrb[0].mxu0
        %958 = vmatprep.mubr.f32.mxu0 %v381
        %959 = vmatmul.mubr.f32.gmra.mrb[0].mxu0 %v380
        %v960 = vpop.f32.mrb[0].mxu0
        %v961 = vadd.f32 %v857, %v960
        %v962 = vpop.f32.mrb[0].mxu0
        %963 = vmatprep.mubr.f32.mxu0 %v389
        %964 = vmatmul.mubr.f32.gmra.mrb[0].mxu0 %v388
        %v965 = vpop.f32.mrb[0].mxu0
        %v966 = vadd.f32 %v857, %v965
        %v967 = vpop.f32.mrb[0].mxu0
        %968 = vmatprep.mubr.f32.mxu0 %v397
        %969 = vmatmul.mubr.f32.gmra.mrb[0].mxu0 %v396
        %v970 = vpop.f32.mrb[0].mxu0
        %v971 = vadd.f32 %v857, %v970
        %v972 = vpop.f32.mrb[0].mxu0
        %973 = vmatprep.mubr.f32.mxu0 %v405
        %974 = vmatmul.mubr.f32.gmra.mrb[0].mxu0 %v404
        %v975 = vpop.f32.mrb[0].mxu0
        %v976 = vadd.f32 %v857, %v975
        %v977 = vpop.f32.mrb[0].mxu0
        %978 = vmatprep.mubr.f32.mxu0 %v413
        %979 = vmatmul.mubr.f32.gmra.mrb[0].mxu0 %v412
        %v980 = vpop.f32.mrb[0].mxu0
        %v981 = vadd.f32 %v857, %v980
        %v982 = vpop.f32.mrb[0].mxu0
        %983 = vmatprep.mubr.f32.mxu0 %v421
        %984 = vmatmul.mubr.f32.gmra.mrb[0].mxu0 %v420
        %v985 = vpop.f32.mrb[0].mxu0
        %v986 = vadd.f32 %v857, %v985
        %v987 = vpop.f32.mrb[0].mxu0
        %988 = vmatprep.mubr.f32.mxu0 %v429
        %989 = vmatmul.mubr.f32.gmra.mrb[0].mxu0 %v428
        %v990 = vpop.f32.mrb[0].mxu0
        %v991 = vadd.f32 %v857, %v990
        %v992 = vpop.f32.mrb[0].mxu0
        %993 = vmatprep.mubr.f32.mxu0 %v437
        %994 = vmatmul.mubr.f32.gmra.mrb[0].mxu0 %v436
        %v995 = vpop.f32.mrb[0].mxu0
        %v996 = vadd.f32 %v857, %v995
        %v997 = vpop.f32.mrb[0].mxu0
        %998 = vmatprep.mubr.f32.mxu0 %v445
        %999 = vmatmul.mubr.f32.gmra.mrb[0].mxu0 %v444
        %v1000 = vpop.f32.mrb[0].mxu0
        %v1001 = vadd.f32 %v857, %v1000
        %v1002 = vpop.f32.mrb[0].mxu0
        %1003 = vmatprep.mubr.f32.mxu0 %v453
        %1004 = vmatmul.mubr.f32.gmra.mrb[0].mxu0 %v452
        %v1005 = vpop.f32.mrb[0].mxu0
        %v1006 = vadd.f32 %v857, %v1005
        %v1007 = vpop.f32.mrb[0].mxu0
        %1008 = vmatprep.mubr.f32.mxu0 %v461
        %1009 = vmatmul.mubr.f32.gmra.mrb[0].mxu0 %v460
        %v1010 = vpop.f32.mrb[0].mxu0
        %v1011 = vadd.f32 %v857, %v1010
        %v1012 = vpop.f32.mrb[0].mxu0
        %1013 = vmatprep.mubr.f32.mxu0 %v469
        %1014 = vmatmul.mubr.f32.gmra.mrb[0].mxu0 %v468
        %v1015 = vpop.f32.mrb[0].mxu0
        %v1016 = vadd.f32 %v857, %v1015
        %v1017 = vpop.f32.mrb[0].mxu0
        %1018 = vmatprep.mubr.f32.mxu0 %v477
        %1019 = vmatmul.mubr.f32.gmra.mrb[0].mxu0 %v476
        %v1020 = vpop.f32.mrb[0].mxu0
        %v1021 = vadd.f32 %v857, %v1020
        %v1022 = vpop.f32.mrb[0].mxu0
        %1023 = vmatprep.mubr.f32.mxu0 %v485
        %1024 = vmatmul.mubr.f32.gmra.mrb[0].mxu0 %v484
        %v1025 = vpop.f32.mrb[0].mxu0
        %v1026 = vadd.f32 %v857, %v1025
        %v1027 = vpop.f32.mrb[0].mxu0
        %1028 = vmatprep.mubr.f32.mxu0 %v493
        %1029 = vmatmul.mubr.f32.gmra.mrb[0].mxu0 %v492
        %v1030 = vpop.f32.mrb[0].mxu0
        %v1031 = vadd.f32 %v857, %v1030
        %v1032 = vpop.f32.mrb[0].mxu0
        %1033 = vmatprep.mubr.f32.mxu0 %v501
        %1034 = vmatmul.mubr.f32.gmra.mrb[0].mxu0 %v500
        %v1035 = vpop.f32.mrb[0].mxu0
        %v1036 = vadd.f32 %v857, %v1035
        %v1037 = vpop.f32.mrb[0].mxu0
        %1038 = vmatprep.mubr.f32.mxu0 %v509
        %1039 = vmatmul.mubr.f32.gmra.mrb[0].mxu0 %v508
        %v1040 = vpop.f32.mrb[0].mxu0
        %v1041 = vadd.f32 %v857, %v1040
        %v1042 = vpop.f32.mrb[0].mxu0
        %1043 = vmatprep.mubr.f32.mxu0 %v517
        %1044 = vmatmul.mubr.f32.gmra.mrb[0].mxu0 %v516
        %v1045 = vpop.f32.mrb[0].mxu0
        %v1046 = vadd.f32 %v857, %v1045
        %v1047 = vpop.f32.mrb[0].mxu0
        %1048 = vmatprep.mubr.f32.mxu0 %v525
        %1049 = vmatmul.mubr.f32.gmra.mrb[0].mxu0 %v524
        %v1050 = vpop.f32.mrb[0].mxu0
        %v1051 = vadd.f32 %v857, %v1050
        %v1052 = vpop.f32.mrb[0].mxu0
        %1053 = vmatprep.mubr.f32.mxu0 %v533
        %1054 = vmatmul.mubr.f32.gmra.mrb[0].mxu0 %v532
        %v1055 = vpop.f32.mrb[0].mxu0
        %v1056 = vadd.f32 %v857, %v1055
        %v1057 = vpop.f32.mrb[0].mxu0
        %1058 = vmatprep.mubr.f32.mxu0 %v541
        %1059 = vmatmul.mubr.f32.gmra.mrb[0].mxu0 %v540
        %v1060 = vpop.f32.mrb[0].mxu0
        %v1061 = vadd.f32 %v857, %v1060
        %v1062 = vpop.f32.mrb[0].mxu0
        %1063 = vmatprep.mubr.f32.mxu0 %v549
        %1064 = vmatmul.mubr.f32.gmra.mrb[0].mxu0 %v548
        %v1065 = vpop.f32.mrb[0].mxu0
        %v1066 = vadd.f32 %v857, %v1065
        %v1067 = vpop.f32.mrb[0].mxu0
        %1068 = vmatprep.mubr.f32.mxu0 %v557
        %1069 = vmatmul.mubr.f32.gmra.mrb[0].mxu0 %v556
        %v1070 = vpop.f32.mrb[0].mxu0
        %v1071 = vadd.f32 %v857, %v1070
        %v1072 = vpop.f32.mrb[0].mxu0
        %1073 = vmatprep.mubr.f32.mxu0 %v565
        %1074 = vmatmul.mubr.f32.gmra.mrb[0].mxu0 %v564
        %v1075 = vpop.f32.mrb[0].mxu0
        %v1076 = vadd.f32 %v857, %v1075
        %v1077 = vpop.f32.mrb[0].mxu0
        %1078 = vmatprep.mubr.f32.mxu0 %v573
        %1079 = vmatmul.mubr.f32.gmra.mrb[0].mxu0 %v572
        %v1080 = vpop.f32.mrb[0].mxu0
        %v1081 = vadd.f32 %v857, %v1080
        %v1082 = vpop.f32.mrb[0].mxu0
        %1083 = vmatprep.mubr.f32.mxu0 %v581
        %1084 = vmatmul.mubr.f32.gmra.mrb[0].mxu0 %v580
        %v1085 = vpop.f32.mrb[0].mxu0
        %v1086 = vadd.f32 %v857, %v1085
        %v1087 = vpop.f32.mrb[0].mxu0
        %1088 = vmatprep.mubr.f32.mxu0 %v589
        %1089 = vmatmul.mubr.f32.gmra.mrb[0].mxu0 %v588
        %v1090 = vpop.f32.mrb[0].mxu0
        %v1091 = vadd.f32 %v857, %v1090
        %v1092 = vpop.f32.mrb[0].mxu0
        %1093 = vmatprep.mubr.f32.mxu0 %v597
        %1094 = vmatmul.mubr.f32.gmra.mrb[0].mxu0 %v596
        %v1095 = vpop.f32.mrb[0].mxu0
        %v1096 = vadd.f32 %v857, %v1095
        %v1097 = vpop.f32.mrb[0].mxu0
        %1098 = vmatprep.mubr.f32.mxu0 %v605
        %1099 = vmatmul.mubr.f32.gmra.mrb[0].mxu0 %v604
        %v1100 = vpop.f32.mrb[0].mxu0
        %v1101 = vadd.f32 %v857, %v1100
        %v1102 = vpop.f32.mrb[0].mxu0
        %1103 = vmatprep.mubr.f32.mxu0 %v613
        %1104 = vmatmul.mubr.f32.gmra.mrb[0].mxu0 %v612
        %v1105 = vpop.f32.mrb[0].mxu0
        %v1106 = vadd.f32 %v857, %v1105
        %v1107 = vpop.f32.mrb[0].mxu0
        %1108 = vmatprep.mubr.f32.mxu0 %v621
        %1109 = vmatmul.mubr.f32.gmra.mrb[0].mxu0 %v620
        %v1110 = vpop.f32.mrb[0].mxu0
        %v1111 = vadd.f32 %v857, %v1110
        %v1112 = vpop.f32.mrb[0].mxu0
        %1113 = vmatprep.mubr.f32.mxu0 %v629
        %1114 = vmatmul.mubr.f32.gmra.mrb[0].mxu0 %v628
        %v1115 = vpop.f32.mrb[0].mxu0
        %v1116 = vadd.f32 %v857, %v1115
        %v1117 = vpop.f32.mrb[0].mxu0
        %1118 = vmatprep.mubr.f32.mxu0 %v637
        %1119 = vmatmul.mubr.f32.gmra.mrb[0].mxu0 %v636
        %v1120 = vpop.f32.mrb[0].mxu0
        %v1121 = vadd.f32 %v857, %v1120
        %v1122 = vpop.f32.mrb[0].mxu0
        %1123 = vmatprep.mubr.f32.mxu0 %v645
        %1124 = vmatmul.mubr.f32.gmra.mrb[0].mxu0 %v644
        %v1125 = vpop.f32.mrb[0].mxu0
        %v1126 = vadd.f32 %v857, %v1125
        %v1127 = vpop.f32.mrb[0].mxu0
        %1128 = vmatprep.mubr.f32.mxu0 %v653
        %1129 = vmatmul.mubr.f32.gmra.mrb[0].mxu0 %v652
        %v1130 = vpop.f32.mrb[0].mxu0
        %v1131 = vadd.f32 %v857, %v1130
        %v1132 = vpop.f32.mrb[0].mxu0
        %1133 = vmatprep.mubr.f32.mxu0 %v661
        %1134 = vmatmul.mubr.f32.gmra.mrb[0].mxu0 %v660
        %v1135 = vpop.f32.mrb[0].mxu0
        %v1136 = vadd.f32 %v857, %v1135
        %v1137 = vpop.f32.mrb[0].mxu0
        %1138 = vmatprep.mubr.f32.mxu0 %v669
        %1139 = vmatmul.mubr.f32.gmra.mrb[0].mxu0 %v668
        %v1140 = vpop.f32.mrb[0].mxu0
        %v1141 = vadd.f32 %v857, %v1140
        %v1142 = vpop.f32.mrb[0].mxu0
        %1143 = vmatprep.mubr.f32.mxu0 %v677
        %1144 = vmatmul.mubr.f32.gmra.mrb[0].mxu0 %v676
        %v1145 = vpop.f32.mrb[0].mxu0
        %v1146 = vadd.f32 %v857, %v1145
        %v1147 = vpop.f32.mrb[0].mxu0
        %1148 = vmatprep.mubr.f32.mxu0 %v685
        %1149 = vmatmul.mubr.f32.gmra.mrb[0].mxu0 %v684
        %v1150 = vpop.f32.mrb[0].mxu0
        %v1151 = vadd.f32 %v857, %v1150
        %v1152 = vpop.f32.mrb[0].mxu0
        %1153 = vmatprep.mubr.f32.mxu0 %v693
        %1154 = vmatmul.mubr.f32.gmra.mrb[0].mxu0 %v692
        %v1155 = vpop.f32.mrb[0].mxu0
        %v1156 = vadd.f32 %v857, %v1155
        %v1157 = vpop.f32.mrb[0].mxu0
        %1158 = vmatprep.mubr.f32.mxu0 %v701
        %1159 = vmatmul.mubr.f32.gmra.mrb[0].mxu0 %v700
        %v1160 = vpop.f32.mrb[0].mxu0
        %v1161 = vadd.f32 %v857, %v1160
        %v1162 = vpop.f32.mrb[0].mxu0
        %1163 = vmatprep.mubr.f32.mxu0 %v709
        %1164 = vmatmul.mubr.f32.gmra.mrb[0].mxu0 %v708
        %v1165 = vpop.f32.mrb[0].mxu0
        %v1166 = vadd.f32 %v857, %v1165
        %v1167 = vpop.f32.mrb[0].mxu0
        %1168 = vmatprep.mubr.f32.mxu0 %v717
        %1169 = vmatmul.mubr.f32.gmra.mrb[0].mxu0 %v716
        %v1170 = vpop.f32.mrb[0].mxu0
        %v1171 = vadd.f32 %v857, %v1170
        %v1172 = vpop.f32.mrb[0].mxu0
        %1173 = vdwg.mxu0
        %1174 = vmatprep.subr.mxu0 0.0
        %1175 = vmatpush1.msra.mxu0 %v756
        %1176 = vmatprep.subr.mxu0 0.0
        %1177 = vmatpush1.msra.mxu0 %v757
        %1178 = vmatprep.subr.mxu0 0.0
        %1179 = vmatpush1.msra.mxu0 %v758
        %1180 = vmatprep.subr.mxu0 0.0
        %1181 = vmatpush1.msra.mxu0 %v759
        %1182 = vmatprep.subr.mxu0 0.0
        %1183 = vmatpush1.msra.mxu0 %v760
        %1184 = vmatprep.subr.mxu0 0.0
        %1185 = vmatpush1.msra.mxu0 %v761
        %1186 = vmatprep.subr.mxu0 0.0
        %1187 = vmatpush1.msra.mxu0 %v762
        %1188 = vmatprep.subr.mxu0 0.0
        %1189 = vmatpush1.msra.mxu0 %v763
        %1190 = vmatprep.subr.mxu0 0.0
        %1191 = vmatpush1.msra.mxu0 %v764
        %1192 = vmatprep.subr.mxu0 0.0
        %1193 = vmatpush1.msra.mxu0 %v765
        %1194 = vmatprep.subr.mxu0 0.0
        %1195 = vmatpush1.msra.mxu0 %v766
        %1196 = vmatprep.subr.mxu0 0.0
        %1197 = vmatpush1.msra.mxu0 %v767
        %1198 = vmatprep.subr.mxu0 0.0
        %1199 = vmatpush1.msra.mxu0 %v768
        %1200 = vmatprep.subr.mxu0 0.0
        %1201 = vmatpush1.msra.mxu0 %v769
        %1202 = vmatprep.subr.mxu0 0.0
        %1203 = vmatpush1.msra.mxu0 %v770
        %1204 = vmatprep.subr.mxu0 0.0
        %1205 = vmatpush1.msra.mxu0 %v771
        %1206 = vmatprep.subr.mxu0 0.0
        %1207 = vmatpush1.msra.mxu0 %v772
        %1208 = vmatprep.subr.mxu0 0.0
        %1209 = vmatpush1.msra.mxu0 %v773
        %1210 = vmatprep.subr.mxu0 0.0
        %1211 = vmatpush1.msra.mxu0 %v774
        %1212 = vmatprep.subr.mxu0 0.0
        %1213 = vmatpush1.msra.mxu0 %v775
        %1214 = vmatprep.subr.mxu0 0.0
        %1215 = vmatpush1.msra.mxu0 %v776
        %1216 = vmatprep.subr.mxu0 0.0
        %1217 = vmatpush1.msra.mxu0 %v777
        %1218 = vmatprep.subr.mxu0 0.0
        %1219 = vmatpush1.msra.mxu0 %v778
        %1220 = vmatprep.subr.mxu0 0.0
        %1221 = vmatpush1.msra.mxu0 %v779
        %1222 = vmatprep.subr.mxu0 0.0
        %1223 = vmatpush1.msra.mxu0 %v780
        %1224 = vmatprep.subr.mxu0 0.0
        %1225 = vmatpush1.msra.mxu0 %v781
        %1226 = vmatprep.subr.mxu0 0.0
        %1227 = vmatpush1.msra.mxu0 %v782
        %1228 = vmatprep.subr.mxu0 0.0
        %1229 = vmatpush1.msra.mxu0 %v783
        %1230 = vmatprep.subr.mxu0 0.0
        %1231 = vmatpush1.msra.mxu0 %v784
        %1232 = vmatprep.subr.mxu0 0.0
        %1233 = vmatpush1.msra.mxu0 %v785
        %1234 = vmatprep.subr.mxu0 0.0
        %1235 = vmatpush1.msra.mxu0 %v786
        %1236 = vmatprep.subr.mxu0 0.0
        %1237 = vmatpush1.msra.mxu0 %v787
        %1238 = vmatprep.mubr.f32.mxu0 %v327
        %1239 = vmatmul.mubr.f32.gmra.mrb[0].mxu0 %v326
        %v1240 = vpop.f32.mrb[0].mxu0
        %v1241 = vadd.f32 %v926, %v1240
        %v1242 = vpop.f32.mrb[0].mxu0
        %1243 = vmatprep.mubr.f32.mxu0 %v335
        %1244 = vmatmul.mubr.f32.gmra.mrb[0].mxu0 %v334
        %v1245 = vpop.f32.mrb[0].mxu0
        %v1246 = vadd.f32 %v931, %v1245
        %v1247 = vpop.f32.mrb[0].mxu0
        %1248 = vmatprep.mubr.f32.mxu0 %v343
        %1249 = vmatmul.mubr.f32.gmra.mrb[0].mxu0 %v342
        %v1250 = vpop.f32.mrb[0].mxu0
        %v1251 = vadd.f32 %v936, %v1250
        %v1252 = vpop.f32.mrb[0].mxu0
        %1253 = vmatprep.mubr.f32.mxu0 %v351
        %1254 = vmatmul.mubr.f32.gmra.mrb[0].mxu0 %v350
        %v1255 = vpop.f32.mrb[0].mxu0
        %v1256 = vadd.f32 %v941, %v1255
        %v1257 = vpop.f32.mrb[0].mxu0
        %1258 = vmatprep.mubr.f32.mxu0 %v359
        %1259 = vmatmul.mubr.f32.gmra.mrb[0].mxu0 %v358
        %v1260 = vpop.f32.mrb[0].mxu0
        %v1261 = vadd.f32 %v946, %v1260
        %v1262 = vpop.f32.mrb[0].mxu0
        %1263 = vmatprep.mubr.f32.mxu0 %v367
        %1264 = vmatmul.mubr.f32.gmra.mrb[0].mxu0 %v366
        %v1265 = vpop.f32.mrb[0].mxu0
        %v1266 = vadd.f32 %v951, %v1265
        %v1267 = vpop.f32.mrb[0].mxu0
        %1268 = vmatprep.mubr.f32.mxu0 %v375
        %1269 = vmatmul.mubr.f32.gmra.mrb[0].mxu0 %v374
        %v1270 = vpop.f32.mrb[0].mxu0
        %v1271 = vadd.f32 %v956, %v1270
        %v1272 = vpop.f32.mrb[0].mxu0
        %1273 = vmatprep.mubr.f32.mxu0 %v383
        %1274 = vmatmul.mubr.f32.gmra.mrb[0].mxu0 %v382
        %v1275 = vpop.f32.mrb[0].mxu0
        %v1276 = vadd.f32 %v961, %v1275
        %v1277 = vpop.f32.mrb[0].mxu0
        %1278 = vmatprep.mubr.f32.mxu0 %v391
        %1279 = vmatmul.mubr.f32.gmra.mrb[0].mxu0 %v390
        %v1280 = vpop.f32.mrb[0].mxu0
        %v1281 = vadd.f32 %v966, %v1280
        %v1282 = vpop.f32.mrb[0].mxu0
        %1283 = vmatprep.mubr.f32.mxu0 %v399
        %1284 = vmatmul.mubr.f32.gmra.mrb[0].mxu0 %v398
        %v1285 = vpop.f32.mrb[0].mxu0
        %v1286 = vadd.f32 %v971, %v1285
        %v1287 = vpop.f32.mrb[0].mxu0
        %1288 = vmatprep.mubr.f32.mxu0 %v407
        %1289 = vmatmul.mubr.f32.gmra.mrb[0].mxu0 %v406
        %v1290 = vpop.f32.mrb[0].mxu0
        %v1291 = vadd.f32 %v976, %v1290
        %v1292 = vpop.f32.mrb[0].mxu0
        %1293 = vmatprep.mubr.f32.mxu0 %v415
        %1294 = vmatmul.mubr.f32.gmra.mrb[0].mxu0 %v414
        %v1295 = vpop.f32.mrb[0].mxu0
        %v1296 = vadd.f32 %v981, %v1295
        %v1297 = vpop.f32.mrb[0].mxu0
        %1298 = vmatprep.mubr.f32.mxu0 %v423
        %1299 = vmatmul.mubr.f32.gmra.mrb[0].mxu0 %v422
        %v1300 = vpop.f32.mrb[0].mxu0
        %v1301 = vadd.f32 %v986, %v1300
        %v1302 = vpop.f32.mrb[0].mxu0
        %1303 = vmatprep.mubr.f32.mxu0 %v431
        %1304 = vmatmul.mubr.f32.gmra.mrb[0].mxu0 %v430
        %v1305 = vpop.f32.mrb[0].mxu0
        %v1306 = vadd.f32 %v991, %v1305
        %v1307 = vpop.f32.mrb[0].mxu0
        %1308 = vmatprep.mubr.f32.mxu0 %v439
        %1309 = vmatmul.mubr.f32.gmra.mrb[0].mxu0 %v438
        %v1310 = vpop.f32.mrb[0].mxu0
        %v1311 = vadd.f32 %v996, %v1310
        %v1312 = vpop.f32.mrb[0].mxu0
        %1313 = vmatprep.mubr.f32.mxu0 %v447
        %1314 = vmatmul.mubr.f32.gmra.mrb[0].mxu0 %v446
        %v1315 = vpop.f32.mrb[0].mxu0
        %v1316 = vadd.f32 %v1001, %v1315
        %v1317 = vpop.f32.mrb[0].mxu0
        %1318 = vmatprep.mubr.f32.mxu0 %v455
        %1319 = vmatmul.mubr.f32.gmra.mrb[0].mxu0 %v454
        %v1320 = vpop.f32.mrb[0].mxu0
        %v1321 = vadd.f32 %v1006, %v1320
        %v1322 = vpop.f32.mrb[0].mxu0
        %1323 = vmatprep.mubr.f32.mxu0 %v463
        %1324 = vmatmul.mubr.f32.gmra.mrb[0].mxu0 %v462
        %v1325 = vpop.f32.mrb[0].mxu0
        %v1326 = vadd.f32 %v1011, %v1325
        %v1327 = vpop.f32.mrb[0].mxu0
        %1328 = vmatprep.mubr.f32.mxu0 %v471
        %1329 = vmatmul.mubr.f32.gmra.mrb[0].mxu0 %v470
        %v1330 = vpop.f32.mrb[0].mxu0
        %v1331 = vadd.f32 %v1016, %v1330
        %v1332 = vpop.f32.mrb[0].mxu0
        %1333 = vmatprep.mubr.f32.mxu0 %v479
        %1334 = vmatmul.mubr.f32.gmra.mrb[0].mxu0 %v478
        %v1335 = vpop.f32.mrb[0].mxu0
        %v1336 = vadd.f32 %v1021, %v1335
        %v1337 = vpop.f32.mrb[0].mxu0
        %1338 = vmatprep.mubr.f32.mxu0 %v487
        %1339 = vmatmul.mubr.f32.gmra.mrb[0].mxu0 %v486
        %v1340 = vpop.f32.mrb[0].mxu0
        %v1341 = vadd.f32 %v1026, %v1340
        %v1342 = vpop.f32.mrb[0].mxu0
        %1343 = vmatprep.mubr.f32.mxu0 %v495
        %1344 = vmatmul.mubr.f32.gmra.mrb[0].mxu0 %v494
        %v1345 = vpop.f32.mrb[0].mxu0
        %v1346 = vadd.f32 %v1031, %v1345
        %v1347 = vpop.f32.mrb[0].mxu0
        %1348 = vmatprep.mubr.f32.mxu0 %v503
        %1349 = vmatmul.mubr.f32.gmra.mrb[0].mxu0 %v502
        %v1350 = vpop.f32.mrb[0].mxu0
        %v1351 = vadd.f32 %v1036, %v1350
        %v1352 = vpop.f32.mrb[0].mxu0
        %1353 = vmatprep.mubr.f32.mxu0 %v511
        %1354 = vmatmul.mubr.f32.gmra.mrb[0].mxu0 %v510
        %v1355 = vpop.f32.mrb[0].mxu0
        %v1356 = vadd.f32 %v1041, %v1355
        %v1357 = vpop.f32.mrb[0].mxu0
        %1358 = vmatprep.mubr.f32.mxu0 %v519
        %1359 = vmatmul.mubr.f32.gmra.mrb[0].mxu0 %v518
        %v1360 = vpop.f32.mrb[0].mxu0
        %v1361 = vadd.f32 %v1046, %v1360
        %v1362 = vpop.f32.mrb[0].mxu0
        %1363 = vmatprep.mubr.f32.mxu0 %v527
        %1364 = vmatmul.mubr.f32.gmra.mrb[0].mxu0 %v526
        %v1365 = vpop.f32.mrb[0].mxu0
        %v1366 = vadd.f32 %v1051, %v1365
        %v1367 = vpop.f32.mrb[0].mxu0
        %1368 = vmatprep.mubr.f32.mxu0 %v535
        %1369 = vmatmul.mubr.f32.gmra.mrb[0].mxu0 %v534
        %v1370 = vpop.f32.mrb[0].mxu0
        %v1371 = vadd.f32 %v1056, %v1370
        %v1372 = vpop.f32.mrb[0].mxu0
        %1373 = vmatprep.mubr.f32.mxu0 %v543
        %1374 = vmatmul.mubr.f32.gmra.mrb[0].mxu0 %v542
        %v1375 = vpop.f32.mrb[0].mxu0
        %v1376 = vadd.f32 %v1061, %v1375
        %v1377 = vpop.f32.mrb[0].mxu0
        %1378 = vmatprep.mubr.f32.mxu0 %v551
        %1379 = vmatmul.mubr.f32.gmra.mrb[0].mxu0 %v550
        %v1380 = vpop.f32.mrb[0].mxu0
        %v1381 = vadd.f32 %v1066, %v1380
        %v1382 = vpop.f32.mrb[0].mxu0
        %1383 = vmatprep.mubr.f32.mxu0 %v559
        %1384 = vmatmul.mubr.f32.gmra.mrb[0].mxu0 %v558
        %v1385 = vpop.f32.mrb[0].mxu0
        %v1386 = vadd.f32 %v1071, %v1385
        %v1387 = vpop.f32.mrb[0].mxu0
        %1388 = vmatprep.mubr.f32.mxu0 %v567
        %1389 = vmatmul.mubr.f32.gmra.mrb[0].mxu0 %v566
        %v1390 = vpop.f32.mrb[0].mxu0
        %v1391 = vadd.f32 %v1076, %v1390
        %v1392 = vpop.f32.mrb[0].mxu0
        %1393 = vmatprep.mubr.f32.mxu0 %v575
        %1394 = vmatmul.mubr.f32.gmra.mrb[0].mxu0 %v574
        %v1395 = vpop.f32.mrb[0].mxu0
        %v1396 = vadd.f32 %v1081, %v1395
        %v1397 = vpop.f32.mrb[0].mxu0
        %1398 = vmatprep.mubr.f32.mxu0 %v583
        %1399 = vmatmul.mubr.f32.gmra.mrb[0].mxu0 %v582
        %v1400 = vpop.f32.mrb[0].mxu0
        %v1401 = vadd.f32 %v1086, %v1400
        %v1402 = vpop.f32.mrb[0].mxu0
        %1403 = vmatprep.mubr.f32.mxu0 %v591
        %1404 = vmatmul.mubr.f32.gmra.mrb[0].mxu0 %v590
        %v1405 = vpop.f32.mrb[0].mxu0
        %v1406 = vadd.f32 %v1091, %v1405
        %v1407 = vpop.f32.mrb[0].mxu0
        %1408 = vmatprep.mubr.f32.mxu0 %v599
        %1409 = vmatmul.mubr.f32.gmra.mrb[0].mxu0 %v598
        %v1410 = vpop.f32.mrb[0].mxu0
        %v1411 = vadd.f32 %v1096, %v1410
        %v1412 = vpop.f32.mrb[0].mxu0
        %1413 = vmatprep.mubr.f32.mxu0 %v607
        %1414 = vmatmul.mubr.f32.gmra.mrb[0].mxu0 %v606
        %v1415 = vpop.f32.mrb[0].mxu0
        %v1416 = vadd.f32 %v1101, %v1415
        %v1417 = vpop.f32.mrb[0].mxu0
        %1418 = vmatprep.mubr.f32.mxu0 %v615
        %1419 = vmatmul.mubr.f32.gmra.mrb[0].mxu0 %v614
        %v1420 = vpop.f32.mrb[0].mxu0
        %v1421 = vadd.f32 %v1106, %v1420
        %v1422 = vpop.f32.mrb[0].mxu0
        %1423 = vmatprep.mubr.f32.mxu0 %v623
        %1424 = vmatmul.mubr.f32.gmra.mrb[0].mxu0 %v622
        %v1425 = vpop.f32.mrb[0].mxu0
        %v1426 = vadd.f32 %v1111, %v1425
        %v1427 = vpop.f32.mrb[0].mxu0
        %1428 = vmatprep.mubr.f32.mxu0 %v631
        %1429 = vmatmul.mubr.f32.gmra.mrb[0].mxu0 %v630
        %v1430 = vpop.f32.mrb[0].mxu0
        %v1431 = vadd.f32 %v1116, %v1430
        %v1432 = vpop.f32.mrb[0].mxu0
        %1433 = vmatprep.mubr.f32.mxu0 %v639
        %1434 = vmatmul.mubr.f32.gmra.mrb[0].mxu0 %v638
        %v1435 = vpop.f32.mrb[0].mxu0
        %v1436 = vadd.f32 %v1121, %v1435
        %v1437 = vpop.f32.mrb[0].mxu0
        %1438 = vmatprep.mubr.f32.mxu0 %v647
        %1439 = vmatmul.mubr.f32.gmra.mrb[0].mxu0 %v646
        %v1440 = vpop.f32.mrb[0].mxu0
        %v1441 = vadd.f32 %v1126, %v1440
        %v1442 = vpop.f32.mrb[0].mxu0
        %1443 = vmatprep.mubr.f32.mxu0 %v655
        %1444 = vmatmul.mubr.f32.gmra.mrb[0].mxu0 %v654
        %v1445 = vpop.f32.mrb[0].mxu0
        %v1446 = vadd.f32 %v1131, %v1445
        %v1447 = vpop.f32.mrb[0].mxu0
        %1448 = vmatprep.mubr.f32.mxu0 %v663
        %1449 = vmatmul.mubr.f32.gmra.mrb[0].mxu0 %v662
        %v1450 = vpop.f32.mrb[0].mxu0
        %v1451 = vadd.f32 %v1136, %v1450
        %v1452 = vpop.f32.mrb[0].mxu0
        %1453 = vmatprep.mubr.f32.mxu0 %v671
        %1454 = vmatmul.mubr.f32.gmra.mrb[0].mxu0 %v670
        %v1455 = vpop.f32.mrb[0].mxu0
        %v1456 = vadd.f32 %v1141, %v1455
        %v1457 = vpop.f32.mrb[0].mxu0
        %1458 = vmatprep.mubr.f32.mxu0 %v679
        %1459 = vmatmul.mubr.f32.gmra.mrb[0].mxu0 %v678
        %v1460 = vpop.f32.mrb[0].mxu0
        %v1461 = vadd.f32 %v1146, %v1460
        %v1462 = vpop.f32.mrb[0].mxu0
        %1463 = vmatprep.mubr.f32.mxu0 %v687
        %1464 = vmatmul.mubr.f32.gmra.mrb[0].mxu0 %v686
        %v1465 = vpop.f32.mrb[0].mxu0
        %v1466 = vadd.f32 %v1151, %v1465
        %v1467 = vpop.f32.mrb[0].mxu0
        %1468 = vmatprep.mubr.f32.mxu0 %v695
        %1469 = vmatmul.mubr.f32.gmra.mrb[0].mxu0 %v694
        %v1470 = vpop.f32.mrb[0].mxu0
        %v1471 = vadd.f32 %v1156, %v1470
        %v1472 = vpop.f32.mrb[0].mxu0
        %1473 = vmatprep.mubr.f32.mxu0 %v703
        %1474 = vmatmul.mubr.f32.gmra.mrb[0].mxu0 %v702
        %v1475 = vpop.f32.mrb[0].mxu0
        %v1476 = vadd.f32 %v1161, %v1475
        %v1477 = vpop.f32.mrb[0].mxu0
        %1478 = vmatprep.mubr.f32.mxu0 %v711
        %1479 = vmatmul.mubr.f32.gmra.mrb[0].mxu0 %v710
        %v1480 = vpop.f32.mrb[0].mxu0
        %v1481 = vadd.f32 %v1166, %v1480
        %v1482 = vpop.f32.mrb[0].mxu0
        %1483 = vmatprep.mubr.f32.mxu0 %v719
        %1484 = vmatmul.mubr.f32.gmra.mrb[0].mxu0 %v718
        %v1485 = vpop.f32.mrb[0].mxu0
        %v1486 = vadd.f32 %v1171, %v1485
        %v1487 = vpop.f32.mrb[0].mxu0
        %1488 = vdwg.mxu0
        %1489 = vmatprep.subr.mxu0 0.0
        %1490 = vmatpush1.msra.mxu0 %v788
        %1491 = vmatprep.subr.mxu0 0.0
        %1492 = vmatpush1.msra.mxu0 %v789
        %1493 = vmatprep.subr.mxu0 0.0
        %1494 = vmatpush1.msra.mxu0 %v790
        %1495 = vmatprep.subr.mxu0 0.0
        %1496 = vmatpush1.msra.mxu0 %v791
        %1497 = vmatprep.subr.mxu0 0.0
        %1498 = vmatpush1.msra.mxu0 %v792
        %1499 = vmatprep.subr.mxu0 0.0
        %1500 = vmatpush1.msra.mxu0 %v793
        %1501 = vmatprep.subr.mxu0 0.0
        %1502 = vmatpush1.msra.mxu0 %v794
        %1503 = vmatprep.subr.mxu0 0.0
        %1504 = vmatpush1.msra.mxu0 %v795
        %1505 = vmatprep.subr.mxu0 0.0
        %1506 = vmatpush1.msra.mxu0 %v796
        %1507 = vmatprep.subr.mxu0 0.0
        %1508 = vmatpush1.msra.mxu0 %v797
        %1509 = vmatprep.subr.mxu0 0.0
        %1510 = vmatpush1.msra.mxu0 %v798
        %1511 = vmatprep.subr.mxu0 0.0
        %1512 = vmatpush1.msra.mxu0 %v799
        %1513 = vmatprep.subr.mxu0 0.0
        %1514 = vmatpush1.msra.mxu0 %v800
        %1515 = vmatprep.subr.mxu0 0.0
        %1516 = vmatpush1.msra.mxu0 %v801
        %1517 = vmatprep.subr.mxu0 0.0
        %1518 = vmatpush1.msra.mxu0 %v802
        %1519 = vmatprep.subr.mxu0 0.0
        %1520 = vmatpush1.msra.mxu0 %v803
        %1521 = vmatprep.subr.mxu0 0.0
        %1522 = vmatpush1.msra.mxu0 %v804
        %1523 = vmatprep.subr.mxu0 0.0
        %1524 = vmatpush1.msra.mxu0 %v805
        %1525 = vmatprep.subr.mxu0 0.0
        %1526 = vmatpush1.msra.mxu0 %v806
        %1527 = vmatprep.subr.mxu0 0.0
        %1528 = vmatpush1.msra.mxu0 %v807
        %1529 = vmatprep.subr.mxu0 0.0
        %1530 = vmatpush1.msra.mxu0 %v808
        %1531 = vmatprep.subr.mxu0 0.0
        %1532 = vmatpush1.msra.mxu0 %v809
        %1533 = vmatprep.subr.mxu0 0.0
        %1534 = vmatpush1.msra.mxu0 %v810
        %1535 = vmatprep.subr.mxu0 0.0
        %1536 = vmatpush1.msra.mxu0 %v811
        %1537 = vmatprep.subr.mxu0 0.0
        %1538 = vmatpush1.msra.mxu0 %v812
        %1539 = vmatprep.subr.mxu0 0.0
        %1540 = vmatpush1.msra.mxu0 %v813
        %1541 = vmatprep.subr.mxu0 0.0
        %1542 = vmatpush1.msra.mxu0 %v814
        %1543 = vmatprep.subr.mxu0 0.0
        %1544 = vmatpush1.msra.mxu0 %v815
        %1545 = vmatprep.subr.mxu0 0.0
        %1546 = vmatpush1.msra.mxu0 %v816
        %1547 = vmatprep.subr.mxu0 0.0
        %1548 = vmatpush1.msra.mxu0 %v817
        %1549 = vmatprep.subr.mxu0 0.0
        %1550 = vmatpush1.msra.mxu0 %v818
        %1551 = vmatprep.subr.mxu0 0.0
        %1552 = vmatpush1.msra.mxu0 %v819
        %1553 = vmatprep.mubr.f32.mxu0 %v329
        %1554 = vmatmul.mubr.f32.gmra.mrb[0].mxu0 %v328
        %v1555 = vpop.f32.mrb[0].mxu0
        %v1556 = vadd.f32 %v1241, %v1555
        %v1557 = vpop.f32.mrb[0].mxu0
        %1558 = vmatprep.mubr.f32.mxu0 %v337
        %1559 = vmatmul.mubr.f32.gmra.mrb[0].mxu0 %v336
        %v1560 = vpop.f32.mrb[0].mxu0
        %v1561 = vadd.f32 %v1246, %v1560
        %v1562 = vpop.f32.mrb[0].mxu0
        %1563 = vmatprep.mubr.f32.mxu0 %v345
        %1564 = vmatmul.mubr.f32.gmra.mrb[0].mxu0 %v344
        %v1565 = vpop.f32.mrb[0].mxu0
        %v1566 = vadd.f32 %v1251, %v1565
        %v1567 = vpop.f32.mrb[0].mxu0
        %1568 = vmatprep.mubr.f32.mxu0 %v353
        %1569 = vmatmul.mubr.f32.gmra.mrb[0].mxu0 %v352
        %v1570 = vpop.f32.mrb[0].mxu0
        %v1571 = vadd.f32 %v1256, %v1570
        %v1572 = vpop.f32.mrb[0].mxu0
        %1573 = vmatprep.mubr.f32.mxu0 %v361
        %1574 = vmatmul.mubr.f32.gmra.mrb[0].mxu0 %v360
        %v1575 = vpop.f32.mrb[0].mxu0
        %v1576 = vadd.f32 %v1261, %v1575
        %v1577 = vpop.f32.mrb[0].mxu0
        %1578 = vmatprep.mubr.f32.mxu0 %v369
        %1579 = vmatmul.mubr.f32.gmra.mrb[0].mxu0 %v368
        %v1580 = vpop.f32.mrb[0].mxu0
        %v1581 = vadd.f32 %v1266, %v1580
        %v1582 = vpop.f32.mrb[0].mxu0
        %1583 = vmatprep.mubr.f32.mxu0 %v377
        %1584 = vmatmul.mubr.f32.gmra.mrb[0].mxu0 %v376
        %v1585 = vpop.f32.mrb[0].mxu0
        %v1586 = vadd.f32 %v1271, %v1585
        %v1587 = vpop.f32.mrb[0].mxu0
        %1588 = vmatprep.mubr.f32.mxu0 %v385
        %1589 = vmatmul.mubr.f32.gmra.mrb[0].mxu0 %v384
        %v1590 = vpop.f32.mrb[0].mxu0
        %v1591 = vadd.f32 %v1276, %v1590
        %v1592 = vpop.f32.mrb[0].mxu0
        %1593 = vmatprep.mubr.f32.mxu0 %v393
        %1594 = vmatmul.mubr.f32.gmra.mrb[0].mxu0 %v392
        %v1595 = vpop.f32.mrb[0].mxu0
        %v1596 = vadd.f32 %v1281, %v1595
        %v1597 = vpop.f32.mrb[0].mxu0
        %1598 = vmatprep.mubr.f32.mxu0 %v401
        %1599 = vmatmul.mubr.f32.gmra.mrb[0].mxu0 %v400
        %v1600 = vpop.f32.mrb[0].mxu0
        %v1601 = vadd.f32 %v1286, %v1600
        %v1602 = vpop.f32.mrb[0].mxu0
        %1603 = vmatprep.mubr.f32.mxu0 %v409
        %1604 = vmatmul.mubr.f32.gmra.mrb[0].mxu0 %v408
        %v1605 = vpop.f32.mrb[0].mxu0
        %v1606 = vadd.f32 %v1291, %v1605
        %v1607 = vpop.f32.mrb[0].mxu0
        %1608 = vmatprep.mubr.f32.mxu0 %v417
        %1609 = vmatmul.mubr.f32.gmra.mrb[0].mxu0 %v416
        %v1610 = vpop.f32.mrb[0].mxu0
        %v1611 = vadd.f32 %v1296, %v1610
        %v1612 = vpop.f32.mrb[0].mxu0
        %1613 = vmatprep.mubr.f32.mxu0 %v425
        %1614 = vmatmul.mubr.f32.gmra.mrb[0].mxu0 %v424
        %v1615 = vpop.f32.mrb[0].mxu0
        %v1616 = vadd.f32 %v1301, %v1615
        %v1617 = vpop.f32.mrb[0].mxu0
        %1618 = vmatprep.mubr.f32.mxu0 %v433
        %1619 = vmatmul.mubr.f32.gmra.mrb[0].mxu0 %v432
        %v1620 = vpop.f32.mrb[0].mxu0
        %v1621 = vadd.f32 %v1306, %v1620
        %v1622 = vpop.f32.mrb[0].mxu0
        %1623 = vmatprep.mubr.f32.mxu0 %v441
        %1624 = vmatmul.mubr.f32.gmra.mrb[0].mxu0 %v440
        %v1625 = vpop.f32.mrb[0].mxu0
        %v1626 = vadd.f32 %v1311, %v1625
        %v1627 = vpop.f32.mrb[0].mxu0
        %1628 = vmatprep.mubr.f32.mxu0 %v449
        %1629 = vmatmul.mubr.f32.gmra.mrb[0].mxu0 %v448
        %v1630 = vpop.f32.mrb[0].mxu0
        %v1631 = vadd.f32 %v1316, %v1630
        %v1632 = vpop.f32.mrb[0].mxu0
        %1633 = vmatprep.mubr.f32.mxu0 %v457
        %1634 = vmatmul.mubr.f32.gmra.mrb[0].mxu0 %v456
        %v1635 = vpop.f32.mrb[0].mxu0
        %v1636 = vadd.f32 %v1321, %v1635
        %v1637 = vpop.f32.mrb[0].mxu0
        %1638 = vmatprep.mubr.f32.mxu0 %v465
        %1639 = vmatmul.mubr.f32.gmra.mrb[0].mxu0 %v464
        %v1640 = vpop.f32.mrb[0].mxu0
        %v1641 = vadd.f32 %v1326, %v1640
        %v1642 = vpop.f32.mrb[0].mxu0
        %1643 = vmatprep.mubr.f32.mxu0 %v473
        %1644 = vmatmul.mubr.f32.gmra.mrb[0].mxu0 %v472
        %v1645 = vpop.f32.mrb[0].mxu0
        %v1646 = vadd.f32 %v1331, %v1645
        %v1647 = vpop.f32.mrb[0].mxu0
        %1648 = vmatprep.mubr.f32.mxu0 %v481
        %1649 = vmatmul.mubr.f32.gmra.mrb[0].mxu0 %v480
        %v1650 = vpop.f32.mrb[0].mxu0
        %v1651 = vadd.f32 %v1336, %v1650
        %v1652 = vpop.f32.mrb[0].mxu0
        %1653 = vmatprep.mubr.f32.mxu0 %v489
        %1654 = vmatmul.mubr.f32.gmra.mrb[0].mxu0 %v488
        %v1655 = vpop.f32.mrb[0].mxu0
        %v1656 = vadd.f32 %v1341, %v1655
        %v1657 = vpop.f32.mrb[0].mxu0
        %1658 = vmatprep.mubr.f32.mxu0 %v497
        %1659 = vmatmul.mubr.f32.gmra.mrb[0].mxu0 %v496
        %v1660 = vpop.f32.mrb[0].mxu0
        %v1661 = vadd.f32 %v1346, %v1660
        %v1662 = vpop.f32.mrb[0].mxu0
        %1663 = vmatprep.mubr.f32.mxu0 %v505
        %1664 = vmatmul.mubr.f32.gmra.mrb[0].mxu0 %v504
        %v1665 = vpop.f32.mrb[0].mxu0
        %v1666 = vadd.f32 %v1351, %v1665
        %v1667 = vpop.f32.mrb[0].mxu0
        %1668 = vmatprep.mubr.f32.mxu0 %v513
        %1669 = vmatmul.mubr.f32.gmra.mrb[0].mxu0 %v512
        %v1670 = vpop.f32.mrb[0].mxu0
        %v1671 = vadd.f32 %v1356, %v1670
        %v1672 = vpop.f32.mrb[0].mxu0
        %1673 = vmatprep.mubr.f32.mxu0 %v521
        %1674 = vmatmul.mubr.f32.gmra.mrb[0].mxu0 %v520
        %v1675 = vpop.f32.mrb[0].mxu0
        %v1676 = vadd.f32 %v1361, %v1675
        %v1677 = vpop.f32.mrb[0].mxu0
        %1678 = vmatprep.mubr.f32.mxu0 %v529
        %1679 = vmatmul.mubr.f32.gmra.mrb[0].mxu0 %v528
        %v1680 = vpop.f32.mrb[0].mxu0
        %v1681 = vadd.f32 %v1366, %v1680
        %v1682 = vpop.f32.mrb[0].mxu0
        %1683 = vmatprep.mubr.f32.mxu0 %v537
        %1684 = vmatmul.mubr.f32.gmra.mrb[0].mxu0 %v536
        %v1685 = vpop.f32.mrb[0].mxu0
        %v1686 = vadd.f32 %v1371, %v1685
        %v1687 = vpop.f32.mrb[0].mxu0
        %1688 = vmatprep.mubr.f32.mxu0 %v545
        %1689 = vmatmul.mubr.f32.gmra.mrb[0].mxu0 %v544
        %v1690 = vpop.f32.mrb[0].mxu0
        %v1691 = vadd.f32 %v1376, %v1690
        %v1692 = vpop.f32.mrb[0].mxu0
        %1693 = vmatprep.mubr.f32.mxu0 %v553
        %1694 = vmatmul.mubr.f32.gmra.mrb[0].mxu0 %v552
        %v1695 = vpop.f32.mrb[0].mxu0
        %v1696 = vadd.f32 %v1381, %v1695
        %v1697 = vpop.f32.mrb[0].mxu0
        %1698 = vmatprep.mubr.f32.mxu0 %v561
        %1699 = vmatmul.mubr.f32.gmra.mrb[0].mxu0 %v560
        %v1700 = vpop.f32.mrb[0].mxu0
        %v1701 = vadd.f32 %v1386, %v1700
        %v1702 = vpop.f32.mrb[0].mxu0
        %1703 = vmatprep.mubr.f32.mxu0 %v569
        %1704 = vmatmul.mubr.f32.gmra.mrb[0].mxu0 %v568
        %v1705 = vpop.f32.mrb[0].mxu0
        %v1706 = vadd.f32 %v1391, %v1705
        %v1707 = vpop.f32.mrb[0].mxu0
        %1708 = vmatprep.mubr.f32.mxu0 %v577
        %1709 = vmatmul.mubr.f32.gmra.mrb[0].mxu0 %v576
        %v1710 = vpop.f32.mrb[0].mxu0
        %v1711 = vadd.f32 %v1396, %v1710
        %v1712 = vpop.f32.mrb[0].mxu0
        %1713 = vmatprep.mubr.f32.mxu0 %v585
        %1714 = vmatmul.mubr.f32.gmra.mrb[0].mxu0 %v584
        %v1715 = vpop.f32.mrb[0].mxu0
        %v1716 = vadd.f32 %v1401, %v1715
        %v1717 = vpop.f32.mrb[0].mxu0
        %1718 = vmatprep.mubr.f32.mxu0 %v593
        %1719 = vmatmul.mubr.f32.gmra.mrb[0].mxu0 %v592
        %v1720 = vpop.f32.mrb[0].mxu0
        %v1721 = vadd.f32 %v1406, %v1720
        %v1722 = vpop.f32.mrb[0].mxu0
        %1723 = vmatprep.mubr.f32.mxu0 %v601
        %1724 = vmatmul.mubr.f32.gmra.mrb[0].mxu0 %v600
        %v1725 = vpop.f32.mrb[0].mxu0
        %v1726 = vadd.f32 %v1411, %v1725
        %v1727 = vpop.f32.mrb[0].mxu0
        %1728 = vmatprep.mubr.f32.mxu0 %v609
        %1729 = vmatmul.mubr.f32.gmra.mrb[0].mxu0 %v608
        %v1730 = vpop.f32.mrb[0].mxu0
        %v1731 = vadd.f32 %v1416, %v1730
        %v1732 = vpop.f32.mrb[0].mxu0
        %1733 = vmatprep.mubr.f32.mxu0 %v617
        %1734 = vmatmul.mubr.f32.gmra.mrb[0].mxu0 %v616
        %v1735 = vpop.f32.mrb[0].mxu0
        %v1736 = vadd.f32 %v1421, %v1735
        %v1737 = vpop.f32.mrb[0].mxu0
        %1738 = vmatprep.mubr.f32.mxu0 %v625
        %1739 = vmatmul.mubr.f32.gmra.mrb[0].mxu0 %v624
        %v1740 = vpop.f32.mrb[0].mxu0
        %v1741 = vadd.f32 %v1426, %v1740
        %v1742 = vpop.f32.mrb[0].mxu0
        %1743 = vmatprep.mubr.f32.mxu0 %v633
        %1744 = vmatmul.mubr.f32.gmra.mrb[0].mxu0 %v632
        %v1745 = vpop.f32.mrb[0].mxu0
        %v1746 = vadd.f32 %v1431, %v1745
        %v1747 = vpop.f32.mrb[0].mxu0
        %1748 = vmatprep.mubr.f32.mxu0 %v641
        %1749 = vmatmul.mubr.f32.gmra.mrb[0].mxu0 %v640
        %v1750 = vpop.f32.mrb[0].mxu0
        %v1751 = vadd.f32 %v1436, %v1750
        %v1752 = vpop.f32.mrb[0].mxu0
        %1753 = vmatprep.mubr.f32.mxu0 %v649
        %1754 = vmatmul.mubr.f32.gmra.mrb[0].mxu0 %v648
        %v1755 = vpop.f32.mrb[0].mxu0
        %v1756 = vadd.f32 %v1441, %v1755
        %v1757 = vpop.f32.mrb[0].mxu0
        %1758 = vmatprep.mubr.f32.mxu0 %v657
        %1759 = vmatmul.mubr.f32.gmra.mrb[0].mxu0 %v656
        %v1760 = vpop.f32.mrb[0].mxu0
        %v1761 = vadd.f32 %v1446, %v1760
        %v1762 = vpop.f32.mrb[0].mxu0
        %1763 = vmatprep.mubr.f32.mxu0 %v665
        %1764 = vmatmul.mubr.f32.gmra.mrb[0].mxu0 %v664
        %v1765 = vpop.f32.mrb[0].mxu0
        %v1766 = vadd.f32 %v1451, %v1765
        %v1767 = vpop.f32.mrb[0].mxu0
        %1768 = vmatprep.mubr.f32.mxu0 %v673
        %1769 = vmatmul.mubr.f32.gmra.mrb[0].mxu0 %v672
        %v1770 = vpop.f32.mrb[0].mxu0
        %v1771 = vadd.f32 %v1456, %v1770
        %v1772 = vpop.f32.mrb[0].mxu0
        %1773 = vmatprep.mubr.f32.mxu0 %v681
        %1774 = vmatmul.mubr.f32.gmra.mrb[0].mxu0 %v680
        %v1775 = vpop.f32.mrb[0].mxu0
        %v1776 = vadd.f32 %v1461, %v1775
        %v1777 = vpop.f32.mrb[0].mxu0
        %1778 = vmatprep.mubr.f32.mxu0 %v689
        %1779 = vmatmul.mubr.f32.gmra.mrb[0].mxu0 %v688
        %v1780 = vpop.f32.mrb[0].mxu0
        %v1781 = vadd.f32 %v1466, %v1780
        %v1782 = vpop.f32.mrb[0].mxu0
        %1783 = vmatprep.mubr.f32.mxu0 %v697
        %1784 = vmatmul.mubr.f32.gmra.mrb[0].mxu0 %v696
        %v1785 = vpop.f32.mrb[0].mxu0
        %v1786 = vadd.f32 %v1471, %v1785
        %v1787 = vpop.f32.mrb[0].mxu0
        %1788 = vmatprep.mubr.f32.mxu0 %v705
        %1789 = vmatmul.mubr.f32.gmra.mrb[0].mxu0 %v704
        %v1790 = vpop.f32.mrb[0].mxu0
        %v1791 = vadd.f32 %v1476, %v1790
        %v1792 = vpop.f32.mrb[0].mxu0
        %1793 = vmatprep.mubr.f32.mxu0 %v713
        %1794 = vmatmul.mubr.f32.gmra.mrb[0].mxu0 %v712
        %v1795 = vpop.f32.mrb[0].mxu0
        %v1796 = vadd.f32 %v1481, %v1795
        %v1797 = vpop.f32.mrb[0].mxu0
        %1798 = vmatprep.mubr.f32.mxu0 %v721
        %1799 = vmatmul.mubr.f32.gmra.mrb[0].mxu0 %v720
        %v1800 = vpop.f32.mrb[0].mxu0
        %v1801 = vadd.f32 %v1486, %v1800
        %v1802 = vpop.f32.mrb[0].mxu0
        %1803 = vdwg.mxu0
        %1804 = vmatprep.subr.mxu0 0.0
        %1805 = vmatpush1.msra.mxu0 %v820
        %1806 = vmatprep.subr.mxu0 0.0
        %1807 = vmatpush1.msra.mxu0 %v821
        %1808 = vmatprep.subr.mxu0 0.0
        %1809 = vmatpush1.msra.mxu0 %v822
        %1810 = vmatprep.subr.mxu0 0.0
        %1811 = vmatpush1.msra.mxu0 %v823
        %1812 = vmatprep.subr.mxu0 0.0
        %1813 = vmatpush1.msra.mxu0 %v824
        %1814 = vmatprep.subr.mxu0 0.0
        %1815 = vmatpush1.msra.mxu0 %v825
        %1816 = vmatprep.subr.mxu0 0.0
        %1817 = vmatpush1.msra.mxu0 %v826
        %1818 = vmatprep.subr.mxu0 0.0
        %1819 = vmatpush1.msra.mxu0 %v827
        %1820 = vmatprep.subr.mxu0 0.0
        %1821 = vmatpush1.msra.mxu0 %v828
        %1822 = vmatprep.subr.mxu0 0.0
        %1823 = vmatpush1.msra.mxu0 %v829
        %1824 = vmatprep.subr.mxu0 0.0
        %1825 = vmatpush1.msra.mxu0 %v830
        %1826 = vmatprep.subr.mxu0 0.0
        %1827 = vmatpush1.msra.mxu0 %v831
        %1828 = vmatprep.subr.mxu0 0.0
        %1829 = vmatpush1.msra.mxu0 %v832
        %1830 = vmatprep.subr.mxu0 0.0
        %1831 = vmatpush1.msra.mxu0 %v833
        %1832 = vmatprep.subr.mxu0 0.0
        %1833 = vmatpush1.msra.mxu0 %v834
        %1834 = vmatprep.subr.mxu0 0.0
        %1835 = vmatpush1.msra.mxu0 %v835
        %1836 = vmatprep.subr.mxu0 0.0
        %1837 = vmatpush1.msra.mxu0 %v836
        %1838 = vmatprep.subr.mxu0 0.0
        %1839 = vmatpush1.msra.mxu0 %v837
        %1840 = vmatprep.subr.mxu0 0.0
        %1841 = vmatpush1.msra.mxu0 %v838
        %1842 = vmatprep.subr.mxu0 0.0
        %1843 = vmatpush1.msra.mxu0 %v839
        %1844 = vmatprep.subr.mxu0 0.0
        %1845 = vmatpush1.msra.mxu0 %v840
        %1846 = vmatprep.subr.mxu0 0.0
        %1847 = vmatpush1.msra.mxu0 %v841
        %1848 = vmatprep.subr.mxu0 0.0
        %1849 = vmatpush1.msra.mxu0 %v842
        %1850 = vmatprep.subr.mxu0 0.0
        %1851 = vmatpush1.msra.mxu0 %v843
        %1852 = vmatprep.subr.mxu0 0.0
        %1853 = vmatpush1.msra.mxu0 %v844
        %1854 = vmatprep.subr.mxu0 0.0
        %1855 = vmatpush1.msra.mxu0 %v845
        %1856 = vmatprep.subr.mxu0 0.0
        %1857 = vmatpush1.msra.mxu0 %v846
        %1858 = vmatprep.subr.mxu0 0.0
        %1859 = vmatpush1.msra.mxu0 %v847
        %1860 = vmatprep.subr.mxu0 0.0
        %1861 = vmatpush1.msra.mxu0 %v848
        %1862 = vmatprep.subr.mxu0 0.0
        %1863 = vmatpush1.msra.mxu0 %v849
        %1864 = vmatprep.subr.mxu0 0.0
        %1865 = vmatpush1.msra.mxu0 %v850
        %1866 = vmatprep.subr.mxu0 0.0
        %1867 = vmatpush1.msra.mxu0 %v851
        %1868 = vmatprep.mubr.f32.mxu0 %v331
        %1869 = vmatmul.mubr.f32.gmra.mrb[0].mxu0 %v330
        %v1870 = vpop.f32.mrb[0].mxu0
        %v1871 = vadd.f32 %v1556, %v1870
        %v1872 = vpop.f32.mrb[0].mxu0
        %1873 = vmatprep.mubr.f32.mxu0 %v339
        %1874 = vmatmul.mubr.f32.gmra.mrb[0].mxu0 %v338
        %v1875 = vpop.f32.mrb[0].mxu0
        %v1876 = vadd.f32 %v1561, %v1875
        %v1877 = vpop.f32.mrb[0].mxu0
        %1878 = vmatprep.mubr.f32.mxu0 %v347
        %1879 = vmatmul.mubr.f32.gmra.mrb[0].mxu0 %v346
        %v1880 = vpop.f32.mrb[0].mxu0
        %v1881 = vadd.f32 %v1566, %v1880
        %v1882 = vpop.f32.mrb[0].mxu0
        %1883 = vmatprep.mubr.f32.mxu0 %v355
        %1884 = vmatmul.mubr.f32.gmra.mrb[0].mxu0 %v354
        %v1885 = vpop.f32.mrb[0].mxu0
        %v1886 = vadd.f32 %v1571, %v1885
        %v1887 = vpop.f32.mrb[0].mxu0
        %1888 = vmatprep.mubr.f32.mxu0 %v363
        %1889 = vmatmul.mubr.f32.gmra.mrb[0].mxu0 %v362
        %v1890 = vpop.f32.mrb[0].mxu0
        %v1891 = vadd.f32 %v1576, %v1890
        %v1892 = vpop.f32.mrb[0].mxu0
        %1893 = vmatprep.mubr.f32.mxu0 %v371
        %1894 = vmatmul.mubr.f32.gmra.mrb[0].mxu0 %v370
        %v1895 = vpop.f32.mrb[0].mxu0
        %v1896 = vadd.f32 %v1581, %v1895
        %v1897 = vpop.f32.mrb[0].mxu0
        %1898 = vmatprep.mubr.f32.mxu0 %v379
        %1899 = vmatmul.mubr.f32.gmra.mrb[0].mxu0 %v378
        %v1900 = vpop.f32.mrb[0].mxu0
        %v1901 = vadd.f32 %v1586, %v1900
        %v1902 = vpop.f32.mrb[0].mxu0
        %1903 = vmatprep.mubr.f32.mxu0 %v387
        %1904 = vmatmul.mubr.f32.gmra.mrb[0].mxu0 %v386
        %v1905 = vpop.f32.mrb[0].mxu0
        %v1906 = vadd.f32 %v1591, %v1905
        %v1907 = vpop.f32.mrb[0].mxu0
        %1908 = vmatprep.mubr.f32.mxu0 %v395
        %1909 = vmatmul.mubr.f32.gmra.mrb[0].mxu0 %v394
        %v1910 = vpop.f32.mrb[0].mxu0
        %v1911 = vadd.f32 %v1596, %v1910
        %v1912 = vpop.f32.mrb[0].mxu0
        %1913 = vmatprep.mubr.f32.mxu0 %v403
        %1914 = vmatmul.mubr.f32.gmra.mrb[0].mxu0 %v402
        %v1915 = vpop.f32.mrb[0].mxu0
        %v1916 = vadd.f32 %v1601, %v1915
        %v1917 = vpop.f32.mrb[0].mxu0
        %1918 = vmatprep.mubr.f32.mxu0 %v411
        %1919 = vmatmul.mubr.f32.gmra.mrb[0].mxu0 %v410
        %v1920 = vpop.f32.mrb[0].mxu0
        %v1921 = vadd.f32 %v1606, %v1920
        %v1922 = vpop.f32.mrb[0].mxu0
        %1923 = vmatprep.mubr.f32.mxu0 %v419
        %1924 = vmatmul.mubr.f32.gmra.mrb[0].mxu0 %v418
        %v1925 = vpop.f32.mrb[0].mxu0
        %v1926 = vadd.f32 %v1611, %v1925
        %v1927 = vpop.f32.mrb[0].mxu0
        %1928 = vmatprep.mubr.f32.mxu0 %v427
        %1929 = vmatmul.mubr.f32.gmra.mrb[0].mxu0 %v426
        %v1930 = vpop.f32.mrb[0].mxu0
        %v1931 = vadd.f32 %v1616, %v1930
        %v1932 = vpop.f32.mrb[0].mxu0
        %1933 = vmatprep.mubr.f32.mxu0 %v435
        %1934 = vmatmul.mubr.f32.gmra.mrb[0].mxu0 %v434
        %v1935 = vpop.f32.mrb[0].mxu0
        %v1936 = vadd.f32 %v1621, %v1935
        %v1937 = vpop.f32.mrb[0].mxu0
        %1938 = vmatprep.mubr.f32.mxu0 %v443
        %1939 = vmatmul.mubr.f32.gmra.mrb[0].mxu0 %v442
        %v1940 = vpop.f32.mrb[0].mxu0
        %v1941 = vadd.f32 %v1626, %v1940
        %v1942 = vpop.f32.mrb[0].mxu0
        %1943 = vmatprep.mubr.f32.mxu0 %v451
        %1944 = vmatmul.mubr.f32.gmra.mrb[0].mxu0 %v450
        %v1945 = vpop.f32.mrb[0].mxu0
        %v1946 = vadd.f32 %v1631, %v1945
        %v1947 = vpop.f32.mrb[0].mxu0
        %1948 = vmatprep.mubr.f32.mxu0 %v459
        %1949 = vmatmul.mubr.f32.gmra.mrb[0].mxu0 %v458
        %v1950 = vpop.f32.mrb[0].mxu0
        %v1951 = vadd.f32 %v1636, %v1950
        %v1952 = vpop.f32.mrb[0].mxu0
        %1953 = vmatprep.mubr.f32.mxu0 %v467
        %1954 = vmatmul.mubr.f32.gmra.mrb[0].mxu0 %v466
        %v1955 = vpop.f32.mrb[0].mxu0
        %v1956 = vadd.f32 %v1641, %v1955
        %v1957 = vpop.f32.mrb[0].mxu0
        %1958 = vmatprep.mubr.f32.mxu0 %v475
        %1959 = vmatmul.mubr.f32.gmra.mrb[0].mxu0 %v474
        %v1960 = vpop.f32.mrb[0].mxu0
        %v1961 = vadd.f32 %v1646, %v1960
        %v1962 = vpop.f32.mrb[0].mxu0
        %1963 = vmatprep.mubr.f32.mxu0 %v483
        %1964 = vmatmul.mubr.f32.gmra.mrb[0].mxu0 %v482
        %v1965 = vpop.f32.mrb[0].mxu0
        %v1966 = vadd.f32 %v1651, %v1965
        %v1967 = vpop.f32.mrb[0].mxu0
        %1968 = vmatprep.mubr.f32.mxu0 %v491
        %1969 = vmatmul.mubr.f32.gmra.mrb[0].mxu0 %v490
        %v1970 = vpop.f32.mrb[0].mxu0
        %v1971 = vadd.f32 %v1656, %v1970
        %v1972 = vpop.f32.mrb[0].mxu0
        %1973 = vmatprep.mubr.f32.mxu0 %v499
        %1974 = vmatmul.mubr.f32.gmra.mrb[0].mxu0 %v498
        %v1975 = vpop.f32.mrb[0].mxu0
        %v1976 = vadd.f32 %v1661, %v1975
        %v1977 = vpop.f32.mrb[0].mxu0
        %1978 = vmatprep.mubr.f32.mxu0 %v507
        %1979 = vmatmul.mubr.f32.gmra.mrb[0].mxu0 %v506
        %v1980 = vpop.f32.mrb[0].mxu0
        %v1981 = vadd.f32 %v1666, %v1980
        %v1982 = vpop.f32.mrb[0].mxu0
        %1983 = vmatprep.mubr.f32.mxu0 %v515
        %1984 = vmatmul.mubr.f32.gmra.mrb[0].mxu0 %v514
        %v1985 = vpop.f32.mrb[0].mxu0
        %v1986 = vadd.f32 %v1671, %v1985
        %v1987 = vpop.f32.mrb[0].mxu0
        %1988 = vmatprep.mubr.f32.mxu0 %v523
        %1989 = vmatmul.mubr.f32.gmra.mrb[0].mxu0 %v522
        %v1990 = vpop.f32.mrb[0].mxu0
        %v1991 = vadd.f32 %v1676, %v1990
        %v1992 = vpop.f32.mrb[0].mxu0
        %1993 = vmatprep.mubr.f32.mxu0 %v531
        %1994 = vmatmul.mubr.f32.gmra.mrb[0].mxu0 %v530
        %v1995 = vpop.f32.mrb[0].mxu0
        %v1996 = vadd.f32 %v1681, %v1995
        %v1997 = vpop.f32.mrb[0].mxu0
        %1998 = vmatprep.mubr.f32.mxu0 %v539
        %1999 = vmatmul.mubr.f32.gmra.mrb[0].mxu0 %v538
        %v2000 = vpop.f32.mrb[0].mxu0
        %v2001 = vadd.f32 %v1686, %v2000
        %v2002 = vpop.f32.mrb[0].mxu0
        %2003 = vmatprep.mubr.f32.mxu0 %v547
        %2004 = vmatmul.mubr.f32.gmra.mrb[0].mxu0 %v546
        %v2005 = vpop.f32.mrb[0].mxu0
        %v2006 = vadd.f32 %v1691, %v2005
        %v2007 = vpop.f32.mrb[0].mxu0
        %2008 = vmatprep.mubr.f32.mxu0 %v555
        %2009 = vmatmul.mubr.f32.gmra.mrb[0].mxu0 %v554
        %v2010 = vpop.f32.mrb[0].mxu0
        %v2011 = vadd.f32 %v1696, %v2010
        %v2012 = vpop.f32.mrb[0].mxu0
        %2013 = vmatprep.mubr.f32.mxu0 %v563
        %2014 = vmatmul.mubr.f32.gmra.mrb[0].mxu0 %v562
        %v2015 = vpop.f32.mrb[0].mxu0
        %v2016 = vadd.f32 %v1701, %v2015
        %v2017 = vpop.f32.mrb[0].mxu0
        %2018 = vmatprep.mubr.f32.mxu0 %v571
        %2019 = vmatmul.mubr.f32.gmra.mrb[0].mxu0 %v570
        %v2020 = vpop.f32.mrb[0].mxu0
        %v2021 = vadd.f32 %v1706, %v2020
        %v2022 = vpop.f32.mrb[0].mxu0
        %2023 = vmatprep.mubr.f32.mxu0 %v579
        %2024 = vmatmul.mubr.f32.gmra.mrb[0].mxu0 %v578
        %v2025 = vpop.f32.mrb[0].mxu0
        %v2026 = vadd.f32 %v1711, %v2025
        %v2027 = vpop.f32.mrb[0].mxu0
        %2028 = vmatprep.mubr.f32.mxu0 %v587
        %2029 = vmatmul.mubr.f32.gmra.mrb[0].mxu0 %v586
        %v2030 = vpop.f32.mrb[0].mxu0
        %v2031 = vadd.f32 %v1716, %v2030
        %v2032 = vpop.f32.mrb[0].mxu0
        %2033 = vmatprep.mubr.f32.mxu0 %v595
        %2034 = vmatmul.mubr.f32.gmra.mrb[0].mxu0 %v594
        %v2035 = vpop.f32.mrb[0].mxu0
        %v2036 = vadd.f32 %v1721, %v2035
        %v2037 = vpop.f32.mrb[0].mxu0
        %2038 = vmatprep.mubr.f32.mxu0 %v603
        %2039 = vmatmul.mubr.f32.gmra.mrb[0].mxu0 %v602
        %v2040 = vpop.f32.mrb[0].mxu0
        %v2041 = vadd.f32 %v1726, %v2040
        %v2042 = vpop.f32.mrb[0].mxu0
        %2043 = vmatprep.mubr.f32.mxu0 %v611
        %2044 = vmatmul.mubr.f32.gmra.mrb[0].mxu0 %v610
        %v2045 = vpop.f32.mrb[0].mxu0
        %v2046 = vadd.f32 %v1731, %v2045
        %v2047 = vpop.f32.mrb[0].mxu0
        %2048 = vmatprep.mubr.f32.mxu0 %v619
        %2049 = vmatmul.mubr.f32.gmra.mrb[0].mxu0 %v618
        %v2050 = vpop.f32.mrb[0].mxu0
        %v2051 = vadd.f32 %v1736, %v2050
        %v2052 = vpop.f32.mrb[0].mxu0
        %2053 = vmatprep.mubr.f32.mxu0 %v627
        %2054 = vmatmul.mubr.f32.gmra.mrb[0].mxu0 %v626
        %v2055 = vpop.f32.mrb[0].mxu0
        %v2056 = vadd.f32 %v1741, %v2055
        %v2057 = vpop.f32.mrb[0].mxu0
        %2058 = vmatprep.mubr.f32.mxu0 %v635
        %2059 = vmatmul.mubr.f32.gmra.mrb[0].mxu0 %v634
        %v2060 = vpop.f32.mrb[0].mxu0
        %v2061 = vadd.f32 %v1746, %v2060
        %v2062 = vpop.f32.mrb[0].mxu0
        %2063 = vmatprep.mubr.f32.mxu0 %v643
        %2064 = vmatmul.mubr.f32.gmra.mrb[0].mxu0 %v642
        %v2065 = vpop.f32.mrb[0].mxu0
        %v2066 = vadd.f32 %v1751, %v2065
        %v2067 = vpop.f32.mrb[0].mxu0
        %2068 = vmatprep.mubr.f32.mxu0 %v651
        %2069 = vmatmul.mubr.f32.gmra.mrb[0].mxu0 %v650
        %v2070 = vpop.f32.mrb[0].mxu0
        %v2071 = vadd.f32 %v1756, %v2070
        %v2072 = vpop.f32.mrb[0].mxu0
        %2073 = vmatprep.mubr.f32.mxu0 %v659
        %2074 = vmatmul.mubr.f32.gmra.mrb[0].mxu0 %v658
        %v2075 = vpop.f32.mrb[0].mxu0
        %v2076 = vadd.f32 %v1761, %v2075
        %v2077 = vpop.f32.mrb[0].mxu0
        %2078 = vmatprep.mubr.f32.mxu0 %v667
        %2079 = vmatmul.mubr.f32.gmra.mrb[0].mxu0 %v666
        %v2080 = vpop.f32.mrb[0].mxu0
        %v2081 = vadd.f32 %v1766, %v2080
        %v2082 = vpop.f32.mrb[0].mxu0
        %2083 = vmatprep.mubr.f32.mxu0 %v675
        %2084 = vmatmul.mubr.f32.gmra.mrb[0].mxu0 %v674
        %v2085 = vpop.f32.mrb[0].mxu0
        %v2086 = vadd.f32 %v1771, %v2085
        %v2087 = vpop.f32.mrb[0].mxu0
        %2088 = vmatprep.mubr.f32.mxu0 %v683
        %2089 = vmatmul.mubr.f32.gmra.mrb[0].mxu0 %v682
        %v2090 = vpop.f32.mrb[0].mxu0
        %v2091 = vadd.f32 %v1776, %v2090
        %v2092 = vpop.f32.mrb[0].mxu0
        %2093 = vmatprep.mubr.f32.mxu0 %v691
        %2094 = vmatmul.mubr.f32.gmra.mrb[0].mxu0 %v690
        %v2095 = vpop.f32.mrb[0].mxu0
        %v2096 = vadd.f32 %v1781, %v2095
        %v2097 = vpop.f32.mrb[0].mxu0
        %2098 = vmatprep.mubr.f32.mxu0 %v699
        %2099 = vmatmul.mubr.f32.gmra.mrb[0].mxu0 %v698
        %v2100 = vpop.f32.mrb[0].mxu0
        %v2101 = vadd.f32 %v1786, %v2100
        %v2102 = vpop.f32.mrb[0].mxu0
        %2103 = vmatprep.mubr.f32.mxu0 %v707
        %2104 = vmatmul.mubr.f32.gmra.mrb[0].mxu0 %v706
        %v2105 = vpop.f32.mrb[0].mxu0
        %v2106 = vadd.f32 %v1791, %v2105
        %v2107 = vpop.f32.mrb[0].mxu0
        %2108 = vmatprep.mubr.f32.mxu0 %v715
        %2109 = vmatmul.mubr.f32.gmra.mrb[0].mxu0 %v714
        %v2110 = vpop.f32.mrb[0].mxu0
        %v2111 = vadd.f32 %v1796, %v2110
        %v2112 = vpop.f32.mrb[0].mxu0
        %2113 = vmatprep.mubr.f32.mxu0 %v723
        %2114 = vmatmul.mubr.f32.gmra.mrb[0].mxu0 %v722
        %v2115 = vpop.f32.mrb[0].mxu0
        %v2116 = vadd.f32 %v1801, %v2115
        %v2117 = vpop.f32.mrb[0].mxu0
        %2118 = vdwg.mxu0
        %v2119 = vmax.f32 %v1871, 0.0
        %v2120 = vmax.f32 %v1876, 0.0
        %v2121 = vmax.f32 %v1881, 0.0
        %v2122 = vmax.f32 %v1886, 0.0
        %v2123 = vmax.f32 %v1891, 0.0
        %v2124 = vmax.f32 %v1896, 0.0
        %v2125 = vmax.f32 %v1901, 0.0
        %v2126 = vmax.f32 %v1906, 0.0
        %v2127 = vmax.f32 %v1911, 0.0
        %v2128 = vmax.f32 %v1916, 0.0
        %v2129 = vmax.f32 %v1921, 0.0
        %v2130 = vmax.f32 %v1926, 0.0
        %v2131 = vmax.f32 %v1931, 0.0
        %v2132 = vmax.f32 %v1936, 0.0
        %v2133 = vmax.f32 %v1941, 0.0
        %v2134 = vmax.f32 %v1946, 0.0
        %v2135 = vmax.f32 %v1951, 0.0
        %v2136 = vmax.f32 %v1956, 0.0
        %v2137 = vmax.f32 %v1961, 0.0
        %v2138 = vmax.f32 %v1966, 0.0
        %v2139 = vmax.f32 %v1971, 0.0
        %v2140 = vmax.f32 %v1976, 0.0
        %v2141 = vmax.f32 %v1981, 0.0
        %v2142 = vmax.f32 %v1986, 0.0
        %v2143 = vmax.f32 %v1991, 0.0
        %v2144 = vmax.f32 %v1996, 0.0
        %v2145 = vmax.f32 %v2001, 0.0
        %v2146 = vmax.f32 %v2006, 0.0
        %v2147 = vmax.f32 %v2011, 0.0
        %v2148 = vmax.f32 %v2016, 0.0
        %v2149 = vmax.f32 %v2021, 0.0
        %v2150 = vmax.f32 %v2026, 0.0
        %v2151 = vmax.f32 %v2031, 0.0
        %v2152 = vmax.f32 %v2036, 0.0
        %v2153 = vmax.f32 %v2041, 0.0
        %v2154 = vmax.f32 %v2046, 0.0
        %v2155 = vmax.f32 %v2051, 0.0
        %v2156 = vmax.f32 %v2056, 0.0
        %v2157 = vmax.f32 %v2061, 0.0
        %v2158 = vmax.f32 %v2066, 0.0
        %v2159 = vmax.f32 %v2071, 0.0
        %v2160 = vmax.f32 %v2076, 0.0
        %v2161 = vmax.f32 %v2081, 0.0
        %v2162 = vmax.f32 %v2086, 0.0
        %v2163 = vmax.f32 %v2091, 0.0
        %v2164 = vmax.f32 %v2096, 0.0
        %v2165 = vmax.f32 %v2101, 0.0
        %v2166 = vmax.f32 %v2106, 0.0
        %v2167 = vmax.f32 %v2111, 0.0
        %v2168 = vmax.f32 %v2116, 0.0
        %v2169 = vld [vmem:[#allocation5] sm:$0xff]
        %v2170 = vld [vmem:[#allocation5 + $0x8] sm:$0xff]
        %v2173 = vcombine.high %v2169, %v2169
        %v2174 = vcombine.high %v2170, %v2170
        %vm2176 = vcmask 130048
        %v2177 = vsel %vm2176, %v2174, 0
        %2179 = vmatprep.subr.mxu0 0.0
        %2180 = vmatpush1.msra.mxu0 %v2119
        %2181 = vmatprep.subr.mxu0 0.0
        %2182 = vmatpush1.msra.mxu0 %v2120
        %2183 = vmatprep.subr.mxu0 0.0
        %2184 = vmatpush1.msra.mxu0 %v2121
        %2185 = vmatprep.subr.mxu0 0.0
        %2186 = vmatpush1.msra.mxu0 %v2122
        %2187 = vmatprep.subr.mxu0 0.0
        %2188 = vmatpush1.msra.mxu0 %v2123
        %2189 = vmatprep.subr.mxu0 0.0
        %2190 = vmatpush1.msra.mxu0 %v2124
        %2191 = vmatprep.subr.mxu0 0.0
        %2192 = vmatpush1.msra.mxu0 %v2125
        %2193 = vmatprep.subr.mxu0 0.0
        %2194 = vmatpush1.msra.mxu0 %v2126
        %2195 = vmatprep.subr.mxu0 0.0
        %2196 = vmatpush1.msra.mxu0 %v2127
        %2197 = vmatprep.subr.mxu0 0.0
        %2198 = vmatpush1.msra.mxu0 %v2128
        %2199 = vmatprep.subr.mxu0 0.0
        %2200 = vmatpush1.msra.mxu0 %v2129
        %2201 = vmatprep.subr.mxu0 0.0
        %2202 = vmatpush1.msra.mxu0 %v2130
        %2203 = vmatprep.subr.mxu0 0.0
        %2204 = vmatpush1.msra.mxu0 %v2131
        %2205 = vmatprep.subr.mxu0 0.0
        %2206 = vmatpush1.msra.mxu0 %v2132
        %2207 = vmatprep.subr.mxu0 0.0
        %2208 = vmatpush1.msra.mxu0 %v2133
        %2209 = vmatprep.subr.mxu0 0.0
        %2210 = vmatpush1.msra.mxu0 %v2134
        %2211 = vmatprep.subr.mxu0 0.0
        %2212 = vmatpush1.msra.mxu0 %v2135
        %2213 = vmatprep.subr.mxu0 0.0
        %2214 = vmatpush1.msra.mxu0 %v2136
        %2215 = vmatprep.subr.mxu0 0.0
        %2216 = vmatpush1.msra.mxu0 %v2137
        %2217 = vmatprep.subr.mxu0 0.0
        %2218 = vmatpush1.msra.mxu0 %v2138
        %2219 = vmatprep.subr.mxu0 0.0
        %2220 = vmatpush1.msra.mxu0 %v2139
        %2221 = vmatprep.subr.mxu0 0.0
        %2222 = vmatpush1.msra.mxu0 %v2140
        %2223 = vmatprep.subr.mxu0 0.0
        %2224 = vmatpush1.msra.mxu0 %v2141
        %2225 = vmatprep.subr.mxu0 0.0
        %2226 = vmatpush1.msra.mxu0 %v2142
        %2227 = vmatprep.subr.mxu0 0.0
        %2228 = vmatpush1.msra.mxu0 %v2143
        %2229 = vmatprep.subr.mxu0 0.0
        %2230 = vmatpush1.msra.mxu0 %v2144
        %2231 = vmatprep.subr.mxu0 0.0
        %2232 = vmatpush1.msra.mxu0 %v2145
        %2233 = vmatprep.subr.mxu0 0.0
        %2234 = vmatpush1.msra.mxu0 %v2146
        %2235 = vmatprep.subr.mxu0 0.0
        %2236 = vmatpush1.msra.mxu0 %v2147
        %2237 = vmatprep.subr.mxu0 0.0
        %2238 = vmatpush1.msra.mxu0 %v2148
        %2239 = vmatprep.subr.mxu0 0.0
        %2240 = vmatpush1.msra.mxu0 %v2149
        %2241 = vmatprep.subr.mxu0 0.0
        %2242 = vmatpush1.msra.mxu0 %v2150
        %2243 = vmatprep.mubr.f32.mxu0 %v2173
        %2244 = vmatmul.mubr.f32.gmra.mrb[0].mxu0 %v2169
        %v2245 = vpop.f32.mrb[0].mxu0
        %v2246 = vadd.f32 0.0, %v2245
        %v2247 = vpop.f32.mrb[0].mxu0
        %2248 = vdwg.mxu0
        %2249 = vmatprep.subr.mxu0 0.0
        %2250 = vmatpush1.msra.mxu0 %v2151
        %2251 = vmatprep.subr.mxu0 0.0
        %2252 = vmatpush1.msra.mxu0 %v2152
        %2253 = vmatprep.subr.mxu0 0.0
        %2254 = vmatpush1.msra.mxu0 %v2153
        %2255 = vmatprep.subr.mxu0 0.0
        %2256 = vmatpush1.msra.mxu0 %v2154
        %2257 = vmatprep.subr.mxu0 0.0
        %2258 = vmatpush1.msra.mxu0 %v2155
        %2259 = vmatprep.subr.mxu0 0.0
        %2260 = vmatpush1.msra.mxu0 %v2156
        %2261 = vmatprep.subr.mxu0 0.0
        %2262 = vmatpush1.msra.mxu0 %v2157
        %2263 = vmatprep.subr.mxu0 0.0
        %2264 = vmatpush1.msra.mxu0 %v2158
        %2265 = vmatprep.subr.mxu0 0.0
        %2266 = vmatpush1.msra.mxu0 %v2159
        %2267 = vmatprep.subr.mxu0 0.0
        %2268 = vmatpush1.msra.mxu0 %v2160
        %2269 = vmatprep.subr.mxu0 0.0
        %2270 = vmatpush1.msra.mxu0 %v2161
        %2271 = vmatprep.subr.mxu0 0.0
        %2272 = vmatpush1.msra.mxu0 %v2162
        %2273 = vmatprep.subr.mxu0 0.0
        %2274 = vmatpush1.msra.mxu0 %v2163
        %2275 = vmatprep.subr.mxu0 0.0
        %2276 = vmatpush1.msra.mxu0 %v2164
        %2277 = vmatprep.subr.mxu0 0.0
        %2278 = vmatpush1.msra.mxu0 %v2165
        %2279 = vmatprep.subr.mxu0 0.0
        %2280 = vmatpush1.msra.mxu0 %v2166
        %2281 = vmatprep.subr.mxu0 0.0
        %2282 = vmatpush1.msra.mxu0 %v2167
        %2283 = vmatprep.subr.mxu0 0.0
        %2284 = vmatpush1.msra.mxu0 %v2168
        %2285 = vmatprep.subr.mxu0 0.0
        %2286 = vmatpush1.msra.mxu0 0.0
        %2287 = vmatprep.subr.mxu0 0.0
        %2288 = vmatpush1.msra.mxu0 0.0
        %2289 = vmatprep.subr.mxu0 0.0
        %2290 = vmatpush1.msra.mxu0 0.0
        %2291 = vmatprep.subr.mxu0 0.0
        %2292 = vmatpush1.msra.mxu0 0.0
        %2293 = vmatprep.subr.mxu0 0.0
        %2294 = vmatpush1.msra.mxu0 0.0
        %2295 = vmatprep.subr.mxu0 0.0
        %2296 = vmatpush1.msra.mxu0 0.0
        %2297 = vmatprep.subr.mxu0 0.0
        %2298 = vmatpush1.msra.mxu0 0.0
        %2299 = vmatprep.subr.mxu0 0.0
        %2300 = vmatpush1.msra.mxu0 0.0
        %2301 = vmatprep.subr.mxu0 0.0
        %2302 = vmatpush1.msra.mxu0 0.0
        %2303 = vmatprep.subr.mxu0 0.0
        %2304 = vmatpush1.msra.mxu0 0.0
        %2305 = vmatprep.subr.mxu0 0.0
        %2306 = vmatpush1.msra.mxu0 0.0
        %2307 = vmatprep.subr.mxu0 0.0
        %2308 = vmatpush1.msra.mxu0 0.0
        %2309 = vmatprep.subr.mxu0 0.0
        %2310 = vmatpush1.msra.mxu0 0.0
        %2311 = vmatprep.subr.mxu0 0.0
        %2312 = vmatpush1.msra.mxu0 0.0
        %2313 = vmatprep.mubr.f32.mxu0 %v2177
        %2314 = vmatmul.mubr.f32.gmra.mrb[0].mxu0 %v2170
        %v2315 = vpop.f32.mrb[0].mxu0
        %v2316 = vadd.f32 %v2246, %v2315
        %v2317 = vpop.f32.mrb[0].mxu0
        %2318 = vdwg.mxu0
        %v2319 = vld [vmem:[#allocation8] sm:$0xff]
        %v2320 = vld [vmem:[#allocation8 + $0x8] sm:$0xff]
        %v2321 = vld [vmem:[#allocation8 + $0x10] sm:$0xff]
        %v2322 = vld [vmem:[#allocation8 + $0x18] sm:$0xff]
        %v2323 = vld [vmem:[#allocation10] sm:$0x1]
        %v2325 = vlaneseq
        %v2326 = vshrl.u32 %v2325, 7
        %v2327 = vsub.s32 0, %v2326
        %v2328 = vrot.slane %v2323, %v2327
        %vm2330 = vcmask 261120
        %v2332 = vsel %vm2330, %v2316, 0
        %2334 = vmatprep.subr.mxu0 0.0
        %2335 = vmatpush1.msra.mxu0 %v2319
        %2336 = vmatprep.subr.mxu0 0.0
        %2337 = vmatpush1.msra.mxu0 %v2320
        %2338 = vmatprep.subr.mxu0 0.0
        %2339 = vmatpush1.msra.mxu0 %v2321
        %2340 = vmatprep.subr.mxu0 0.0
        %2341 = vmatpush1.msra.mxu0 %v2322
        %2342 = vmatprep.subr.mxu0 0.0
        %2343 = vmatpush1.msra.mxu0 0.0
        %2344 = vmatprep.subr.mxu0 0.0
        %2345 = vmatpush1.msra.mxu0 0.0
        %2346 = vmatprep.subr.mxu0 0.0
        %2347 = vmatpush1.msra.mxu0 0.0
        %2348 = vmatprep.subr.mxu0 0.0
        %2349 = vmatpush1.msra.mxu0 0.0
        %2350 = vmatprep.subr.mxu0 0.0
        %2351 = vmatpush1.msra.mxu0 0.0
        %2352 = vmatprep.subr.mxu0 0.0
        %2353 = vmatpush1.msra.mxu0 0.0
        %2354 = vmatprep.subr.mxu0 0.0
        %2355 = vmatpush1.msra.mxu0 0.0
        %2356 = vmatprep.subr.mxu0 0.0
        %2357 = vmatpush1.msra.mxu0 0.0
        %2358 = vmatprep.subr.mxu0 0.0
        %2359 = vmatpush1.msra.mxu0 0.0
        %2360 = vmatprep.subr.mxu0 0.0
        %2361 = vmatpush1.msra.mxu0 0.0
        %2362 = vmatprep.subr.mxu0 0.0
        %2363 = vmatpush1.msra.mxu0 0.0
        %2364 = vmatprep.subr.mxu0 0.0
        %2365 = vmatpush1.msra.mxu0 0.0
        %2366 = vmatprep.subr.mxu0 0.0
        %2367 = vmatpush1.msra.mxu0 0.0
        %2368 = vmatprep.subr.mxu0 0.0
        %2369 = vmatpush1.msra.mxu0 0.0
        %2370 = vmatprep.subr.mxu0 0.0
        %2371 = vmatpush1.msra.mxu0 0.0
        %2372 = vmatprep.subr.mxu0 0.0
        %2373 = vmatpush1.msra.mxu0 0.0
        %2374 = vmatprep.subr.mxu0 0.0
        %2375 = vmatpush1.msra.mxu0 0.0
        %2376 = vmatprep.subr.mxu0 0.0
        %2377 = vmatpush1.msra.mxu0 0.0
        %2378 = vmatprep.subr.mxu0 0.0
        %2379 = vmatpush1.msra.mxu0 0.0
        %2380 = vmatprep.subr.mxu0 0.0
        %2381 = vmatpush1.msra.mxu0 0.0
        %2382 = vmatprep.subr.mxu0 0.0
        %2383 = vmatpush1.msra.mxu0 0.0
        %2384 = vmatprep.subr.mxu0 0.0
        %2385 = vmatpush1.msra.mxu0 0.0
        %2386 = vmatprep.subr.mxu0 0.0
        %2387 = vmatpush1.msra.mxu0 0.0
        %2388 = vmatprep.subr.mxu0 0.0
        %2389 = vmatpush1.msra.mxu0 0.0
        %2390 = vmatprep.subr.mxu0 0.0
        %2391 = vmatpush1.msra.mxu0 0.0
        %2392 = vmatprep.subr.mxu0 0.0
        %2393 = vmatpush1.msra.mxu0 0.0
        %2394 = vmatprep.subr.mxu0 0.0
        %2395 = vmatpush1.msra.mxu0 0.0
        %2396 = vmatprep.subr.mxu0 0.0
        %2397 = vmatpush1.msra.mxu0 0.0
        %2398 = vmatprep.mubr.f32.mxu0 0.0
        %2399 = vmatmul.mubr.f32.gmra.mrb[0].mxu0 %v2332
        %v2400 = vpop.f32.mrb[0].mxu0
        %v2401 = vadd.f32 %v2328, %v2400
        %v2402 = vpop.f32.mrb[0].mxu0
        %2403 = vdwg.mxu0
        %2404 = vst [vmem:[%s322] sm:$0xf] %v2401
        %s2405 = sand.u32 %s164, 1
        %s2406 = scalar_lea.sflag [#allocation4], %s2405
        %s2407 = sand.u32 %s164, 1
        %s2408 = smul.addr %s2407, 4
        %s2409 = scalar_lea.vmem [#allocation11], %s2408
        // Predicated region
        $region65: #{tpu_custom_call.1} parent=43 // pred_check
          %p2410 = pneg %p174
        $region66: #{tpu_custom_call.1} parent=43 // pred_check_branch
          %2412 = sbr.rel (%p2410) target = $region68
        $region67: #{tpu_custom_call.1} parent=43 // pred_region
          %s2414 = ssub.s32 64, 64
          %2415 = vsyncadd %s2406, %s2414
          %s2416 = smul.addr %s25, 64
          %s2417 = scalar_lea.hbm %s6, %s2416
          %s2419 = sshll.u32 %s2409, 4
          %s2420 = int_to_ptr.vmem [resolvable:$true] %s2419
          %2422 = dma.vmem_to_hbm [thread:$0]  %s2420, 64, %s2417, %s2406
        $region68: #{tpu_custom_call.1} parent=43 // pred_fallthru
          _
      $region44: #{tpu_custom_call.1} parent=5 // pred_fallthru
        _
      %p2423 = scmp.le.s32.totalorder 2, %s20
      // Predicated region
      $region69: #{tpu_custom_call.1} parent=5 // pred_check
        %p2424 = pneg %p2423
      $region70: #{tpu_custom_call.1} parent=5 // pred_check_branch
        %2426 = sbr.rel (%p2424) target = $region72
      $region71: #{tpu_custom_call.1} parent=5 // pred_region
        %s2427 = ssub.s32 %s20, 2
        // Predicated region
        $region73: #{tpu_custom_call.1} parent=71 // pred_check
          %p2428 = pneg %p180
        $region74: #{tpu_custom_call.1} parent=71 // pred_check_branch
          %2430 = sbr.rel (%p2428) target = $region76
        $region75: #{tpu_custom_call.1} parent=71 // pred_region
          %s2431 = sand.u32 %s165, 1
          %s2432 = scalar_lea.sflag [#allocation4], %s2431
          %s2433 = sand.u32 %s165, 1
          %s2434 = smul.addr %s2433, 4
          %s2435 = scalar_lea.vmem [#allocation11], %s2434
          %2436 = dma.done %s2432, 64
        $region76: #{tpu_custom_call.1} parent=71 // pred_fallthru
          _
      $region72: #{tpu_custom_call.1} parent=5 // pred_fallthru
        _
    $region6: #{tpu_custom_call.1} parent=1 // loop_footer
      %s24 = sadd.s32 1, %s20
    $region7: #{tpu_custom_call.1} parent=1 // loop_footer_branch
      %19 = sbr.rel target = $region3
    $region8: #{tpu_custom_call.1} parent=1 // loop_exit
      _
    %2437 = vsyncpa [#allocation3], 1
    %s2438 = scalar_lea.sflag [#allocation3], 1
    %2439 = vsyncpa %s2438, 1
    %2440 = vsyncpa [#allocation6], 1
    %2441 = vsyncpa [#allocation9], 1
    %2442 = vsyncpa [#allocation4], 1
    %s2443 = scalar_lea.sflag [#allocation4], 1
    %2444 = vsyncpa %s2443, 1

</llo_original>
